<compile_context>
chip_gen: v6e
topology: v6e:2x2x1
jax: 0.10.0
libtpu: 0.0.40
codegen_flags: <defaults>
</compile_context>

<pallas_src>
import functools

import jax
import jax.numpy as jnp
from jax.experimental import pallas as pl
from jax.experimental.pallas import tpu as pltpu

HIDDEN = 512


def _round_up(x, m):
    return ((x + m - 1) // m) * m


def _choose_tb(b, input_size, x_bytes, tb_max=512,
               vmem_budget=24 * 1024 * 1024):
    """Pick an MXU/layout-friendly batch tile that fits the VMEM budget."""
    if b < 128:
        tb = _round_up(max(b, 8), 16)          # bf16 sublane packing granularity
    else:
        # 128-multiple tiles; keep >=2 grid steps so dimension_semantics
        # ("parallel",) can shard the batch axis across v7x's two TensorCores.
        tb = min(tb_max, max(128, _round_up(-(-b // 2), 128)))

    def vmem_bytes(t):
        x_tile = 2 * t * input_size * x_bytes                       # double-buffered x
        weights = ((input_size * HIDDEN + 2 * HIDDEN * HIDDEN) * 2  # bf16 w1..w3
                   + (4 * HIDDEN + 2) * 4)                          # f32 biases + w4 + b4
        interm = 3 * t * HIDDEN * 4                                 # live f32 activations
        return x_tile + weights + interm

    while tb > 128 and vmem_bytes(tb) > vmem_budget:
        tb = max(128, _round_up(tb // 2, 128))
    return tb


def _mlp_kernel(x_ref, w1_ref, b1_ref, w2_ref, b2_ref, w3_ref, b3_ref,
                w4_ref, b4_ref, o_ref):
    # x_ref: (tb, input_size) in its original dtype; w1..w3: (in, out) bf16;
    # b1..b3: (1, out) f32; w4_ref: (1, HIDDEN) f32; b4_ref: (1, 1) f32;
    # o_ref: (tb, 1) f32.
    # bf16 cast happens here on the VPU (hidden under the MXU) instead of in a
    # separate XLA pass over HBM.
    x = x_ref[...].astype(jnp.bfloat16)
    h = jnp.dot(x, w1_ref[...], preferred_element_type=jnp.float32)
    h = jnp.maximum(h + b1_ref[...], 0.0)
    h = jnp.dot(h.astype(jnp.bfloat16), w2_ref[...],
                preferred_element_type=jnp.float32)
    h = jnp.maximum(h + b2_ref[...], 0.0)
    h = jnp.dot(h.astype(jnp.bfloat16), w3_ref[...],
                preferred_element_type=jnp.float32)
    h = jnp.maximum(h + b3_ref[...], 0.0)
    # fc4 (512 -> 1): VPU multiply + lane reduction instead of an N=1 MXU pass.
    out = jnp.sum(h * w4_ref[...], axis=-1, keepdims=True) + b4_ref[...]
    o_ref[...] = out.astype(o_ref.dtype)


def prepare_params(params):
    """One-time conversion of torch-style f32 params to kernel dtypes.

    Call this once at init; do NOT call it inside the per-step forward — that
    would re-run the casts (an extra HBM read+write of the weights) every call.
    """
    w1, b1, w2, b2, w3, b3, w4, b4 = params
    return (
        w1.astype(jnp.bfloat16),
        b1.reshape(1, -1).astype(jnp.float32),
        w2.astype(jnp.bfloat16),
        b2.reshape(1, -1).astype(jnp.float32),
        w3.astype(jnp.bfloat16),
        b3.reshape(1, -1).astype(jnp.float32),
        w4.reshape(1, -1).astype(jnp.float32),   # (1, HIDDEN) row for VPU reduce
        b4.reshape(1, -1).astype(jnp.float32),   # (1, 1)
    )


@functools.partial(jax.jit, static_argnames=("input_size", "tb_max"))
def baseline_nn_forward(image, prepared_params, *, input_size, tb_max=512):
    """BaselineNN forward.  image: NCHW (or anything whose trailing dims
    multiply to input_size).  Returns (B, 1) float32."""
    x = image.reshape(-1, input_size)
    b = x.shape[0]
    x_bytes = jnp.dtype(x.dtype).itemsize

    tb = _choose_tb(b, input_size, x_bytes, tb_max=tb_max)
    b_pad = _round_up(b, tb)
    if b_pad != b:
        x = jnp.pad(x, ((0, b_pad - b), (0, 0)))

    w1, b1, w2, b2, w3, b3, w4, b4 = prepared_params

    grid = (b_pad // tb,)

    def resident(arr):
        # Whole array, invariant across the batch grid -> single buffer.
        return pl.BlockSpec(arr.shape, lambda i: (0, 0),
                            pipeline_mode=pl.Buffered(1))

    flops = 2 * b_pad * (input_size * HIDDEN + 2 * HIDDEN * HIDDEN + HIDDEN)
    bytes_accessed = (
        b_pad * input_size * x_bytes                        # x (original dtype)
        + (input_size * HIDDEN + 2 * HIDDEN * HIDDEN) * 2   # w1..w3 (bf16)
        + (4 * HIDDEN + 2) * 4                              # biases + w4 (f32)
        + b_pad * 4)                                        # output (f32)

    out = pl.pallas_call(
        _mlp_kernel,
        out_shape=jax.ShapeDtypeStruct((b_pad, 1), jnp.float32),
        grid_spec=pltpu.PrefetchScalarGridSpec(
            num_scalar_prefetch=0,
            grid=grid,
            in_specs=[
                pl.BlockSpec((tb, input_size), lambda i: (i, 0)),   # x tile
                resident(w1), resident(b1),
                resident(w2), resident(b2),
                resident(w3), resident(b3),
                resident(w4), resident(b4),
            ],
            out_specs=pl.BlockSpec((tb, 1), lambda i: (i, 0)),
        ),
        compiler_params=pltpu.CompilerParams(
            dimension_semantics=("parallel",),
            vmem_limit_bytes=32 * 1024 * 1024,
        ),
        cost_estimate=pl.CostEstimate(
            flops=flops, transcendentals=0, bytes_accessed=bytes_accessed),
    )(x, w1, b1, w2, b2, w3, b3, w4, b4)

    return out[:b]


def init_params(key, input_size):
    """Deterministic init mimicking torch.nn.Linear's U(-1/sqrt(fan_in), +)."""
    dims = [(input_size, HIDDEN), (HIDDEN, HIDDEN), (HIDDEN, HIDDEN), (HIDDEN, 1)]
    params = []
    keys = jax.random.split(key, 2 * len(dims))
    for idx, (fan_in, fan_out) in enumerate(dims):
        bound = 1.0 / jnp.sqrt(jnp.float32(fan_in))
        w = jax.random.uniform(keys[2 * idx], (fan_in, fan_out),
                               minval=-bound, maxval=bound, dtype=jnp.float32)
        bb = jax.random.uniform(keys[2 * idx + 1], (fan_out,),
                                minval=-bound, maxval=bound, dtype=jnp.float32)
        params.extend([w, bb])
    return tuple(params)


def _reference_matched(image, params, input_size):
    """Mirrors the kernel's numerics: bf16 matmul inputs, f32 accumulation,
    f32 bias/ReLU epilogue, f32 final layer."""
    f32, bf16 = jnp.float32, jnp.bfloat16
    x = image.reshape(-1, input_size).astype(bf16)
    w1, b1, w2, b2, w3, b3, w4, b4 = params
    h = jnp.maximum(
        jnp.dot(x, w1.astype(bf16), preferred_element_type=f32) + b1, 0.0)
    h = jnp.maximum(
        jnp.dot(h.astype(bf16), w2.astype(bf16), preferred_element_type=f32) + b2, 0.0)
    h = jnp.maximum(
        jnp.dot(h.astype(bf16), w3.astype(bf16), preferred_element_type=f32) + b3, 0.0)
    return h @ w4 + b4


def _reference_f32(image, params, input_size):
    x = image.reshape(-1, input_size).astype(jnp.float32)
    w1, b1, w2, b2, w3, b3, w4, b4 = params
    h = jax.nn.relu(x @ w1 + b1)
    h = jax.nn.relu(h @ w2 + b2)
    h = jax.nn.relu(h @ w3 + b3)
    return h @ w4 + b4


if __name__ == "__main__":
    key = jax.random.PRNGKey(0)
    k_img, k_par = jax.random.split(key)

    # image: NCHW (B=2, C=4, H=16, W=16)  ->  input_size = 4*16*16 = 1024
    B, C, H, W = 2, 4, 16, 16
    input_size = C * H * W
    image = jax.random.normal(k_img, (B, C, H, W), dtype=jnp.float32)

    params = init_params(k_par, input_size)
    prepared = prepare_params(params)          # one-time dtype conversion
    prepared = jax.block_until_ready(prepared)

    out = baseline_nn_forward(image, prepared, input_size=input_size)
    out = jax.block_until_ready(out)
    assert out.shape == (B, 1), out.shape

    # Exact-precision reference (bf16 matmul inputs, f32 accumulation).
    ref_bf16 = _reference_matched(image, params, input_size)
    assert jnp.allclose(out, ref_bf16, atol=1e-3, rtol=1e-3), (
        f"max abs err vs bf16-matched ref: {jnp.max(jnp.abs(out - ref_bf16))}")

    # Loose sanity check against the full-f32 PyTorch-equivalent semantics.
    ref_f32 = _reference_f32(image, params, input_size)
    assert jnp.allclose(out, ref_f32, atol=1e-1, rtol=1e-1), (
        f"max abs err vs f32 ref: {jnp.max(jnp.abs(out - ref_f32))}")

    print("KERNEL_OK")
</pallas_src>

<mosaic_0001>
module attributes {stable_mosaic.version = 11 : i64} {
  func.func @_mlp_kernel(%arg0: i32, %arg1: memref<16x1024xf32, #tpu.memory_space<vmem>>, %arg2: memref<1024x512xbf16, #tpu.memory_space<vmem>>, %arg3: memref<1x512xf32, #tpu.memory_space<vmem>>, %arg4: memref<512x512xbf16, #tpu.memory_space<vmem>>, %arg5: memref<1x512xf32, #tpu.memory_space<vmem>>, %arg6: memref<512x512xbf16, #tpu.memory_space<vmem>>, %arg7: memref<1x512xf32, #tpu.memory_space<vmem>>, %arg8: memref<1x512xf32, #tpu.memory_space<vmem>>, %arg9: memref<1x1xf32, #tpu.memory_space<vmem>>, %arg10: memref<16x1xf32, #tpu.memory_space<vmem>>) attributes {dimension_semantics = [#tpu.dimension_semantics<parallel>], iteration_bounds = array<i64: 1>, scalar_prefetch = 0 : i64, scratch_operands = 0 : i64, tpu.core_type = #tpu.core_type<tc>, window_params = [{transform_indices = @transform_0, window_bounds = array<i64: 16, 1024>}, {pipeline_mode = #tpu.pipeline_mode<synchronous>, transform_indices = @transform_1, window_bounds = array<i64: 1024, 512>}, {pipeline_mode = #tpu.pipeline_mode<synchronous>, transform_indices = @transform_2, window_bounds = array<i64: 1, 512>}, {pipeline_mode = #tpu.pipeline_mode<synchronous>, transform_indices = @transform_3, window_bounds = array<i64: 512, 512>}, {pipeline_mode = #tpu.pipeline_mode<synchronous>, transform_indices = @transform_4, window_bounds = array<i64: 1, 512>}, {pipeline_mode = #tpu.pipeline_mode<synchronous>, transform_indices = @transform_5, window_bounds = array<i64: 512, 512>}, {pipeline_mode = #tpu.pipeline_mode<synchronous>, transform_indices = @transform_6, window_bounds = array<i64: 1, 512>}, {pipeline_mode = #tpu.pipeline_mode<synchronous>, transform_indices = @transform_7, window_bounds = array<i64: 1, 512>}, {pipeline_mode = #tpu.pipeline_mode<synchronous>, transform_indices = @transform_8, window_bounds = array<i64: 1, 1>}, {transform_indices = @transform_9, window_bounds = array<i64: 16, 1>}]} {
    %c0 = arith.constant 0 : index
    %c0_0 = arith.constant 0 : index
    %0 = vector.load %arg1[%c0, %c0_0] : memref<16x1024xf32, #tpu.memory_space<vmem>>, vector<16x1024xf32>
    %1 = arith.truncf %0 : vector<16x1024xf32> to vector<16x1024xbf16>
    %c0_1 = arith.constant 0 : index
    %c0_2 = arith.constant 0 : index
    %2 = vector.load %arg2[%c0_1, %c0_2] : memref<1024x512xbf16, #tpu.memory_space<vmem>>, vector<1024x512xbf16>
    %cst = arith.constant dense<0.000000e+00> : vector<16x512xf32>
    %3 = tpu.matmul %1, %2, %cst {dimension_numbers = #tpu.dot_dimension_numbers<[1], [0], [0], [1], [0, 0, 1, 1], [], []>} : vector<16x1024xbf16>, vector<1024x512xbf16>, vector<16x512xf32> -> vector<16x512xf32>
    %c0_3 = arith.constant 0 : index
    %c0_4 = arith.constant 0 : index
    %4 = vector.load %arg3[%c0_3, %c0_4] : memref<1x512xf32, #tpu.memory_space<vmem>>, vector<1x512xf32>
    %5 = vector.broadcast %4 : vector<1x512xf32> to vector<16x512xf32>
    %6 = arith.addf %3, %5 : vector<16x512xf32>
    %cst_5 = arith.constant 0.000000e+00 : f32
    %7 = vector.broadcast %cst_5 : f32 to vector<16x512xf32>
    %8 = arith.maximumf %6, %7 : vector<16x512xf32>
    %9 = arith.truncf %8 : vector<16x512xf32> to vector<16x512xbf16>
    %c0_6 = arith.constant 0 : index
    %c0_7 = arith.constant 0 : index
    %10 = vector.load %arg4[%c0_6, %c0_7] : memref<512x512xbf16, #tpu.memory_space<vmem>>, vector<512x512xbf16>
    %cst_8 = arith.constant dense<0.000000e+00> : vector<16x512xf32>
    %11 = tpu.matmul %9, %10, %cst_8 {dimension_numbers = #tpu.dot_dimension_numbers<[1], [0], [0], [1], [0, 0, 1, 1], [], []>} : vector<16x512xbf16>, vector<512x512xbf16>, vector<16x512xf32> -> vector<16x512xf32>
    %c0_9 = arith.constant 0 : index
    %c0_10 = arith.constant 0 : index
    %12 = vector.load %arg5[%c0_9, %c0_10] : memref<1x512xf32, #tpu.memory_space<vmem>>, vector<1x512xf32>
    %13 = vector.broadcast %12 : vector<1x512xf32> to vector<16x512xf32>
    %14 = arith.addf %11, %13 : vector<16x512xf32>
    %cst_11 = arith.constant 0.000000e+00 : f32
    %15 = vector.broadcast %cst_11 : f32 to vector<16x512xf32>
    %16 = arith.maximumf %14, %15 : vector<16x512xf32>
    %17 = arith.truncf %16 : vector<16x512xf32> to vector<16x512xbf16>
    %c0_12 = arith.constant 0 : index
    %c0_13 = arith.constant 0 : index
    %18 = vector.load %arg6[%c0_12, %c0_13] : memref<512x512xbf16, #tpu.memory_space<vmem>>, vector<512x512xbf16>
    %cst_14 = arith.constant dense<0.000000e+00> : vector<16x512xf32>
    %19 = tpu.matmul %17, %18, %cst_14 {dimension_numbers = #tpu.dot_dimension_numbers<[1], [0], [0], [1], [0, 0, 1, 1], [], []>} : vector<16x512xbf16>, vector<512x512xbf16>, vector<16x512xf32> -> vector<16x512xf32>
    %c0_15 = arith.constant 0 : index
    %c0_16 = arith.constant 0 : index
    %20 = vector.load %arg7[%c0_15, %c0_16] : memref<1x512xf32, #tpu.memory_space<vmem>>, vector<1x512xf32>
    %21 = vector.broadcast %20 : vector<1x512xf32> to vector<16x512xf32>
    %22 = arith.addf %19, %21 : vector<16x512xf32>
    %cst_17 = arith.constant 0.000000e+00 : f32
    %23 = vector.broadcast %cst_17 : f32 to vector<16x512xf32>
    %24 = arith.maximumf %22, %23 : vector<16x512xf32>
    %c0_18 = arith.constant 0 : index
    %c0_19 = arith.constant 0 : index
    %25 = vector.load %arg8[%c0_18, %c0_19] : memref<1x512xf32, #tpu.memory_space<vmem>>, vector<1x512xf32>
    %26 = vector.broadcast %25 : vector<1x512xf32> to vector<16x512xf32>
    %27 = arith.mulf %24, %26 : vector<16x512xf32>
    %cst_20 = arith.constant dense<0.000000e+00> : vector<16xf32>
    %28 = vector.multi_reduction <add>, %27, %cst_20 [1] : vector<16x512xf32> to vector<16xf32>
    %29 = vector.shape_cast %28 : vector<16xf32> to vector<16x1xf32>
    %c0_21 = arith.constant 0 : index
    %c0_22 = arith.constant 0 : index
    %30 = vector.load %arg9[%c0_21, %c0_22] : memref<1x1xf32, #tpu.memory_space<vmem>>, vector<1x1xf32>
    %31 = vector.broadcast %30 : vector<1x1xf32> to vector<16x1xf32>
    %32 = arith.addf %29, %31 : vector<16x1xf32>
    %c0_23 = arith.constant 0 : index
    %c0_24 = arith.constant 0 : index
    %33 = vector.load %arg10[%c0_23, %c0_24] : memref<16x1xf32, #tpu.memory_space<vmem>>, vector<16x1xf32>
    tpu.vector_store %arg10[%c0_23, %c0_24], %32 {strides = array<i32>} : memref<16x1xf32, #tpu.memory_space<vmem>>, vector<16x1xf32>,
    return
  }
  func.func @transform_0(%arg0: i32) -> (i32, i32) {
    %c0_i32 = arith.constant 0 : i32
    %c0_i32_0 = arith.constant 0 : i32
    return %arg0, %c0_i32 : i32, i32
  }
  func.func @transform_1(%arg0: i32) -> (i32, i32) {
    %c0_i32 = arith.constant 0 : i32
    %c0_i32_0 = arith.constant 0 : i32
    %c0_i32_1 = arith.constant 0 : i32
    return %c0_i32, %c0_i32_0 : i32, i32
  }
  func.func @transform_2(%arg0: i32) -> (i32, i32) {
    %c0_i32 = arith.constant 0 : i32
    %c0_i32_0 = arith.constant 0 : i32
    %c0_i32_1 = arith.constant 0 : i32
    return %c0_i32, %c0_i32_0 : i32, i32
  }
  func.func @transform_3(%arg0: i32) -> (i32, i32) {
    %c0_i32 = arith.constant 0 : i32
    %c0_i32_0 = arith.constant 0 : i32
    %c0_i32_1 = arith.constant 0 : i32
    return %c0_i32, %c0_i32_0 : i32, i32
  }
  func.func @transform_4(%arg0: i32) -> (i32, i32) {
    %c0_i32 = arith.constant 0 : i32
    %c0_i32_0 = arith.constant 0 : i32
    %c0_i32_1 = arith.constant 0 : i32
    return %c0_i32, %c0_i32_0 : i32, i32
  }
  func.func @transform_5(%arg0: i32) -> (i32, i32) {
    %c0_i32 = arith.constant 0 : i32
    %c0_i32_0 = arith.constant 0 : i32
    %c0_i32_1 = arith.constant 0 : i32
    return %c0_i32, %c0_i32_0 : i32, i32
  }
  func.func @transform_6(%arg0: i32) -> (i32, i32) {
    %c0_i32 = arith.constant 0 : i32
    %c0_i32_0 = arith.constant 0 : i32
    %c0_i32_1 = arith.constant 0 : i32
    return %c0_i32, %c0_i32_0 : i32, i32
  }
  func.func @transform_7(%arg0: i32) -> (i32, i32) {
    %c0_i32 = arith.constant 0 : i32
    %c0_i32_0 = arith.constant 0 : i32
    %c0_i32_1 = arith.constant 0 : i32
    return %c0_i32, %c0_i32_0 : i32, i32
  }
  func.func @transform_8(%arg0: i32) -> (i32, i32) {
    %c0_i32 = arith.constant 0 : i32
    %c0_i32_0 = arith.constant 0 : i32
    %c0_i32_1 = arith.constant 0 : i32
    return %c0_i32, %c0_i32_0 : i32, i32
  }
  func.func @transform_9(%arg0: i32) -> (i32, i32) {
    %c0_i32 = arith.constant 0 : i32
    %c0_i32_0 = arith.constant 0 : i32
    return %arg0, %c0_i32 : i32, i32
  }
}

</mosaic_0001>

<llo_original>
// kernel: baseline_nn_forward.1
$region0: #{baseline_nn_forward.1}
  #allocation0 [shape = 'u32[]', space=smem, size = 0x4, offset = 0x4, fixed_abs, tag = 'smem constant byte address 0x4 - core index']
  #allocation1 [shape = 'u32[144,128]{1,0:T(1,128)}', space=vmem, size = 0x12000, scoped, tag = 'internal scratch']
  #allocation2 [shape = 'f32[1,1]{1,0:T(1,128)S(1)}', space=vmem, size = 0x200, scoped, tag = 'scoped memory for baseline_nn_forward.1']
  %s0 = inlined_call_operand.vmem [shape: f32[16,1024], index: 0, kind: input, shape index: {}]
  %s1 = inlined_call_operand.hbm [shape: bf16[1024,512], index: 1, kind: input, shape index: {}]
  %s2 = inlined_call_operand.vmem [shape: f32[1,512], index: 2, kind: input, shape index: {}]
  %s3 = inlined_call_operand.hbm [shape: bf16[512,512], index: 3, kind: input, shape index: {}]
  %s4 = inlined_call_operand.vmem [shape: f32[1,512], index: 4, kind: input, shape index: {}]
  %s5 = inlined_call_operand.hbm [shape: bf16[512,512], index: 5, kind: input, shape index: {}]
  %s6 = inlined_call_operand.vmem [shape: f32[1,512], index: 6, kind: input, shape index: {}]
  %s7 = inlined_call_operand.vmem [shape: f32[1,512], index: 7, kind: input, shape index: {}]
  %s8 = inlined_call_operand.<no memory space> [shape: f32[1,1], index: 8, kind: input, shape index: {}]
  %s9 = inlined_call_operand.vmem [shape: f32[16,1], index: 9, kind: output, shape index: {}]
  %s10 = sld [smem:[#allocation0]]
  $region58: #{baseline_nn_forward.1} parent=0
    _
  %s12 = ssub.s32 1, %s10
  %s13 = scalar_select 0, %s12, %s10
  %v14 = vstv %s8
  %15 = vst [vmem:[#allocation2] sm:$0x1] %v14
  $region1: #{baseline_nn_forward.1} parent=0
    #allocation3 [shape = 'u8[1048576]{0}', space=vmem, size = 0x100000, scoped, tag = 'input window, operand 1, single buffered']
    #allocation4 [shape = 's32[1]{0}', space=sflag, size = 0x4, scoped, tag = 'scoped memory for baseline_nn_forward.1']
    #allocation5 [shape = 'u8[524288]{0}', space=vmem, size = 0x80000, scoped, tag = 'input window, operand 3, single buffered']
    #allocation6 [shape = 's32[1]{0}', space=sflag, size = 0x4, scoped, tag = 'scoped memory for baseline_nn_forward.1']
    #allocation7 [shape = 'u8[524288]{0}', space=vmem, size = 0x80000, scoped, tag = 'input window, operand 5, single buffered']
    %16 = vsyncpa [#allocation4], 0
    %17 = vsyncpa [#allocation6], 0
    // Predicated region
    $region2: #{baseline_nn_forward.1} parent=1 // pred_check
      _
    $region3: #{baseline_nn_forward.1} parent=1 // pred_check_branch
      %19 = sbr.rel (0) target = $region5
    $region4: #{baseline_nn_forward.1} parent=1 // pred_region
      _
    $region5: #{baseline_nn_forward.1} parent=1 // pred_fallthru
      _
    // Predicated region
    $region6: #{baseline_nn_forward.1} parent=1 // pred_check
      _
    $region7: #{baseline_nn_forward.1} parent=1 // pred_check_branch
      %21 = sbr.rel (0) target = $region9
    $region8: #{baseline_nn_forward.1} parent=1 // pred_region
      %s23 = ssub.s32 32768, 32768
      %24 = vsyncadd [#allocation4], %s23
      %s25 = sshll.u32 [#allocation3], 4
      %s26 = int_to_ptr.vmem [resolvable:$true] %s25
      %31 = dma.hbm_to_vmem [thread:$0]  %s1, 32768, %s26, [#allocation4], 256, 256, 16
    $region9: #{baseline_nn_forward.1} parent=1 // pred_fallthru
      _
    // Predicated region
    $region10: #{baseline_nn_forward.1} parent=1 // pred_check
      _
    $region11: #{baseline_nn_forward.1} parent=1 // pred_check_branch
      %33 = sbr.rel (0) target = $region13
    $region12: #{baseline_nn_forward.1} parent=1 // pred_region
      _
    $region13: #{baseline_nn_forward.1} parent=1 // pred_fallthru
      _
    // Predicated region
    $region14: #{baseline_nn_forward.1} parent=1 // pred_check
      _
    $region15: #{baseline_nn_forward.1} parent=1 // pred_check_branch
      %35 = sbr.rel (0) target = $region17
    $region16: #{baseline_nn_forward.1} parent=1 // pred_region
      %s37 = ssub.s32 16384, 16384
      %38 = vsyncadd [#allocation6], %s37
      %s39 = sshll.u32 [#allocation5], 4
      %s40 = int_to_ptr.vmem [resolvable:$true] %s39
      %45 = dma.hbm_to_vmem [thread:$0]  %s3, 16384, %s40, [#allocation6], 256, 256, 16
    $region17: #{baseline_nn_forward.1} parent=1 // pred_fallthru
      _
    // Predicated region
    $region18: #{baseline_nn_forward.1} parent=1 // pred_check
      _
    $region19: #{baseline_nn_forward.1} parent=1 // pred_check_branch
      %47 = sbr.rel (0) target = $region21
    $region20: #{baseline_nn_forward.1} parent=1 // pred_region
      _
    $region21: #{baseline_nn_forward.1} parent=1 // pred_fallthru
      _
    // Predicated region
    $region22: #{baseline_nn_forward.1} parent=1 // pred_check
      _
    $region23: #{baseline_nn_forward.1} parent=1 // pred_check_branch
      %49 = sbr.rel (0) target = $region25
    $region24: #{baseline_nn_forward.1} parent=1 // pred_region
      %s51 = ssub.s32 16384, 16384
      %52 = vsyncadd [#allocation6], %s51
      %s53 = sshll.u32 [#allocation7], 4
      %s54 = int_to_ptr.vmem [resolvable:$true] %s53
      %59 = dma.hbm_to_vmem [thread:$0]  %s5, 16384, %s54, [#allocation6], 256, 256, 16
    $region25: #{baseline_nn_forward.1} parent=1 // pred_fallthru
      _
    // Predicated region
    $region26: #{baseline_nn_forward.1} parent=1 // pred_check
      _
    $region27: #{baseline_nn_forward.1} parent=1 // pred_check_branch
      %61 = sbr.rel (0) target = $region29
    $region28: #{baseline_nn_forward.1} parent=1 // pred_region
      _
    $region29: #{baseline_nn_forward.1} parent=1 // pred_fallthru
      _
    // Predicated region
    $region30: #{baseline_nn_forward.1} parent=1 // pred_check
      _
    $region31: #{baseline_nn_forward.1} parent=1 // pred_check_branch
      %63 = sbr.rel (0) target = $region33
    $region32: #{baseline_nn_forward.1} parent=1 // pred_region
      _
    $region33: #{baseline_nn_forward.1} parent=1 // pred_fallthru
      _
    // Predicated region
    $region34: #{baseline_nn_forward.1} parent=1 // pred_check
      _
    $region35: #{baseline_nn_forward.1} parent=1 // pred_check_branch
      %65 = sbr.rel (0) target = $region37
    $region36: #{baseline_nn_forward.1} parent=1 // pred_region
      _
    $region37: #{baseline_nn_forward.1} parent=1 // pred_fallthru
      _
    // Predicated region
    $region38: #{baseline_nn_forward.1} parent=1 // pred_check
      _
    $region39: #{baseline_nn_forward.1} parent=1 // pred_check_branch
      %67 = sbr.rel (0) target = $region41
    $region40: #{baseline_nn_forward.1} parent=1 // pred_region
      %68 = dma.done [#allocation4], 32768
    $region41: #{baseline_nn_forward.1} parent=1 // pred_fallthru
      _
    // Predicated region
    $region42: #{baseline_nn_forward.1} parent=1 // pred_check
      _
    $region43: #{baseline_nn_forward.1} parent=1 // pred_check_branch
      %70 = sbr.rel (0) target = $region45
    $region44: #{baseline_nn_forward.1} parent=1 // pred_region
      %71 = dma.done [#allocation6], 16384
    $region45: #{baseline_nn_forward.1} parent=1 // pred_fallthru
      _
    // Predicated region
    $region46: #{baseline_nn_forward.1} parent=1 // pred_check
      _
    $region47: #{baseline_nn_forward.1} parent=1 // pred_check_branch
      %73 = sbr.rel (0) target = $region49
    $region48: #{baseline_nn_forward.1} parent=1 // pred_region
      %74 = dma.done [#allocation6], 16384
    $region49: #{baseline_nn_forward.1} parent=1 // pred_fallthru
      _
    %v75 = vld [vmem:[%s0] sm:$0xff]
    %v76 = vld [vmem:[%s0 + $0x8] sm:$0xff]
    %v77 = vld [vmem:[%s0 + $0x10] sm:$0xff]
    %v78 = vld [vmem:[%s0 + $0x18] sm:$0xff]
    %v79 = vld [vmem:[%s0 + $0x20] sm:$0xff]
    %v80 = vld [vmem:[%s0 + $0x28] sm:$0xff]
    %v81 = vld [vmem:[%s0 + $0x30] sm:$0xff]
    %v82 = vld [vmem:[%s0 + $0x38] sm:$0xff]
    %v83 = vld [vmem:[%s0 + $0x40] sm:$0xff]
    %v84 = vld [vmem:[%s0 + $0x48] sm:$0xff]
    %v85 = vld [vmem:[%s0 + $0x50] sm:$0xff]
    %v86 = vld [vmem:[%s0 + $0x58] sm:$0xff]
    %v87 = vld [vmem:[%s0 + $0x60] sm:$0xff]
    %v88 = vld [vmem:[%s0 + $0x68] sm:$0xff]
    %v89 = vld [vmem:[%s0 + $0x70] sm:$0xff]
    %v90 = vld [vmem:[%s0 + $0x78] sm:$0xff]
    %v91 = vpack.c.bf16 %v83, %v75
    %v92 = vpack.c.bf16 %v84, %v76
    %v93 = vpack.c.bf16 %v85, %v77
    %v94 = vpack.c.bf16 %v86, %v78
    %v95 = vpack.c.bf16 %v87, %v79
    %v96 = vpack.c.bf16 %v88, %v80
    %v97 = vpack.c.bf16 %v89, %v81
    %v98 = vpack.c.bf16 %v90, %v82
    %v99 = vld [vmem:[#allocation3] sm:$0xff]
    %v100 = vld [vmem:[#allocation3 + $0x8] sm:$0xff]
    %v101 = vld [vmem:[#allocation3 + $0x10] sm:$0xff]
    %v102 = vld [vmem:[#allocation3 + $0x18] sm:$0xff]
    %v103 = vld [vmem:[#allocation3 + $0x20] sm:$0xff]
    %v104 = vld [vmem:[#allocation3 + $0x28] sm:$0xff]
    %v105 = vld [vmem:[#allocation3 + $0x30] sm:$0xff]
    %v106 = vld [vmem:[#allocation3 + $0x38] sm:$0xff]
    %v107 = vld [vmem:[#allocation3 + $0x40] sm:$0xff]
    %v108 = vld [vmem:[#allocation3 + $0x48] sm:$0xff]
    %v109 = vld [vmem:[#allocation3 + $0x50] sm:$0xff]
    %v110 = vld [vmem:[#allocation3 + $0x58] sm:$0xff]
    %v111 = vld [vmem:[#allocation3 + $0x60] sm:$0xff]
    %v112 = vld [vmem:[#allocation3 + $0x68] sm:$0xff]
    %v113 = vld [vmem:[#allocation3 + $0x70] sm:$0xff]
    %v114 = vld [vmem:[#allocation3 + $0x78] sm:$0xff]
    %v115 = vld [vmem:[#allocation3 + $0x80] sm:$0xff]
    %v116 = vld [vmem:[#allocation3 + $0x88] sm:$0xff]
    %v117 = vld [vmem:[#allocation3 + $0x90] sm:$0xff]
    %v118 = vld [vmem:[#allocation3 + $0x98] sm:$0xff]
    %v119 = vld [vmem:[#allocation3 + $0xa0] sm:$0xff]
    %v120 = vld [vmem:[#allocation3 + $0xa8] sm:$0xff]
    %v121 = vld [vmem:[#allocation3 + $0xb0] sm:$0xff]
    %v122 = vld [vmem:[#allocation3 + $0xb8] sm:$0xff]
    %v123 = vld [vmem:[#allocation3 + $0xc0] sm:$0xff]
    %v124 = vld [vmem:[#allocation3 + $0xc8] sm:$0xff]
    %v125 = vld [vmem:[#allocation3 + $0xd0] sm:$0xff]
    %v126 = vld [vmem:[#allocation3 + $0xd8] sm:$0xff]
    %v127 = vld [vmem:[#allocation3 + $0xe0] sm:$0xff]
    %v128 = vld [vmem:[#allocation3 + $0xe8] sm:$0xff]
    %v129 = vld [vmem:[#allocation3 + $0xf0] sm:$0xff]
    %v130 = vld [vmem:[#allocation3 + $0xf8] sm:$0xff]
    %v131 = vld [vmem:[#allocation3 + $0x100] sm:$0xff]
    %v132 = vld [vmem:[#allocation3 + $0x108] sm:$0xff]
    %v133 = vld [vmem:[#allocation3 + $0x110] sm:$0xff]
    %v134 = vld [vmem:[#allocation3 + $0x118] sm:$0xff]
    %v135 = vld [vmem:[#allocation3 + $0x120] sm:$0xff]
    %v136 = vld [vmem:[#allocation3 + $0x128] sm:$0xff]
    %v137 = vld [vmem:[#allocation3 + $0x130] sm:$0xff]
    %v138 = vld [vmem:[#allocation3 + $0x138] sm:$0xff]
    %v139 = vld [vmem:[#allocation3 + $0x140] sm:$0xff]
    %v140 = vld [vmem:[#allocation3 + $0x148] sm:$0xff]
    %v141 = vld [vmem:[#allocation3 + $0x150] sm:$0xff]
    %v142 = vld [vmem:[#allocation3 + $0x158] sm:$0xff]
    %v143 = vld [vmem:[#allocation3 + $0x160] sm:$0xff]
    %v144 = vld [vmem:[#allocation3 + $0x168] sm:$0xff]
    %v145 = vld [vmem:[#allocation3 + $0x170] sm:$0xff]
    %v146 = vld [vmem:[#allocation3 + $0x178] sm:$0xff]
    %v147 = vld [vmem:[#allocation3 + $0x180] sm:$0xff]
    %v148 = vld [vmem:[#allocation3 + $0x188] sm:$0xff]
    %v149 = vld [vmem:[#allocation3 + $0x190] sm:$0xff]
    %v150 = vld [vmem:[#allocation3 + $0x198] sm:$0xff]
    %v151 = vld [vmem:[#allocation3 + $0x1a0] sm:$0xff]
    %v152 = vld [vmem:[#allocation3 + $0x1a8] sm:$0xff]
    %v153 = vld [vmem:[#allocation3 + $0x1b0] sm:$0xff]
    %v154 = vld [vmem:[#allocation3 + $0x1b8] sm:$0xff]
    %v155 = vld [vmem:[#allocation3 + $0x1c0] sm:$0xff]
    %v156 = vld [vmem:[#allocation3 + $0x1c8] sm:$0xff]
    %v157 = vld [vmem:[#allocation3 + $0x1d0] sm:$0xff]
    %v158 = vld [vmem:[#allocation3 + $0x1d8] sm:$0xff]
    %v159 = vld [vmem:[#allocation3 + $0x1e0] sm:$0xff]
    %v160 = vld [vmem:[#allocation3 + $0x1e8] sm:$0xff]
    %v161 = vld [vmem:[#allocation3 + $0x1f0] sm:$0xff]
    %v162 = vld [vmem:[#allocation3 + $0x1f8] sm:$0xff]
    %v163 = vld [vmem:[#allocation3 + $0x200] sm:$0xff]
    %v164 = vld [vmem:[#allocation3 + $0x208] sm:$0xff]
    %v165 = vld [vmem:[#allocation3 + $0x210] sm:$0xff]
    %v166 = vld [vmem:[#allocation3 + $0x218] sm:$0xff]
    %v167 = vld [vmem:[#allocation3 + $0x220] sm:$0xff]
    %v168 = vld [vmem:[#allocation3 + $0x228] sm:$0xff]
    %v169 = vld [vmem:[#allocation3 + $0x230] sm:$0xff]
    %v170 = vld [vmem:[#allocation3 + $0x238] sm:$0xff]
    %v171 = vld [vmem:[#allocation3 + $0x240] sm:$0xff]
    %v172 = vld [vmem:[#allocation3 + $0x248] sm:$0xff]
    %v173 = vld [vmem:[#allocation3 + $0x250] sm:$0xff]
    %v174 = vld [vmem:[#allocation3 + $0x258] sm:$0xff]
    %v175 = vld [vmem:[#allocation3 + $0x260] sm:$0xff]
    %v176 = vld [vmem:[#allocation3 + $0x268] sm:$0xff]
    %v177 = vld [vmem:[#allocation3 + $0x270] sm:$0xff]
    %v178 = vld [vmem:[#allocation3 + $0x278] sm:$0xff]
    %v179 = vld [vmem:[#allocation3 + $0x280] sm:$0xff]
    %v180 = vld [vmem:[#allocation3 + $0x288] sm:$0xff]
    %v181 = vld [vmem:[#allocation3 + $0x290] sm:$0xff]
    %v182 = vld [vmem:[#allocation3 + $0x298] sm:$0xff]
    %v183 = vld [vmem:[#allocation3 + $0x2a0] sm:$0xff]
    %v184 = vld [vmem:[#allocation3 + $0x2a8] sm:$0xff]
    %v185 = vld [vmem:[#allocation3 + $0x2b0] sm:$0xff]
    %v186 = vld [vmem:[#allocation3 + $0x2b8] sm:$0xff]
    %v187 = vld [vmem:[#allocation3 + $0x2c0] sm:$0xff]
    %v188 = vld [vmem:[#allocation3 + $0x2c8] sm:$0xff]
    %v189 = vld [vmem:[#allocation3 + $0x2d0] sm:$0xff]
    %v190 = vld [vmem:[#allocation3 + $0x2d8] sm:$0xff]
    %v191 = vld [vmem:[#allocation3 + $0x2e0] sm:$0xff]
    %v192 = vld [vmem:[#allocation3 + $0x2e8] sm:$0xff]
    %v193 = vld [vmem:[#allocation3 + $0x2f0] sm:$0xff]
    %v194 = vld [vmem:[#allocation3 + $0x2f8] sm:$0xff]
    %v195 = vld [vmem:[#allocation3 + $0x300] sm:$0xff]
    %v196 = vld [vmem:[#allocation3 + $0x308] sm:$0xff]
    %v197 = vld [vmem:[#allocation3 + $0x310] sm:$0xff]
    %v198 = vld [vmem:[#allocation3 + $0x318] sm:$0xff]
    %v199 = vld [vmem:[#allocation3 + $0x320] sm:$0xff]
    %v200 = vld [vmem:[#allocation3 + $0x328] sm:$0xff]
    %v201 = vld [vmem:[#allocation3 + $0x330] sm:$0xff]
    %v202 = vld [vmem:[#allocation3 + $0x338] sm:$0xff]
    %v203 = vld [vmem:[#allocation3 + $0x340] sm:$0xff]
    %v204 = vld [vmem:[#allocation3 + $0x348] sm:$0xff]
    %v205 = vld [vmem:[#allocation3 + $0x350] sm:$0xff]
    %v206 = vld [vmem:[#allocation3 + $0x358] sm:$0xff]
    %v207 = vld [vmem:[#allocation3 + $0x360] sm:$0xff]
    %v208 = vld [vmem:[#allocation3 + $0x368] sm:$0xff]
    %v209 = vld [vmem:[#allocation3 + $0x370] sm:$0xff]
    %v210 = vld [vmem:[#allocation3 + $0x378] sm:$0xff]
    %v211 = vld [vmem:[#allocation3 + $0x380] sm:$0xff]
    %v212 = vld [vmem:[#allocation3 + $0x388] sm:$0xff]
    %v213 = vld [vmem:[#allocation3 + $0x390] sm:$0xff]
    %v214 = vld [vmem:[#allocation3 + $0x398] sm:$0xff]
    %v215 = vld [vmem:[#allocation3 + $0x3a0] sm:$0xff]
    %v216 = vld [vmem:[#allocation3 + $0x3a8] sm:$0xff]
    %v217 = vld [vmem:[#allocation3 + $0x3b0] sm:$0xff]
    %v218 = vld [vmem:[#allocation3 + $0x3b8] sm:$0xff]
    %v219 = vld [vmem:[#allocation3 + $0x3c0] sm:$0xff]
    %v220 = vld [vmem:[#allocation3 + $0x3c8] sm:$0xff]
    %v221 = vld [vmem:[#allocation3 + $0x3d0] sm:$0xff]
    %v222 = vld [vmem:[#allocation3 + $0x3d8] sm:$0xff]
    %v223 = vld [vmem:[#allocation3 + $0x3e0] sm:$0xff]
    %v224 = vld [vmem:[#allocation3 + $0x3e8] sm:$0xff]
    %v225 = vld [vmem:[#allocation3 + $0x3f0] sm:$0xff]
    %v226 = vld [vmem:[#allocation3 + $0x3f8] sm:$0xff]
    %v227 = vld [vmem:[#allocation3 + $0x400] sm:$0xff]
    %v228 = vld [vmem:[#allocation3 + $0x408] sm:$0xff]
    %v229 = vld [vmem:[#allocation3 + $0x410] sm:$0xff]
    %v230 = vld [vmem:[#allocation3 + $0x418] sm:$0xff]
    %v231 = vld [vmem:[#allocation3 + $0x420] sm:$0xff]
    %v232 = vld [vmem:[#allocation3 + $0x428] sm:$0xff]
    %v233 = vld [vmem:[#allocation3 + $0x430] sm:$0xff]
    %v234 = vld [vmem:[#allocation3 + $0x438] sm:$0xff]
    %v235 = vld [vmem:[#allocation3 + $0x440] sm:$0xff]
    %v236 = vld [vmem:[#allocation3 + $0x448] sm:$0xff]
    %v237 = vld [vmem:[#allocation3 + $0x450] sm:$0xff]
    %v238 = vld [vmem:[#allocation3 + $0x458] sm:$0xff]
    %v239 = vld [vmem:[#allocation3 + $0x460] sm:$0xff]
    %v240 = vld [vmem:[#allocation3 + $0x468] sm:$0xff]
    %v241 = vld [vmem:[#allocation3 + $0x470] sm:$0xff]
    %v242 = vld [vmem:[#allocation3 + $0x478] sm:$0xff]
    %v243 = vld [vmem:[#allocation3 + $0x480] sm:$0xff]
    %v244 = vld [vmem:[#allocation3 + $0x488] sm:$0xff]
    %v245 = vld [vmem:[#allocation3 + $0x490] sm:$0xff]
    %v246 = vld [vmem:[#allocation3 + $0x498] sm:$0xff]
    %v247 = vld [vmem:[#allocation3 + $0x4a0] sm:$0xff]
    %v248 = vld [vmem:[#allocation3 + $0x4a8] sm:$0xff]
    %v249 = vld [vmem:[#allocation3 + $0x4b0] sm:$0xff]
    %v250 = vld [vmem:[#allocation3 + $0x4b8] sm:$0xff]
    %v251 = vld [vmem:[#allocation3 + $0x4c0] sm:$0xff]
    %v252 = vld [vmem:[#allocation3 + $0x4c8] sm:$0xff]
    %v253 = vld [vmem:[#allocation3 + $0x4d0] sm:$0xff]
    %v254 = vld [vmem:[#allocation3 + $0x4d8] sm:$0xff]
    %v255 = vld [vmem:[#allocation3 + $0x4e0] sm:$0xff]
    %v256 = vld [vmem:[#allocation3 + $0x4e8] sm:$0xff]
    %v257 = vld [vmem:[#allocation3 + $0x4f0] sm:$0xff]
    %v258 = vld [vmem:[#allocation3 + $0x4f8] sm:$0xff]
    %v259 = vld [vmem:[#allocation3 + $0x500] sm:$0xff]
    %v260 = vld [vmem:[#allocation3 + $0x508] sm:$0xff]
    %v261 = vld [vmem:[#allocation3 + $0x510] sm:$0xff]
    %v262 = vld [vmem:[#allocation3 + $0x518] sm:$0xff]
    %v263 = vld [vmem:[#allocation3 + $0x520] sm:$0xff]
    %v264 = vld [vmem:[#allocation3 + $0x528] sm:$0xff]
    %v265 = vld [vmem:[#allocation3 + $0x530] sm:$0xff]
    %v266 = vld [vmem:[#allocation3 + $0x538] sm:$0xff]
    %v267 = vld [vmem:[#allocation3 + $0x540] sm:$0xff]
    %v268 = vld [vmem:[#allocation3 + $0x548] sm:$0xff]
    %v269 = vld [vmem:[#allocation3 + $0x550] sm:$0xff]
    %v270 = vld [vmem:[#allocation3 + $0x558] sm:$0xff]
    %v271 = vld [vmem:[#allocation3 + $0x560] sm:$0xff]
    %v272 = vld [vmem:[#allocation3 + $0x568] sm:$0xff]
    %v273 = vld [vmem:[#allocation3 + $0x570] sm:$0xff]
    %v274 = vld [vmem:[#allocation3 + $0x578] sm:$0xff]
    %v275 = vld [vmem:[#allocation3 + $0x580] sm:$0xff]
    %v276 = vld [vmem:[#allocation3 + $0x588] sm:$0xff]
    %v277 = vld [vmem:[#allocation3 + $0x590] sm:$0xff]
    %v278 = vld [vmem:[#allocation3 + $0x598] sm:$0xff]
    %v279 = vld [vmem:[#allocation3 + $0x5a0] sm:$0xff]
    %v280 = vld [vmem:[#allocation3 + $0x5a8] sm:$0xff]
    %v281 = vld [vmem:[#allocation3 + $0x5b0] sm:$0xff]
    %v282 = vld [vmem:[#allocation3 + $0x5b8] sm:$0xff]
    %v283 = vld [vmem:[#allocation3 + $0x5c0] sm:$0xff]
    %v284 = vld [vmem:[#allocation3 + $0x5c8] sm:$0xff]
    %v285 = vld [vmem:[#allocation3 + $0x5d0] sm:$0xff]
    %v286 = vld [vmem:[#allocation3 + $0x5d8] sm:$0xff]
    %v287 = vld [vmem:[#allocation3 + $0x5e0] sm:$0xff]
    %v288 = vld [vmem:[#allocation3 + $0x5e8] sm:$0xff]
    %v289 = vld [vmem:[#allocation3 + $0x5f0] sm:$0xff]
    %v290 = vld [vmem:[#allocation3 + $0x5f8] sm:$0xff]
    %v291 = vld [vmem:[#allocation3 + $0x600] sm:$0xff]
    %v292 = vld [vmem:[#allocation3 + $0x608] sm:$0xff]
    %v293 = vld [vmem:[#allocation3 + $0x610] sm:$0xff]
    %v294 = vld [vmem:[#allocation3 + $0x618] sm:$0xff]
    %v295 = vld [vmem:[#allocation3 + $0x620] sm:$0xff]
    %v296 = vld [vmem:[#allocation3 + $0x628] sm:$0xff]
    %v297 = vld [vmem:[#allocation3 + $0x630] sm:$0xff]
    %v298 = vld [vmem:[#allocation3 + $0x638] sm:$0xff]
    %v299 = vld [vmem:[#allocation3 + $0x640] sm:$0xff]
    %v300 = vld [vmem:[#allocation3 + $0x648] sm:$0xff]
    %v301 = vld [vmem:[#allocation3 + $0x650] sm:$0xff]
    %v302 = vld [vmem:[#allocation3 + $0x658] sm:$0xff]
    %v303 = vld [vmem:[#allocation3 + $0x660] sm:$0xff]
    %v304 = vld [vmem:[#allocation3 + $0x668] sm:$0xff]
    %v305 = vld [vmem:[#allocation3 + $0x670] sm:$0xff]
    %v306 = vld [vmem:[#allocation3 + $0x678] sm:$0xff]
    %v307 = vld [vmem:[#allocation3 + $0x680] sm:$0xff]
    %v308 = vld [vmem:[#allocation3 + $0x688] sm:$0xff]
    %v309 = vld [vmem:[#allocation3 + $0x690] sm:$0xff]
    %v310 = vld [vmem:[#allocation3 + $0x698] sm:$0xff]
    %v311 = vld [vmem:[#allocation3 + $0x6a0] sm:$0xff]
    %v312 = vld [vmem:[#allocation3 + $0x6a8] sm:$0xff]
    %v313 = vld [vmem:[#allocation3 + $0x6b0] sm:$0xff]
    %v314 = vld [vmem:[#allocation3 + $0x6b8] sm:$0xff]
    %v315 = vld [vmem:[#allocation3 + $0x6c0] sm:$0xff]
    %v316 = vld [vmem:[#allocation3 + $0x6c8] sm:$0xff]
    %v317 = vld [vmem:[#allocation3 + $0x6d0] sm:$0xff]
    %v318 = vld [vmem:[#allocation3 + $0x6d8] sm:$0xff]
    %v319 = vld [vmem:[#allocation3 + $0x6e0] sm:$0xff]
    %v320 = vld [vmem:[#allocation3 + $0x6e8] sm:$0xff]
    %v321 = vld [vmem:[#allocation3 + $0x6f0] sm:$0xff]
    %v322 = vld [vmem:[#allocation3 + $0x6f8] sm:$0xff]
    %v323 = vld [vmem:[#allocation3 + $0x700] sm:$0xff]
    %v324 = vld [vmem:[#allocation3 + $0x708] sm:$0xff]
    %v325 = vld [vmem:[#allocation3 + $0x710] sm:$0xff]
    %v326 = vld [vmem:[#allocation3 + $0x718] sm:$0xff]
    %v327 = vld [vmem:[#allocation3 + $0x720] sm:$0xff]
    %v328 = vld [vmem:[#allocation3 + $0x728] sm:$0xff]
    %v329 = vld [vmem:[#allocation3 + $0x730] sm:$0xff]
    %v330 = vld [vmem:[#allocation3 + $0x738] sm:$0xff]
    %v331 = vld [vmem:[#allocation3 + $0x740] sm:$0xff]
    %v332 = vld [vmem:[#allocation3 + $0x748] sm:$0xff]
    %v333 = vld [vmem:[#allocation3 + $0x750] sm:$0xff]
    %v334 = vld [vmem:[#allocation3 + $0x758] sm:$0xff]
    %v335 = vld [vmem:[#allocation3 + $0x760] sm:$0xff]
    %v336 = vld [vmem:[#allocation3 + $0x768] sm:$0xff]
    %v337 = vld [vmem:[#allocation3 + $0x770] sm:$0xff]
    %v338 = vld [vmem:[#allocation3 + $0x778] sm:$0xff]
    %v339 = vld [vmem:[#allocation3 + $0x780] sm:$0xff]
    %v340 = vld [vmem:[#allocation3 + $0x788] sm:$0xff]
    %v341 = vld [vmem:[#allocation3 + $0x790] sm:$0xff]
    %v342 = vld [vmem:[#allocation3 + $0x798] sm:$0xff]
    %v343 = vld [vmem:[#allocation3 + $0x7a0] sm:$0xff]
    %v344 = vld [vmem:[#allocation3 + $0x7a8] sm:$0xff]
    %v345 = vld [vmem:[#allocation3 + $0x7b0] sm:$0xff]
    %v346 = vld [vmem:[#allocation3 + $0x7b8] sm:$0xff]
    %v347 = vld [vmem:[#allocation3 + $0x7c0] sm:$0xff]
    %v348 = vld [vmem:[#allocation3 + $0x7c8] sm:$0xff]
    %v349 = vld [vmem:[#allocation3 + $0x7d0] sm:$0xff]
    %v350 = vld [vmem:[#allocation3 + $0x7d8] sm:$0xff]
    %v351 = vld [vmem:[#allocation3 + $0x7e0] sm:$0xff]
    %v352 = vld [vmem:[#allocation3 + $0x7e8] sm:$0xff]
    %v353 = vld [vmem:[#allocation3 + $0x7f0] sm:$0xff]
    %v354 = vld [vmem:[#allocation3 + $0x7f8] sm:$0xff]
    %v355 = vld [vmem:[%s2] sm:$0xf]
    %v357 = vlaneseq
    %v358 = vshrl.u32 %v357, 7
    %v359 = vsub.s32 0, %v358
    %v360 = vrot.slane %v355, %v359
    %v361 = vlaneseq
    %v362 = vshrl.u32 %v361, 7
    %v363 = vsub.s32 1, %v362
    %v364 = vrot.slane %v355, %v363
    %v365 = vlaneseq
    %v366 = vshrl.u32 %v365, 7
    %v367 = vsub.s32 2, %v366
    %v368 = vrot.slane %v355, %v367
    %v369 = vlaneseq
    %v370 = vshrl.u32 %v369, 7
    %v371 = vsub.s32 3, %v370
    %v372 = vrot.slane %v355, %v371
    %v633 = vunpack.c.l.b16 %v99
    %v634 = vunpack.c.h.b16 %v99
    %v635 = vunpack.c.l.b16 %v100
    %v636 = vunpack.c.h.b16 %v100
    %v637 = vunpack.c.l.b16 %v101
    %v638 = vunpack.c.h.b16 %v101
    %v639 = vunpack.c.l.b16 %v102
    %v640 = vunpack.c.h.b16 %v102
    %v641 = vunpack.c.l.b16 %v103
    %v642 = vunpack.c.h.b16 %v103
    %v643 = vunpack.c.l.b16 %v104
    %v644 = vunpack.c.h.b16 %v104
    %v645 = vunpack.c.l.b16 %v105
    %v646 = vunpack.c.h.b16 %v105
    %v647 = vunpack.c.l.b16 %v106
    %v648 = vunpack.c.h.b16 %v106
    %v649 = vunpack.c.l.b16 %v107
    %v650 = vunpack.c.h.b16 %v107
    %v651 = vunpack.c.l.b16 %v108
    %v652 = vunpack.c.h.b16 %v108
    %v653 = vunpack.c.l.b16 %v109
    %v654 = vunpack.c.h.b16 %v109
    %v655 = vunpack.c.l.b16 %v110
    %v656 = vunpack.c.h.b16 %v110
    %v657 = vunpack.c.l.b16 %v111
    %v658 = vunpack.c.h.b16 %v111
    %v659 = vunpack.c.l.b16 %v112
    %v660 = vunpack.c.h.b16 %v112
    %v661 = vunpack.c.l.b16 %v113
    %v662 = vunpack.c.h.b16 %v113
    %v663 = vunpack.c.l.b16 %v114
    %v664 = vunpack.c.h.b16 %v114
    %v665 = vunpack.c.l.b16 %v115
    %v666 = vunpack.c.h.b16 %v115
    %v667 = vunpack.c.l.b16 %v116
    %v668 = vunpack.c.h.b16 %v116
    %v669 = vunpack.c.l.b16 %v117
    %v670 = vunpack.c.h.b16 %v117
    %v671 = vunpack.c.l.b16 %v118
    %v672 = vunpack.c.h.b16 %v118
    %v673 = vunpack.c.l.b16 %v119
    %v674 = vunpack.c.h.b16 %v119
    %v675 = vunpack.c.l.b16 %v120
    %v676 = vunpack.c.h.b16 %v120
    %v677 = vunpack.c.l.b16 %v121
    %v678 = vunpack.c.h.b16 %v121
    %v679 = vunpack.c.l.b16 %v122
    %v680 = vunpack.c.h.b16 %v122
    %v681 = vunpack.c.l.b16 %v123
    %v682 = vunpack.c.h.b16 %v123
    %v683 = vunpack.c.l.b16 %v124
    %v684 = vunpack.c.h.b16 %v124
    %v685 = vunpack.c.l.b16 %v125
    %v686 = vunpack.c.h.b16 %v125
    %v687 = vunpack.c.l.b16 %v126
    %v688 = vunpack.c.h.b16 %v126
    %v689 = vunpack.c.l.b16 %v127
    %v690 = vunpack.c.h.b16 %v127
    %v691 = vunpack.c.l.b16 %v128
    %v692 = vunpack.c.h.b16 %v128
    %v693 = vunpack.c.l.b16 %v129
    %v694 = vunpack.c.h.b16 %v129
    %v695 = vunpack.c.l.b16 %v130
    %v696 = vunpack.c.h.b16 %v130
    %v697 = vunpack.c.l.b16 %v131
    %v698 = vunpack.c.h.b16 %v131
    %v699 = vunpack.c.l.b16 %v132
    %v700 = vunpack.c.h.b16 %v132
    %v701 = vunpack.c.l.b16 %v133
    %v702 = vunpack.c.h.b16 %v133
    %v703 = vunpack.c.l.b16 %v134
    %v704 = vunpack.c.h.b16 %v134
    %v705 = vunpack.c.l.b16 %v135
    %v706 = vunpack.c.h.b16 %v135
    %v707 = vunpack.c.l.b16 %v136
    %v708 = vunpack.c.h.b16 %v136
    %v709 = vunpack.c.l.b16 %v137
    %v710 = vunpack.c.h.b16 %v137
    %v711 = vunpack.c.l.b16 %v138
    %v712 = vunpack.c.h.b16 %v138
    %v713 = vunpack.c.l.b16 %v139
    %v714 = vunpack.c.h.b16 %v139
    %v715 = vunpack.c.l.b16 %v140
    %v716 = vunpack.c.h.b16 %v140
    %v717 = vunpack.c.l.b16 %v141
    %v718 = vunpack.c.h.b16 %v141
    %v719 = vunpack.c.l.b16 %v142
    %v720 = vunpack.c.h.b16 %v142
    %v721 = vunpack.c.l.b16 %v143
    %v722 = vunpack.c.h.b16 %v143
    %v723 = vunpack.c.l.b16 %v144
    %v724 = vunpack.c.h.b16 %v144
    %v725 = vunpack.c.l.b16 %v145
    %v726 = vunpack.c.h.b16 %v145
    %v727 = vunpack.c.l.b16 %v146
    %v728 = vunpack.c.h.b16 %v146
    %v729 = vunpack.c.l.b16 %v147
    %v730 = vunpack.c.h.b16 %v147
    %v731 = vunpack.c.l.b16 %v148
    %v732 = vunpack.c.h.b16 %v148
    %v733 = vunpack.c.l.b16 %v149
    %v734 = vunpack.c.h.b16 %v149
    %v735 = vunpack.c.l.b16 %v150
    %v736 = vunpack.c.h.b16 %v150
    %v737 = vunpack.c.l.b16 %v151
    %v738 = vunpack.c.h.b16 %v151
    %v739 = vunpack.c.l.b16 %v152
    %v740 = vunpack.c.h.b16 %v152
    %v741 = vunpack.c.l.b16 %v153
    %v742 = vunpack.c.h.b16 %v153
    %v743 = vunpack.c.l.b16 %v154
    %v744 = vunpack.c.h.b16 %v154
    %v745 = vunpack.c.l.b16 %v155
    %v746 = vunpack.c.h.b16 %v155
    %v747 = vunpack.c.l.b16 %v156
    %v748 = vunpack.c.h.b16 %v156
    %v749 = vunpack.c.l.b16 %v157
    %v750 = vunpack.c.h.b16 %v157
    %v751 = vunpack.c.l.b16 %v158
    %v752 = vunpack.c.h.b16 %v158
    %v753 = vunpack.c.l.b16 %v159
    %v754 = vunpack.c.h.b16 %v159
    %v755 = vunpack.c.l.b16 %v160
    %v756 = vunpack.c.h.b16 %v160
    %v757 = vunpack.c.l.b16 %v161
    %v758 = vunpack.c.h.b16 %v161
    %v759 = vunpack.c.l.b16 %v162
    %v760 = vunpack.c.h.b16 %v162
    %v761 = vunpack.c.l.b16 %v163
    %v762 = vunpack.c.h.b16 %v163
    %v763 = vunpack.c.l.b16 %v164
    %v764 = vunpack.c.h.b16 %v164
    %v765 = vunpack.c.l.b16 %v165
    %v766 = vunpack.c.h.b16 %v165
    %v767 = vunpack.c.l.b16 %v166
    %v768 = vunpack.c.h.b16 %v166
    %v769 = vunpack.c.l.b16 %v167
    %v770 = vunpack.c.h.b16 %v167
    %v771 = vunpack.c.l.b16 %v168
    %v772 = vunpack.c.h.b16 %v168
    %v773 = vunpack.c.l.b16 %v169
    %v774 = vunpack.c.h.b16 %v169
    %v775 = vunpack.c.l.b16 %v170
    %v776 = vunpack.c.h.b16 %v170
    %v777 = vunpack.c.l.b16 %v171
    %v778 = vunpack.c.h.b16 %v171
    %v779 = vunpack.c.l.b16 %v172
    %v780 = vunpack.c.h.b16 %v172
    %v781 = vunpack.c.l.b16 %v173
    %v782 = vunpack.c.h.b16 %v173
    %v783 = vunpack.c.l.b16 %v174
    %v784 = vunpack.c.h.b16 %v174
    %v785 = vunpack.c.l.b16 %v175
    %v786 = vunpack.c.h.b16 %v175
    %v787 = vunpack.c.l.b16 %v176
    %v788 = vunpack.c.h.b16 %v176
    %v789 = vunpack.c.l.b16 %v177
    %v790 = vunpack.c.h.b16 %v177
    %v791 = vunpack.c.l.b16 %v178
    %v792 = vunpack.c.h.b16 %v178
    %v793 = vunpack.c.l.b16 %v179
    %v794 = vunpack.c.h.b16 %v179
    %v795 = vunpack.c.l.b16 %v180
    %v796 = vunpack.c.h.b16 %v180
    %v797 = vunpack.c.l.b16 %v181
    %v798 = vunpack.c.h.b16 %v181
    %v799 = vunpack.c.l.b16 %v182
    %v800 = vunpack.c.h.b16 %v182
    %v801 = vunpack.c.l.b16 %v183
    %v802 = vunpack.c.h.b16 %v183
    %v803 = vunpack.c.l.b16 %v184
    %v804 = vunpack.c.h.b16 %v184
    %v805 = vunpack.c.l.b16 %v185
    %v806 = vunpack.c.h.b16 %v185
    %v807 = vunpack.c.l.b16 %v186
    %v808 = vunpack.c.h.b16 %v186
    %v809 = vunpack.c.l.b16 %v187
    %v810 = vunpack.c.h.b16 %v187
    %v811 = vunpack.c.l.b16 %v188
    %v812 = vunpack.c.h.b16 %v188
    %v813 = vunpack.c.l.b16 %v189
    %v814 = vunpack.c.h.b16 %v189
    %v815 = vunpack.c.l.b16 %v190
    %v816 = vunpack.c.h.b16 %v190
    %v817 = vunpack.c.l.b16 %v191
    %v818 = vunpack.c.h.b16 %v191
    %v819 = vunpack.c.l.b16 %v192
    %v820 = vunpack.c.h.b16 %v192
    %v821 = vunpack.c.l.b16 %v193
    %v822 = vunpack.c.h.b16 %v193
    %v823 = vunpack.c.l.b16 %v194
    %v824 = vunpack.c.h.b16 %v194
    %v825 = vunpack.c.l.b16 %v195
    %v826 = vunpack.c.h.b16 %v195
    %v827 = vunpack.c.l.b16 %v196
    %v828 = vunpack.c.h.b16 %v196
    %v829 = vunpack.c.l.b16 %v197
    %v830 = vunpack.c.h.b16 %v197
    %v831 = vunpack.c.l.b16 %v198
    %v832 = vunpack.c.h.b16 %v198
    %v833 = vunpack.c.l.b16 %v199
    %v834 = vunpack.c.h.b16 %v199
    %v835 = vunpack.c.l.b16 %v200
    %v836 = vunpack.c.h.b16 %v200
    %v837 = vunpack.c.l.b16 %v201
    %v838 = vunpack.c.h.b16 %v201
    %v839 = vunpack.c.l.b16 %v202
    %v840 = vunpack.c.h.b16 %v202
    %v841 = vunpack.c.l.b16 %v203
    %v842 = vunpack.c.h.b16 %v203
    %v843 = vunpack.c.l.b16 %v204
    %v844 = vunpack.c.h.b16 %v204
    %v845 = vunpack.c.l.b16 %v205
    %v846 = vunpack.c.h.b16 %v205
    %v847 = vunpack.c.l.b16 %v206
    %v848 = vunpack.c.h.b16 %v206
    %v849 = vunpack.c.l.b16 %v207
    %v850 = vunpack.c.h.b16 %v207
    %v851 = vunpack.c.l.b16 %v208
    %v852 = vunpack.c.h.b16 %v208
    %v853 = vunpack.c.l.b16 %v209
    %v854 = vunpack.c.h.b16 %v209
    %v855 = vunpack.c.l.b16 %v210
    %v856 = vunpack.c.h.b16 %v210
    %v857 = vunpack.c.l.b16 %v211
    %v858 = vunpack.c.h.b16 %v211
    %v859 = vunpack.c.l.b16 %v212
    %v860 = vunpack.c.h.b16 %v212
    %v861 = vunpack.c.l.b16 %v213
    %v862 = vunpack.c.h.b16 %v213
    %v863 = vunpack.c.l.b16 %v214
    %v864 = vunpack.c.h.b16 %v214
    %v865 = vunpack.c.l.b16 %v215
    %v866 = vunpack.c.h.b16 %v215
    %v867 = vunpack.c.l.b16 %v216
    %v868 = vunpack.c.h.b16 %v216
    %v869 = vunpack.c.l.b16 %v217
    %v870 = vunpack.c.h.b16 %v217
    %v871 = vunpack.c.l.b16 %v218
    %v872 = vunpack.c.h.b16 %v218
    %v873 = vunpack.c.l.b16 %v219
    %v874 = vunpack.c.h.b16 %v219
    %v875 = vunpack.c.l.b16 %v220
    %v876 = vunpack.c.h.b16 %v220
    %v877 = vunpack.c.l.b16 %v221
    %v878 = vunpack.c.h.b16 %v221
    %v879 = vunpack.c.l.b16 %v222
    %v880 = vunpack.c.h.b16 %v222
    %v881 = vunpack.c.l.b16 %v223
    %v882 = vunpack.c.h.b16 %v223
    %v883 = vunpack.c.l.b16 %v224
    %v884 = vunpack.c.h.b16 %v224
    %v885 = vunpack.c.l.b16 %v225
    %v886 = vunpack.c.h.b16 %v225
    %v887 = vunpack.c.l.b16 %v226
    %v888 = vunpack.c.h.b16 %v226
    %v889 = vunpack.c.l.b16 %v227
    %v890 = vunpack.c.h.b16 %v227
    %v891 = vunpack.c.l.b16 %v228
    %v892 = vunpack.c.h.b16 %v228
    %v893 = vunpack.c.l.b16 %v229
    %v894 = vunpack.c.h.b16 %v229
    %v895 = vunpack.c.l.b16 %v230
    %v896 = vunpack.c.h.b16 %v230
    %v897 = vunpack.c.l.b16 %v231
    %v898 = vunpack.c.h.b16 %v231
    %v899 = vunpack.c.l.b16 %v232
    %v900 = vunpack.c.h.b16 %v232
    %v901 = vunpack.c.l.b16 %v233
    %v902 = vunpack.c.h.b16 %v233
    %v903 = vunpack.c.l.b16 %v234
    %v904 = vunpack.c.h.b16 %v234
    %v905 = vunpack.c.l.b16 %v235
    %v906 = vunpack.c.h.b16 %v235
    %v907 = vunpack.c.l.b16 %v236
    %v908 = vunpack.c.h.b16 %v236
    %v909 = vunpack.c.l.b16 %v237
    %v910 = vunpack.c.h.b16 %v237
    %v911 = vunpack.c.l.b16 %v238
    %v912 = vunpack.c.h.b16 %v238
    %v913 = vunpack.c.l.b16 %v239
    %v914 = vunpack.c.h.b16 %v239
    %v915 = vunpack.c.l.b16 %v240
    %v916 = vunpack.c.h.b16 %v240
    %v917 = vunpack.c.l.b16 %v241
    %v918 = vunpack.c.h.b16 %v241
    %v919 = vunpack.c.l.b16 %v242
    %v920 = vunpack.c.h.b16 %v242
    %v921 = vunpack.c.l.b16 %v243
    %v922 = vunpack.c.h.b16 %v243
    %v923 = vunpack.c.l.b16 %v244
    %v924 = vunpack.c.h.b16 %v244
    %v925 = vunpack.c.l.b16 %v245
    %v926 = vunpack.c.h.b16 %v245
    %v927 = vunpack.c.l.b16 %v246
    %v928 = vunpack.c.h.b16 %v246
    %v929 = vunpack.c.l.b16 %v247
    %v930 = vunpack.c.h.b16 %v247
    %v931 = vunpack.c.l.b16 %v248
    %v932 = vunpack.c.h.b16 %v248
    %v933 = vunpack.c.l.b16 %v249
    %v934 = vunpack.c.h.b16 %v249
    %v935 = vunpack.c.l.b16 %v250
    %v936 = vunpack.c.h.b16 %v250
    %v937 = vunpack.c.l.b16 %v251
    %v938 = vunpack.c.h.b16 %v251
    %v939 = vunpack.c.l.b16 %v252
    %v940 = vunpack.c.h.b16 %v252
    %v941 = vunpack.c.l.b16 %v253
    %v942 = vunpack.c.h.b16 %v253
    %v943 = vunpack.c.l.b16 %v254
    %v944 = vunpack.c.h.b16 %v254
    %v945 = vunpack.c.l.b16 %v255
    %v946 = vunpack.c.h.b16 %v255
    %v947 = vunpack.c.l.b16 %v256
    %v948 = vunpack.c.h.b16 %v256
    %v949 = vunpack.c.l.b16 %v257
    %v950 = vunpack.c.h.b16 %v257
    %v951 = vunpack.c.l.b16 %v258
    %v952 = vunpack.c.h.b16 %v258
    %v953 = vunpack.c.l.b16 %v259
    %v954 = vunpack.c.h.b16 %v259
    %v955 = vunpack.c.l.b16 %v260
    %v956 = vunpack.c.h.b16 %v260
    %v957 = vunpack.c.l.b16 %v261
    %v958 = vunpack.c.h.b16 %v261
    %v959 = vunpack.c.l.b16 %v262
    %v960 = vunpack.c.h.b16 %v262
    %v961 = vunpack.c.l.b16 %v263
    %v962 = vunpack.c.h.b16 %v263
    %v963 = vunpack.c.l.b16 %v264
    %v964 = vunpack.c.h.b16 %v264
    %v965 = vunpack.c.l.b16 %v265
    %v966 = vunpack.c.h.b16 %v265
    %v967 = vunpack.c.l.b16 %v266
    %v968 = vunpack.c.h.b16 %v266
    %v969 = vunpack.c.l.b16 %v267
    %v970 = vunpack.c.h.b16 %v267
    %v971 = vunpack.c.l.b16 %v268
    %v972 = vunpack.c.h.b16 %v268
    %v973 = vunpack.c.l.b16 %v269
    %v974 = vunpack.c.h.b16 %v269
    %v975 = vunpack.c.l.b16 %v270
    %v976 = vunpack.c.h.b16 %v270
    %v977 = vunpack.c.l.b16 %v271
    %v978 = vunpack.c.h.b16 %v271
    %v979 = vunpack.c.l.b16 %v272
    %v980 = vunpack.c.h.b16 %v272
    %v981 = vunpack.c.l.b16 %v273
    %v982 = vunpack.c.h.b16 %v273
    %v983 = vunpack.c.l.b16 %v274
    %v984 = vunpack.c.h.b16 %v274
    %v985 = vunpack.c.l.b16 %v275
    %v986 = vunpack.c.h.b16 %v275
    %v987 = vunpack.c.l.b16 %v276
    %v988 = vunpack.c.h.b16 %v276
    %v989 = vunpack.c.l.b16 %v277
    %v990 = vunpack.c.h.b16 %v277
    %v991 = vunpack.c.l.b16 %v278
    %v992 = vunpack.c.h.b16 %v278
    %v993 = vunpack.c.l.b16 %v279
    %v994 = vunpack.c.h.b16 %v279
    %v995 = vunpack.c.l.b16 %v280
    %v996 = vunpack.c.h.b16 %v280
    %v997 = vunpack.c.l.b16 %v281
    %v998 = vunpack.c.h.b16 %v281
    %v999 = vunpack.c.l.b16 %v282
    %v1000 = vunpack.c.h.b16 %v282
    %v1001 = vunpack.c.l.b16 %v283
    %v1002 = vunpack.c.h.b16 %v283
    %v1003 = vunpack.c.l.b16 %v284
    %v1004 = vunpack.c.h.b16 %v284
    %v1005 = vunpack.c.l.b16 %v285
    %v1006 = vunpack.c.h.b16 %v285
    %v1007 = vunpack.c.l.b16 %v286
    %v1008 = vunpack.c.h.b16 %v286
    %v1009 = vunpack.c.l.b16 %v287
    %v1010 = vunpack.c.h.b16 %v287
    %v1011 = vunpack.c.l.b16 %v288
    %v1012 = vunpack.c.h.b16 %v288
    %v1013 = vunpack.c.l.b16 %v289
    %v1014 = vunpack.c.h.b16 %v289
    %v1015 = vunpack.c.l.b16 %v290
    %v1016 = vunpack.c.h.b16 %v290
    %v1017 = vunpack.c.l.b16 %v291
    %v1018 = vunpack.c.h.b16 %v291
    %v1019 = vunpack.c.l.b16 %v292
    %v1020 = vunpack.c.h.b16 %v292
    %v1021 = vunpack.c.l.b16 %v293
    %v1022 = vunpack.c.h.b16 %v293
    %v1023 = vunpack.c.l.b16 %v294
    %v1024 = vunpack.c.h.b16 %v294
    %v1025 = vunpack.c.l.b16 %v295
    %v1026 = vunpack.c.h.b16 %v295
    %v1027 = vunpack.c.l.b16 %v296
    %v1028 = vunpack.c.h.b16 %v296
    %v1029 = vunpack.c.l.b16 %v297
    %v1030 = vunpack.c.h.b16 %v297
    %v1031 = vunpack.c.l.b16 %v298
    %v1032 = vunpack.c.h.b16 %v298
    %v1033 = vunpack.c.l.b16 %v299
    %v1034 = vunpack.c.h.b16 %v299
    %v1035 = vunpack.c.l.b16 %v300
    %v1036 = vunpack.c.h.b16 %v300
    %v1037 = vunpack.c.l.b16 %v301
    %v1038 = vunpack.c.h.b16 %v301
    %v1039 = vunpack.c.l.b16 %v302
    %v1040 = vunpack.c.h.b16 %v302
    %v1041 = vunpack.c.l.b16 %v303
    %v1042 = vunpack.c.h.b16 %v303
    %v1043 = vunpack.c.l.b16 %v304
    %v1044 = vunpack.c.h.b16 %v304
    %v1045 = vunpack.c.l.b16 %v305
    %v1046 = vunpack.c.h.b16 %v305
    %v1047 = vunpack.c.l.b16 %v306
    %v1048 = vunpack.c.h.b16 %v306
    %v1049 = vunpack.c.l.b16 %v307
    %v1050 = vunpack.c.h.b16 %v307
    %v1051 = vunpack.c.l.b16 %v308
    %v1052 = vunpack.c.h.b16 %v308
    %v1053 = vunpack.c.l.b16 %v309
    %v1054 = vunpack.c.h.b16 %v309
    %v1055 = vunpack.c.l.b16 %v310
    %v1056 = vunpack.c.h.b16 %v310
    %v1057 = vunpack.c.l.b16 %v311
    %v1058 = vunpack.c.h.b16 %v311
    %v1059 = vunpack.c.l.b16 %v312
    %v1060 = vunpack.c.h.b16 %v312
    %v1061 = vunpack.c.l.b16 %v313
    %v1062 = vunpack.c.h.b16 %v313
    %v1063 = vunpack.c.l.b16 %v314
    %v1064 = vunpack.c.h.b16 %v314
    %v1065 = vunpack.c.l.b16 %v315
    %v1066 = vunpack.c.h.b16 %v315
    %v1067 = vunpack.c.l.b16 %v316
    %v1068 = vunpack.c.h.b16 %v316
    %v1069 = vunpack.c.l.b16 %v317
    %v1070 = vunpack.c.h.b16 %v317
    %v1071 = vunpack.c.l.b16 %v318
    %v1072 = vunpack.c.h.b16 %v318
    %v1073 = vunpack.c.l.b16 %v319
    %v1074 = vunpack.c.h.b16 %v319
    %v1075 = vunpack.c.l.b16 %v320
    %v1076 = vunpack.c.h.b16 %v320
    %v1077 = vunpack.c.l.b16 %v321
    %v1078 = vunpack.c.h.b16 %v321
    %v1079 = vunpack.c.l.b16 %v322
    %v1080 = vunpack.c.h.b16 %v322
    %v1081 = vunpack.c.l.b16 %v323
    %v1082 = vunpack.c.h.b16 %v323
    %v1083 = vunpack.c.l.b16 %v324
    %v1084 = vunpack.c.h.b16 %v324
    %v1085 = vunpack.c.l.b16 %v325
    %v1086 = vunpack.c.h.b16 %v325
    %v1087 = vunpack.c.l.b16 %v326
    %v1088 = vunpack.c.h.b16 %v326
    %v1089 = vunpack.c.l.b16 %v327
    %v1090 = vunpack.c.h.b16 %v327
    %v1091 = vunpack.c.l.b16 %v328
    %v1092 = vunpack.c.h.b16 %v328
    %v1093 = vunpack.c.l.b16 %v329
    %v1094 = vunpack.c.h.b16 %v329
    %v1095 = vunpack.c.l.b16 %v330
    %v1096 = vunpack.c.h.b16 %v330
    %v1097 = vunpack.c.l.b16 %v331
    %v1098 = vunpack.c.h.b16 %v331
    %v1099 = vunpack.c.l.b16 %v332
    %v1100 = vunpack.c.h.b16 %v332
    %v1101 = vunpack.c.l.b16 %v333
    %v1102 = vunpack.c.h.b16 %v333
    %v1103 = vunpack.c.l.b16 %v334
    %v1104 = vunpack.c.h.b16 %v334
    %v1105 = vunpack.c.l.b16 %v335
    %v1106 = vunpack.c.h.b16 %v335
    %v1107 = vunpack.c.l.b16 %v336
    %v1108 = vunpack.c.h.b16 %v336
    %v1109 = vunpack.c.l.b16 %v337
    %v1110 = vunpack.c.h.b16 %v337
    %v1111 = vunpack.c.l.b16 %v338
    %v1112 = vunpack.c.h.b16 %v338
    %v1113 = vunpack.c.l.b16 %v339
    %v1114 = vunpack.c.h.b16 %v339
    %v1115 = vunpack.c.l.b16 %v340
    %v1116 = vunpack.c.h.b16 %v340
    %v1117 = vunpack.c.l.b16 %v341
    %v1118 = vunpack.c.h.b16 %v341
    %v1119 = vunpack.c.l.b16 %v342
    %v1120 = vunpack.c.h.b16 %v342
    %v1121 = vunpack.c.l.b16 %v343
    %v1122 = vunpack.c.h.b16 %v343
    %v1123 = vunpack.c.l.b16 %v344
    %v1124 = vunpack.c.h.b16 %v344
    %v1125 = vunpack.c.l.b16 %v345
    %v1126 = vunpack.c.h.b16 %v345
    %v1127 = vunpack.c.l.b16 %v346
    %v1128 = vunpack.c.h.b16 %v346
    %v1129 = vunpack.c.l.b16 %v347
    %v1130 = vunpack.c.h.b16 %v347
    %v1131 = vunpack.c.l.b16 %v348
    %v1132 = vunpack.c.h.b16 %v348
    %v1133 = vunpack.c.l.b16 %v349
    %v1134 = vunpack.c.h.b16 %v349
    %v1135 = vunpack.c.l.b16 %v350
    %v1136 = vunpack.c.h.b16 %v350
    %v1137 = vunpack.c.l.b16 %v351
    %v1138 = vunpack.c.h.b16 %v351
    %v1139 = vunpack.c.l.b16 %v352
    %v1140 = vunpack.c.h.b16 %v352
    %v1141 = vunpack.c.l.b16 %v353
    %v1142 = vunpack.c.h.b16 %v353
    %v1143 = vunpack.c.l.b16 %v354
    %v1144 = vunpack.c.h.b16 %v354
    %v1145 = vpack.c.b16 %v637, %v633
    %v1146 = vpack.c.b16 %v638, %v634
    %v1147 = vpack.c.b16 %v639, %v635
    %v1148 = vpack.c.b16 %v640, %v636
    %v1149 = vpack.c.b16 %v645, %v641
    %v1150 = vpack.c.b16 %v646, %v642
    %v1151 = vpack.c.b16 %v647, %v643
    %v1152 = vpack.c.b16 %v648, %v644
    %v1153 = vpack.c.b16 %v653, %v649
    %v1154 = vpack.c.b16 %v654, %v650
    %v1155 = vpack.c.b16 %v655, %v651
    %v1156 = vpack.c.b16 %v656, %v652
    %v1157 = vpack.c.b16 %v661, %v657
    %v1158 = vpack.c.b16 %v662, %v658
    %v1159 = vpack.c.b16 %v663, %v659
    %v1160 = vpack.c.b16 %v664, %v660
    %v1161 = vpack.c.b16 %v669, %v665
    %v1162 = vpack.c.b16 %v670, %v666
    %v1163 = vpack.c.b16 %v671, %v667
    %v1164 = vpack.c.b16 %v672, %v668
    %v1165 = vpack.c.b16 %v677, %v673
    %v1166 = vpack.c.b16 %v678, %v674
    %v1167 = vpack.c.b16 %v679, %v675
    %v1168 = vpack.c.b16 %v680, %v676
    %v1169 = vpack.c.b16 %v685, %v681
    %v1170 = vpack.c.b16 %v686, %v682
    %v1171 = vpack.c.b16 %v687, %v683
    %v1172 = vpack.c.b16 %v688, %v684
    %v1173 = vpack.c.b16 %v693, %v689
    %v1174 = vpack.c.b16 %v694, %v690
    %v1175 = vpack.c.b16 %v695, %v691
    %v1176 = vpack.c.b16 %v696, %v692
    %v1177 = vpack.c.b16 %v701, %v697
    %v1178 = vpack.c.b16 %v702, %v698
    %v1179 = vpack.c.b16 %v703, %v699
    %v1180 = vpack.c.b16 %v704, %v700
    %v1181 = vpack.c.b16 %v709, %v705
    %v1182 = vpack.c.b16 %v710, %v706
    %v1183 = vpack.c.b16 %v711, %v707
    %v1184 = vpack.c.b16 %v712, %v708
    %v1185 = vpack.c.b16 %v717, %v713
    %v1186 = vpack.c.b16 %v718, %v714
    %v1187 = vpack.c.b16 %v719, %v715
    %v1188 = vpack.c.b16 %v720, %v716
    %v1189 = vpack.c.b16 %v725, %v721
    %v1190 = vpack.c.b16 %v726, %v722
    %v1191 = vpack.c.b16 %v727, %v723
    %v1192 = vpack.c.b16 %v728, %v724
    %v1193 = vpack.c.b16 %v733, %v729
    %v1194 = vpack.c.b16 %v734, %v730
    %v1195 = vpack.c.b16 %v735, %v731
    %v1196 = vpack.c.b16 %v736, %v732
    %v1197 = vpack.c.b16 %v741, %v737
    %v1198 = vpack.c.b16 %v742, %v738
    %v1199 = vpack.c.b16 %v743, %v739
    %v1200 = vpack.c.b16 %v744, %v740
    %v1201 = vpack.c.b16 %v749, %v745
    %v1202 = vpack.c.b16 %v750, %v746
    %v1203 = vpack.c.b16 %v751, %v747
    %v1204 = vpack.c.b16 %v752, %v748
    %v1205 = vpack.c.b16 %v757, %v753
    %v1206 = vpack.c.b16 %v758, %v754
    %v1207 = vpack.c.b16 %v759, %v755
    %v1208 = vpack.c.b16 %v760, %v756
    %v1209 = vpack.c.b16 %v765, %v761
    %v1210 = vpack.c.b16 %v766, %v762
    %v1211 = vpack.c.b16 %v767, %v763
    %v1212 = vpack.c.b16 %v768, %v764
    %v1213 = vpack.c.b16 %v773, %v769
    %v1214 = vpack.c.b16 %v774, %v770
    %v1215 = vpack.c.b16 %v775, %v771
    %v1216 = vpack.c.b16 %v776, %v772
    %v1217 = vpack.c.b16 %v781, %v777
    %v1218 = vpack.c.b16 %v782, %v778
    %v1219 = vpack.c.b16 %v783, %v779
    %v1220 = vpack.c.b16 %v784, %v780
    %v1221 = vpack.c.b16 %v789, %v785
    %v1222 = vpack.c.b16 %v790, %v786
    %v1223 = vpack.c.b16 %v791, %v787
    %v1224 = vpack.c.b16 %v792, %v788
    %v1225 = vpack.c.b16 %v797, %v793
    %v1226 = vpack.c.b16 %v798, %v794
    %v1227 = vpack.c.b16 %v799, %v795
    %v1228 = vpack.c.b16 %v800, %v796
    %v1229 = vpack.c.b16 %v805, %v801
    %v1230 = vpack.c.b16 %v806, %v802
    %v1231 = vpack.c.b16 %v807, %v803
    %v1232 = vpack.c.b16 %v808, %v804
    %v1233 = vpack.c.b16 %v813, %v809
    %v1234 = vpack.c.b16 %v814, %v810
    %v1235 = vpack.c.b16 %v815, %v811
    %v1236 = vpack.c.b16 %v816, %v812
    %v1237 = vpack.c.b16 %v821, %v817
    %v1238 = vpack.c.b16 %v822, %v818
    %v1239 = vpack.c.b16 %v823, %v819
    %v1240 = vpack.c.b16 %v824, %v820
    %v1241 = vpack.c.b16 %v829, %v825
    %v1242 = vpack.c.b16 %v830, %v826
    %v1243 = vpack.c.b16 %v831, %v827
    %v1244 = vpack.c.b16 %v832, %v828
    %v1245 = vpack.c.b16 %v837, %v833
    %v1246 = vpack.c.b16 %v838, %v834
    %v1247 = vpack.c.b16 %v839, %v835
    %v1248 = vpack.c.b16 %v840, %v836
    %v1249 = vpack.c.b16 %v845, %v841
    %v1250 = vpack.c.b16 %v846, %v842
    %v1251 = vpack.c.b16 %v847, %v843
    %v1252 = vpack.c.b16 %v848, %v844
    %v1253 = vpack.c.b16 %v853, %v849
    %v1254 = vpack.c.b16 %v854, %v850
    %v1255 = vpack.c.b16 %v855, %v851
    %v1256 = vpack.c.b16 %v856, %v852
    %v1257 = vpack.c.b16 %v861, %v857
    %v1258 = vpack.c.b16 %v862, %v858
    %v1259 = vpack.c.b16 %v863, %v859
    %v1260 = vpack.c.b16 %v864, %v860
    %v1261 = vpack.c.b16 %v869, %v865
    %v1262 = vpack.c.b16 %v870, %v866
    %v1263 = vpack.c.b16 %v871, %v867
    %v1264 = vpack.c.b16 %v872, %v868
    %v1265 = vpack.c.b16 %v877, %v873
    %v1266 = vpack.c.b16 %v878, %v874
    %v1267 = vpack.c.b16 %v879, %v875
    %v1268 = vpack.c.b16 %v880, %v876
    %v1269 = vpack.c.b16 %v885, %v881
    %v1270 = vpack.c.b16 %v886, %v882
    %v1271 = vpack.c.b16 %v887, %v883
    %v1272 = vpack.c.b16 %v888, %v884
    %v1273 = vpack.c.b16 %v893, %v889
    %v1274 = vpack.c.b16 %v894, %v890
    %v1275 = vpack.c.b16 %v895, %v891
    %v1276 = vpack.c.b16 %v896, %v892
    %v1277 = vpack.c.b16 %v901, %v897
    %v1278 = vpack.c.b16 %v902, %v898
    %v1279 = vpack.c.b16 %v903, %v899
    %v1280 = vpack.c.b16 %v904, %v900
    %v1281 = vpack.c.b16 %v909, %v905
    %v1282 = vpack.c.b16 %v910, %v906
    %v1283 = vpack.c.b16 %v911, %v907
    %v1284 = vpack.c.b16 %v912, %v908
    %v1285 = vpack.c.b16 %v917, %v913
    %v1286 = vpack.c.b16 %v918, %v914
    %v1287 = vpack.c.b16 %v919, %v915
    %v1288 = vpack.c.b16 %v920, %v916
    %v1289 = vpack.c.b16 %v925, %v921
    %v1290 = vpack.c.b16 %v926, %v922
    %v1291 = vpack.c.b16 %v927, %v923
    %v1292 = vpack.c.b16 %v928, %v924
    %v1293 = vpack.c.b16 %v933, %v929
    %v1294 = vpack.c.b16 %v934, %v930
    %v1295 = vpack.c.b16 %v935, %v931
    %v1296 = vpack.c.b16 %v936, %v932
    %v1297 = vpack.c.b16 %v941, %v937
    %v1298 = vpack.c.b16 %v942, %v938
    %v1299 = vpack.c.b16 %v943, %v939
    %v1300 = vpack.c.b16 %v944, %v940
    %v1301 = vpack.c.b16 %v949, %v945
    %v1302 = vpack.c.b16 %v950, %v946
    %v1303 = vpack.c.b16 %v951, %v947
    %v1304 = vpack.c.b16 %v952, %v948
    %v1305 = vpack.c.b16 %v957, %v953
    %v1306 = vpack.c.b16 %v958, %v954
    %v1307 = vpack.c.b16 %v959, %v955
    %v1308 = vpack.c.b16 %v960, %v956
    %v1309 = vpack.c.b16 %v965, %v961
    %v1310 = vpack.c.b16 %v966, %v962
    %v1311 = vpack.c.b16 %v967, %v963
    %v1312 = vpack.c.b16 %v968, %v964
    %v1313 = vpack.c.b16 %v973, %v969
    %v1314 = vpack.c.b16 %v974, %v970
    %v1315 = vpack.c.b16 %v975, %v971
    %v1316 = vpack.c.b16 %v976, %v972
    %v1317 = vpack.c.b16 %v981, %v977
    %v1318 = vpack.c.b16 %v982, %v978
    %v1319 = vpack.c.b16 %v983, %v979
    %v1320 = vpack.c.b16 %v984, %v980
    %v1321 = vpack.c.b16 %v989, %v985
    %v1322 = vpack.c.b16 %v990, %v986
    %v1323 = vpack.c.b16 %v991, %v987
    %v1324 = vpack.c.b16 %v992, %v988
    %v1325 = vpack.c.b16 %v997, %v993
    %v1326 = vpack.c.b16 %v998, %v994
    %v1327 = vpack.c.b16 %v999, %v995
    %v1328 = vpack.c.b16 %v1000, %v996
    %v1329 = vpack.c.b16 %v1005, %v1001
    %v1330 = vpack.c.b16 %v1006, %v1002
    %v1331 = vpack.c.b16 %v1007, %v1003
    %v1332 = vpack.c.b16 %v1008, %v1004
    %v1333 = vpack.c.b16 %v1013, %v1009
    %v1334 = vpack.c.b16 %v1014, %v1010
    %v1335 = vpack.c.b16 %v1015, %v1011
    %v1336 = vpack.c.b16 %v1016, %v1012
    %v1337 = vpack.c.b16 %v1021, %v1017
    %v1338 = vpack.c.b16 %v1022, %v1018
    %v1339 = vpack.c.b16 %v1023, %v1019
    %v1340 = vpack.c.b16 %v1024, %v1020
    %v1341 = vpack.c.b16 %v1029, %v1025
    %v1342 = vpack.c.b16 %v1030, %v1026
    %v1343 = vpack.c.b16 %v1031, %v1027
    %v1344 = vpack.c.b16 %v1032, %v1028
    %v1345 = vpack.c.b16 %v1037, %v1033
    %v1346 = vpack.c.b16 %v1038, %v1034
    %v1347 = vpack.c.b16 %v1039, %v1035
    %v1348 = vpack.c.b16 %v1040, %v1036
    %v1349 = vpack.c.b16 %v1045, %v1041
    %v1350 = vpack.c.b16 %v1046, %v1042
    %v1351 = vpack.c.b16 %v1047, %v1043
    %v1352 = vpack.c.b16 %v1048, %v1044
    %v1353 = vpack.c.b16 %v1053, %v1049
    %v1354 = vpack.c.b16 %v1054, %v1050
    %v1355 = vpack.c.b16 %v1055, %v1051
    %v1356 = vpack.c.b16 %v1056, %v1052
    %v1357 = vpack.c.b16 %v1061, %v1057
    %v1358 = vpack.c.b16 %v1062, %v1058
    %v1359 = vpack.c.b16 %v1063, %v1059
    %v1360 = vpack.c.b16 %v1064, %v1060
    %v1361 = vpack.c.b16 %v1069, %v1065
    %v1362 = vpack.c.b16 %v1070, %v1066
    %v1363 = vpack.c.b16 %v1071, %v1067
    %v1364 = vpack.c.b16 %v1072, %v1068
    %v1365 = vpack.c.b16 %v1077, %v1073
    %v1366 = vpack.c.b16 %v1078, %v1074
    %v1367 = vpack.c.b16 %v1079, %v1075
    %v1368 = vpack.c.b16 %v1080, %v1076
    %v1369 = vpack.c.b16 %v1085, %v1081
    %v1370 = vpack.c.b16 %v1086, %v1082
    %v1371 = vpack.c.b16 %v1087, %v1083
    %v1372 = vpack.c.b16 %v1088, %v1084
    %v1373 = vpack.c.b16 %v1093, %v1089
    %v1374 = vpack.c.b16 %v1094, %v1090
    %v1375 = vpack.c.b16 %v1095, %v1091
    %v1376 = vpack.c.b16 %v1096, %v1092
    %v1377 = vpack.c.b16 %v1101, %v1097
    %v1378 = vpack.c.b16 %v1102, %v1098
    %v1379 = vpack.c.b16 %v1103, %v1099
    %v1380 = vpack.c.b16 %v1104, %v1100
    %v1381 = vpack.c.b16 %v1109, %v1105
    %v1382 = vpack.c.b16 %v1110, %v1106
    %v1383 = vpack.c.b16 %v1111, %v1107
    %v1384 = vpack.c.b16 %v1112, %v1108
    %v1385 = vpack.c.b16 %v1117, %v1113
    %v1386 = vpack.c.b16 %v1118, %v1114
    %v1387 = vpack.c.b16 %v1119, %v1115
    %v1388 = vpack.c.b16 %v1120, %v1116
    %v1389 = vpack.c.b16 %v1125, %v1121
    %v1390 = vpack.c.b16 %v1126, %v1122
    %v1391 = vpack.c.b16 %v1127, %v1123
    %v1392 = vpack.c.b16 %v1128, %v1124
    %v1393 = vpack.c.b16 %v1133, %v1129
    %v1394 = vpack.c.b16 %v1134, %v1130
    %v1395 = vpack.c.b16 %v1135, %v1131
    %v1396 = vpack.c.b16 %v1136, %v1132
    %v1397 = vpack.c.b16 %v1141, %v1137
    %v1398 = vpack.c.b16 %v1142, %v1138
    %v1399 = vpack.c.b16 %v1143, %v1139
    %v1400 = vpack.c.b16 %v1144, %v1140
    %1657 = vmatprep.subr.bf16.mxu0 %v1174
    %1658 = vmatpush1.bf16.msra.mxu0 %v1173
    %1659 = vmatprep.subr.bf16.mxu0 %v1170
    %1660 = vmatpush1.bf16.msra.mxu0 %v1169
    %1661 = vmatprep.subr.bf16.mxu0 %v1166
    %1662 = vmatpush1.bf16.msra.mxu0 %v1165
    %1663 = vmatprep.subr.bf16.mxu0 %v1162
    %1664 = vmatpush1.bf16.msra.mxu0 %v1161
    %1665 = vmatprep.subr.bf16.mxu0 %v1158
    %1666 = vmatpush1.bf16.msra.mxu0 %v1157
    %1667 = vmatprep.subr.bf16.mxu0 %v1154
    %1668 = vmatpush1.bf16.msra.mxu0 %v1153
    %1669 = vmatprep.subr.bf16.mxu0 %v1150
    %1670 = vmatpush1.bf16.msra.mxu0 %v1149
    %1671 = vmatprep.subr.bf16.mxu0 %v1146
    %1672 = vmatpush1.bf16.msra.mxu0 %v1145
    %1673 = vmatprep.subr.bf16.mxu0 %v1206
    %1674 = vmatpush2.bf16.msra.mxu0 %v1205
    %1675 = vmatprep.subr.bf16.mxu0 %v1202
    %1676 = vmatpush2.bf16.msra.mxu0 %v1201
    %1677 = vmatprep.subr.bf16.mxu0 %v1198
    %1678 = vmatpush2.bf16.msra.mxu0 %v1197
    %1679 = vmatprep.subr.bf16.mxu0 %v1194
    %1680 = vmatpush2.bf16.msra.mxu0 %v1193
    %1681 = vmatprep.subr.bf16.mxu0 %v1190
    %1682 = vmatpush2.bf16.msra.mxu0 %v1189
    %1683 = vmatprep.subr.bf16.mxu0 %v1186
    %1684 = vmatpush2.bf16.msra.mxu0 %v1185
    %1685 = vmatprep.subr.bf16.mxu0 %v1182
    %1686 = vmatpush2.bf16.msra.mxu0 %v1181
    %1687 = vmatprep.subr.bf16.mxu0 %v1178
    %1688 = vmatpush2.bf16.msra.mxu0 %v1177
    %1689 = vmatprep.mubr.bf16.mxu0 %v92
    %1690 = vmatmul.mubr.bf16.gmra.mxu0 %v91
    %v1691 = vpop.f32.mrf.mxu0
    %v1692 = vadd.f32 %v360, %v1691
    %v1693 = vpop.f32.mrf.mxu0
    %v1694 = vadd.f32 %v364, %v1693
    %v1695 = vpop.f32.mrf.mxu0
    %v1696 = vadd.f32 %v360, %v1695
    %v1697 = vpop.f32.mrf.mxu0
    %v1698 = vadd.f32 %v364, %v1697
    %1699 = vdwg.mxu0
    %1700 = vmatprep.subr.bf16.mxu0 %v1238
    %1701 = vmatpush1.bf16.msra.mxu0 %v1237
    %1702 = vmatprep.subr.bf16.mxu0 %v1234
    %1703 = vmatpush1.bf16.msra.mxu0 %v1233
    %1704 = vmatprep.subr.bf16.mxu0 %v1230
    %1705 = vmatpush1.bf16.msra.mxu0 %v1229
    %1706 = vmatprep.subr.bf16.mxu0 %v1226
    %1707 = vmatpush1.bf16.msra.mxu0 %v1225
    %1708 = vmatprep.subr.bf16.mxu0 %v1222
    %1709 = vmatpush1.bf16.msra.mxu0 %v1221
    %1710 = vmatprep.subr.bf16.mxu0 %v1218
    %1711 = vmatpush1.bf16.msra.mxu0 %v1217
    %1712 = vmatprep.subr.bf16.mxu0 %v1214
    %1713 = vmatpush1.bf16.msra.mxu0 %v1213
    %1714 = vmatprep.subr.bf16.mxu0 %v1210
    %1715 = vmatpush1.bf16.msra.mxu0 %v1209
    %1716 = vmatprep.subr.bf16.mxu0 %v1270
    %1717 = vmatpush2.bf16.msra.mxu0 %v1269
    %1718 = vmatprep.subr.bf16.mxu0 %v1266
    %1719 = vmatpush2.bf16.msra.mxu0 %v1265
    %1720 = vmatprep.subr.bf16.mxu0 %v1262
    %1721 = vmatpush2.bf16.msra.mxu0 %v1261
    %1722 = vmatprep.subr.bf16.mxu0 %v1258
    %1723 = vmatpush2.bf16.msra.mxu0 %v1257
    %1724 = vmatprep.subr.bf16.mxu0 %v1254
    %1725 = vmatpush2.bf16.msra.mxu0 %v1253
    %1726 = vmatprep.subr.bf16.mxu0 %v1250
    %1727 = vmatpush2.bf16.msra.mxu0 %v1249
    %1728 = vmatprep.subr.bf16.mxu0 %v1246
    %1729 = vmatpush2.bf16.msra.mxu0 %v1245
    %1730 = vmatprep.subr.bf16.mxu0 %v1242
    %1731 = vmatpush2.bf16.msra.mxu0 %v1241
    %1732 = vmatprep.mubr.bf16.mxu0 %v94
    %1733 = vmatmul.mubr.bf16.gmra.mxu0 %v93
    %v1734 = vpop.f32.mrf.mxu0
    %v1735 = vadd.f32 %v1692, %v1734
    %v1736 = vpop.f32.mrf.mxu0
    %v1737 = vadd.f32 %v1694, %v1736
    %v1738 = vpop.f32.mrf.mxu0
    %v1739 = vadd.f32 %v1696, %v1738
    %v1740 = vpop.f32.mrf.mxu0
    %v1741 = vadd.f32 %v1698, %v1740
    %1742 = vdwg.mxu0
    %1743 = vmatprep.subr.bf16.mxu0 %v1302
    %1744 = vmatpush1.bf16.msra.mxu0 %v1301
    %1745 = vmatprep.subr.bf16.mxu0 %v1298
    %1746 = vmatpush1.bf16.msra.mxu0 %v1297
    %1747 = vmatprep.subr.bf16.mxu0 %v1294
    %1748 = vmatpush1.bf16.msra.mxu0 %v1293
    %1749 = vmatprep.subr.bf16.mxu0 %v1290
    %1750 = vmatpush1.bf16.msra.mxu0 %v1289
    %1751 = vmatprep.subr.bf16.mxu0 %v1286
    %1752 = vmatpush1.bf16.msra.mxu0 %v1285
    %1753 = vmatprep.subr.bf16.mxu0 %v1282
    %1754 = vmatpush1.bf16.msra.mxu0 %v1281
    %1755 = vmatprep.subr.bf16.mxu0 %v1278
    %1756 = vmatpush1.bf16.msra.mxu0 %v1277
    %1757 = vmatprep.subr.bf16.mxu0 %v1274
    %1758 = vmatpush1.bf16.msra.mxu0 %v1273
    %1759 = vmatprep.subr.bf16.mxu0 %v1334
    %1760 = vmatpush2.bf16.msra.mxu0 %v1333
    %1761 = vmatprep.subr.bf16.mxu0 %v1330
    %1762 = vmatpush2.bf16.msra.mxu0 %v1329
    %1763 = vmatprep.subr.bf16.mxu0 %v1326
    %1764 = vmatpush2.bf16.msra.mxu0 %v1325
    %1765 = vmatprep.subr.bf16.mxu0 %v1322
    %1766 = vmatpush2.bf16.msra.mxu0 %v1321
    %1767 = vmatprep.subr.bf16.mxu0 %v1318
    %1768 = vmatpush2.bf16.msra.mxu0 %v1317
    %1769 = vmatprep.subr.bf16.mxu0 %v1314
    %1770 = vmatpush2.bf16.msra.mxu0 %v1313
    %1771 = vmatprep.subr.bf16.mxu0 %v1310
    %1772 = vmatpush2.bf16.msra.mxu0 %v1309
    %1773 = vmatprep.subr.bf16.mxu0 %v1306
    %1774 = vmatpush2.bf16.msra.mxu0 %v1305
    %1775 = vmatprep.mubr.bf16.mxu0 %v96
    %1776 = vmatmul.mubr.bf16.gmra.mxu0 %v95
    %v1777 = vpop.f32.mrf.mxu0
    %v1778 = vadd.f32 %v1735, %v1777
    %v1779 = vpop.f32.mrf.mxu0
    %v1780 = vadd.f32 %v1737, %v1779
    %v1781 = vpop.f32.mrf.mxu0
    %v1782 = vadd.f32 %v1739, %v1781
    %v1783 = vpop.f32.mrf.mxu0
    %v1784 = vadd.f32 %v1741, %v1783
    %1785 = vdwg.mxu0
    %1786 = vmatprep.subr.bf16.mxu0 %v1366
    %1787 = vmatpush1.bf16.msra.mxu0 %v1365
    %1788 = vmatprep.subr.bf16.mxu0 %v1362
    %1789 = vmatpush1.bf16.msra.mxu0 %v1361
    %1790 = vmatprep.subr.bf16.mxu0 %v1358
    %1791 = vmatpush1.bf16.msra.mxu0 %v1357
    %1792 = vmatprep.subr.bf16.mxu0 %v1354
    %1793 = vmatpush1.bf16.msra.mxu0 %v1353
    %1794 = vmatprep.subr.bf16.mxu0 %v1350
    %1795 = vmatpush1.bf16.msra.mxu0 %v1349
    %1796 = vmatprep.subr.bf16.mxu0 %v1346
    %1797 = vmatpush1.bf16.msra.mxu0 %v1345
    %1798 = vmatprep.subr.bf16.mxu0 %v1342
    %1799 = vmatpush1.bf16.msra.mxu0 %v1341
    %1800 = vmatprep.subr.bf16.mxu0 %v1338
    %1801 = vmatpush1.bf16.msra.mxu0 %v1337
    %1802 = vmatprep.subr.bf16.mxu0 %v1398
    %1803 = vmatpush2.bf16.msra.mxu0 %v1397
    %1804 = vmatprep.subr.bf16.mxu0 %v1394
    %1805 = vmatpush2.bf16.msra.mxu0 %v1393
    %1806 = vmatprep.subr.bf16.mxu0 %v1390
    %1807 = vmatpush2.bf16.msra.mxu0 %v1389
    %1808 = vmatprep.subr.bf16.mxu0 %v1386
    %1809 = vmatpush2.bf16.msra.mxu0 %v1385
    %1810 = vmatprep.subr.bf16.mxu0 %v1382
    %1811 = vmatpush2.bf16.msra.mxu0 %v1381
    %1812 = vmatprep.subr.bf16.mxu0 %v1378
    %1813 = vmatpush2.bf16.msra.mxu0 %v1377
    %1814 = vmatprep.subr.bf16.mxu0 %v1374
    %1815 = vmatpush2.bf16.msra.mxu0 %v1373
    %1816 = vmatprep.subr.bf16.mxu0 %v1370
    %1817 = vmatpush2.bf16.msra.mxu0 %v1369
    %1818 = vmatprep.mubr.bf16.mxu0 %v98
    %1819 = vmatmul.mubr.bf16.gmra.mxu0 %v97
    %v1820 = vpop.f32.mrf.mxu0
    %v1821 = vadd.f32 %v1778, %v1820
    %v1822 = vpop.f32.mrf.mxu0
    %v1823 = vadd.f32 %v1780, %v1822
    %v1824 = vpop.f32.mrf.mxu0
    %v1825 = vadd.f32 %v1782, %v1824
    %v1826 = vpop.f32.mrf.mxu0
    %v1827 = vadd.f32 %v1784, %v1826
    %1828 = vdwg.mxu0
    %1829 = vmatprep.subr.bf16.mxu0 %v1176
    %1830 = vmatpush1.bf16.msra.mxu0 %v1175
    %1831 = vmatprep.subr.bf16.mxu0 %v1172
    %1832 = vmatpush1.bf16.msra.mxu0 %v1171
    %1833 = vmatprep.subr.bf16.mxu0 %v1168
    %1834 = vmatpush1.bf16.msra.mxu0 %v1167
    %1835 = vmatprep.subr.bf16.mxu0 %v1164
    %1836 = vmatpush1.bf16.msra.mxu0 %v1163
    %1837 = vmatprep.subr.bf16.mxu0 %v1160
    %1838 = vmatpush1.bf16.msra.mxu0 %v1159
    %1839 = vmatprep.subr.bf16.mxu0 %v1156
    %1840 = vmatpush1.bf16.msra.mxu0 %v1155
    %1841 = vmatprep.subr.bf16.mxu0 %v1152
    %1842 = vmatpush1.bf16.msra.mxu0 %v1151
    %1843 = vmatprep.subr.bf16.mxu0 %v1148
    %1844 = vmatpush1.bf16.msra.mxu0 %v1147
    %1845 = vmatprep.subr.bf16.mxu0 %v1208
    %1846 = vmatpush2.bf16.msra.mxu0 %v1207
    %1847 = vmatprep.subr.bf16.mxu0 %v1204
    %1848 = vmatpush2.bf16.msra.mxu0 %v1203
    %1849 = vmatprep.subr.bf16.mxu0 %v1200
    %1850 = vmatpush2.bf16.msra.mxu0 %v1199
    %1851 = vmatprep.subr.bf16.mxu0 %v1196
    %1852 = vmatpush2.bf16.msra.mxu0 %v1195
    %1853 = vmatprep.subr.bf16.mxu0 %v1192
    %1854 = vmatpush2.bf16.msra.mxu0 %v1191
    %1855 = vmatprep.subr.bf16.mxu0 %v1188
    %1856 = vmatpush2.bf16.msra.mxu0 %v1187
    %1857 = vmatprep.subr.bf16.mxu0 %v1184
    %1858 = vmatpush2.bf16.msra.mxu0 %v1183
    %1859 = vmatprep.subr.bf16.mxu0 %v1180
    %1860 = vmatpush2.bf16.msra.mxu0 %v1179
    %1861 = vmatprep.mubr.bf16.mxu0 %v92
    %1862 = vmatmul.mubr.bf16.gmra.mxu0 %v91
    %v1863 = vpop.f32.mrf.mxu0
    %v1864 = vadd.f32 %v368, %v1863
    %v1865 = vpop.f32.mrf.mxu0
    %v1866 = vadd.f32 %v372, %v1865
    %v1867 = vpop.f32.mrf.mxu0
    %v1868 = vadd.f32 %v368, %v1867
    %v1869 = vpop.f32.mrf.mxu0
    %v1870 = vadd.f32 %v372, %v1869
    %1871 = vdwg.mxu0
    %1872 = vmatprep.subr.bf16.mxu0 %v1240
    %1873 = vmatpush1.bf16.msra.mxu0 %v1239
    %1874 = vmatprep.subr.bf16.mxu0 %v1236
    %1875 = vmatpush1.bf16.msra.mxu0 %v1235
    %1876 = vmatprep.subr.bf16.mxu0 %v1232
    %1877 = vmatpush1.bf16.msra.mxu0 %v1231
    %1878 = vmatprep.subr.bf16.mxu0 %v1228
    %1879 = vmatpush1.bf16.msra.mxu0 %v1227
    %1880 = vmatprep.subr.bf16.mxu0 %v1224
    %1881 = vmatpush1.bf16.msra.mxu0 %v1223
    %1882 = vmatprep.subr.bf16.mxu0 %v1220
    %1883 = vmatpush1.bf16.msra.mxu0 %v1219
    %1884 = vmatprep.subr.bf16.mxu0 %v1216
    %1885 = vmatpush1.bf16.msra.mxu0 %v1215
    %1886 = vmatprep.subr.bf16.mxu0 %v1212
    %1887 = vmatpush1.bf16.msra.mxu0 %v1211
    %1888 = vmatprep.subr.bf16.mxu0 %v1272
    %1889 = vmatpush2.bf16.msra.mxu0 %v1271
    %1890 = vmatprep.subr.bf16.mxu0 %v1268
    %1891 = vmatpush2.bf16.msra.mxu0 %v1267
    %1892 = vmatprep.subr.bf16.mxu0 %v1264
    %1893 = vmatpush2.bf16.msra.mxu0 %v1263
    %1894 = vmatprep.subr.bf16.mxu0 %v1260
    %1895 = vmatpush2.bf16.msra.mxu0 %v1259
    %1896 = vmatprep.subr.bf16.mxu0 %v1256
    %1897 = vmatpush2.bf16.msra.mxu0 %v1255
    %1898 = vmatprep.subr.bf16.mxu0 %v1252
    %1899 = vmatpush2.bf16.msra.mxu0 %v1251
    %1900 = vmatprep.subr.bf16.mxu0 %v1248
    %1901 = vmatpush2.bf16.msra.mxu0 %v1247
    %1902 = vmatprep.subr.bf16.mxu0 %v1244
    %1903 = vmatpush2.bf16.msra.mxu0 %v1243
    %1904 = vmatprep.mubr.bf16.mxu0 %v94
    %1905 = vmatmul.mubr.bf16.gmra.mxu0 %v93
    %v1906 = vpop.f32.mrf.mxu0
    %v1907 = vadd.f32 %v1864, %v1906
    %v1908 = vpop.f32.mrf.mxu0
    %v1909 = vadd.f32 %v1866, %v1908
    %v1910 = vpop.f32.mrf.mxu0
    %v1911 = vadd.f32 %v1868, %v1910
    %v1912 = vpop.f32.mrf.mxu0
    %v1913 = vadd.f32 %v1870, %v1912
    %1914 = vdwg.mxu0
    %1915 = vmatprep.subr.bf16.mxu0 %v1304
    %1916 = vmatpush1.bf16.msra.mxu0 %v1303
    %1917 = vmatprep.subr.bf16.mxu0 %v1300
    %1918 = vmatpush1.bf16.msra.mxu0 %v1299
    %1919 = vmatprep.subr.bf16.mxu0 %v1296
    %1920 = vmatpush1.bf16.msra.mxu0 %v1295
    %1921 = vmatprep.subr.bf16.mxu0 %v1292
    %1922 = vmatpush1.bf16.msra.mxu0 %v1291
    %1923 = vmatprep.subr.bf16.mxu0 %v1288
    %1924 = vmatpush1.bf16.msra.mxu0 %v1287
    %1925 = vmatprep.subr.bf16.mxu0 %v1284
    %1926 = vmatpush1.bf16.msra.mxu0 %v1283
    %1927 = vmatprep.subr.bf16.mxu0 %v1280
    %1928 = vmatpush1.bf16.msra.mxu0 %v1279
    %1929 = vmatprep.subr.bf16.mxu0 %v1276
    %1930 = vmatpush1.bf16.msra.mxu0 %v1275
    %1931 = vmatprep.subr.bf16.mxu0 %v1336
    %1932 = vmatpush2.bf16.msra.mxu0 %v1335
    %1933 = vmatprep.subr.bf16.mxu0 %v1332
    %1934 = vmatpush2.bf16.msra.mxu0 %v1331
    %1935 = vmatprep.subr.bf16.mxu0 %v1328
    %1936 = vmatpush2.bf16.msra.mxu0 %v1327
    %1937 = vmatprep.subr.bf16.mxu0 %v1324
    %1938 = vmatpush2.bf16.msra.mxu0 %v1323
    %1939 = vmatprep.subr.bf16.mxu0 %v1320
    %1940 = vmatpush2.bf16.msra.mxu0 %v1319
    %1941 = vmatprep.subr.bf16.mxu0 %v1316
    %1942 = vmatpush2.bf16.msra.mxu0 %v1315
    %1943 = vmatprep.subr.bf16.mxu0 %v1312
    %1944 = vmatpush2.bf16.msra.mxu0 %v1311
    %1945 = vmatprep.subr.bf16.mxu0 %v1308
    %1946 = vmatpush2.bf16.msra.mxu0 %v1307
    %1947 = vmatprep.mubr.bf16.mxu0 %v96
    %1948 = vmatmul.mubr.bf16.gmra.mxu0 %v95
    %v1949 = vpop.f32.mrf.mxu0
    %v1950 = vadd.f32 %v1907, %v1949
    %v1951 = vpop.f32.mrf.mxu0
    %v1952 = vadd.f32 %v1909, %v1951
    %v1953 = vpop.f32.mrf.mxu0
    %v1954 = vadd.f32 %v1911, %v1953
    %v1955 = vpop.f32.mrf.mxu0
    %v1956 = vadd.f32 %v1913, %v1955
    %1957 = vdwg.mxu0
    %1958 = vmatprep.subr.bf16.mxu0 %v1368
    %1959 = vmatpush1.bf16.msra.mxu0 %v1367
    %1960 = vmatprep.subr.bf16.mxu0 %v1364
    %1961 = vmatpush1.bf16.msra.mxu0 %v1363
    %1962 = vmatprep.subr.bf16.mxu0 %v1360
    %1963 = vmatpush1.bf16.msra.mxu0 %v1359
    %1964 = vmatprep.subr.bf16.mxu0 %v1356
    %1965 = vmatpush1.bf16.msra.mxu0 %v1355
    %1966 = vmatprep.subr.bf16.mxu0 %v1352
    %1967 = vmatpush1.bf16.msra.mxu0 %v1351
    %1968 = vmatprep.subr.bf16.mxu0 %v1348
    %1969 = vmatpush1.bf16.msra.mxu0 %v1347
    %1970 = vmatprep.subr.bf16.mxu0 %v1344
    %1971 = vmatpush1.bf16.msra.mxu0 %v1343
    %1972 = vmatprep.subr.bf16.mxu0 %v1340
    %1973 = vmatpush1.bf16.msra.mxu0 %v1339
    %1974 = vmatprep.subr.bf16.mxu0 %v1400
    %1975 = vmatpush2.bf16.msra.mxu0 %v1399
    %1976 = vmatprep.subr.bf16.mxu0 %v1396
    %1977 = vmatpush2.bf16.msra.mxu0 %v1395
    %1978 = vmatprep.subr.bf16.mxu0 %v1392
    %1979 = vmatpush2.bf16.msra.mxu0 %v1391
    %1980 = vmatprep.subr.bf16.mxu0 %v1388
    %1981 = vmatpush2.bf16.msra.mxu0 %v1387
    %1982 = vmatprep.subr.bf16.mxu0 %v1384
    %1983 = vmatpush2.bf16.msra.mxu0 %v1383
    %1984 = vmatprep.subr.bf16.mxu0 %v1380
    %1985 = vmatpush2.bf16.msra.mxu0 %v1379
    %1986 = vmatprep.subr.bf16.mxu0 %v1376
    %1987 = vmatpush2.bf16.msra.mxu0 %v1375
    %1988 = vmatprep.subr.bf16.mxu0 %v1372
    %1989 = vmatpush2.bf16.msra.mxu0 %v1371
    %1990 = vmatprep.mubr.bf16.mxu0 %v98
    %1991 = vmatmul.mubr.bf16.gmra.mxu0 %v97
    %v1992 = vpop.f32.mrf.mxu0
    %v1993 = vadd.f32 %v1950, %v1992
    %v1994 = vpop.f32.mrf.mxu0
    %v1995 = vadd.f32 %v1952, %v1994
    %v1996 = vpop.f32.mrf.mxu0
    %v1997 = vadd.f32 %v1954, %v1996
    %v1998 = vpop.f32.mrf.mxu0
    %v1999 = vadd.f32 %v1956, %v1998
    %2000 = vdwg.mxu0
    %v2001 = vmax.f32 %v1821, 0.0
    %v2002 = vmax.f32 %v1823, 0.0
    %v2003 = vmax.f32 %v1993, 0.0
    %v2004 = vmax.f32 %v1995, 0.0
    %v2005 = vmax.f32 %v1825, 0.0
    %v2006 = vmax.f32 %v1827, 0.0
    %v2007 = vmax.f32 %v1997, 0.0
    %v2008 = vmax.f32 %v1999, 0.0
    %v2009 = vpack.c.bf16 %v2005, %v2001
    %v2010 = vpack.c.bf16 %v2006, %v2002
    %v2011 = vpack.c.bf16 %v2007, %v2003
    %v2012 = vpack.c.bf16 %v2008, %v2004
    %v2013 = vld [vmem:[#allocation5] sm:$0xff]
    %v2014 = vld [vmem:[#allocation5 + $0x8] sm:$0xff]
    %v2015 = vld [vmem:[#allocation5 + $0x10] sm:$0xff]
    %v2016 = vld [vmem:[#allocation5 + $0x18] sm:$0xff]
    %v2017 = vld [vmem:[#allocation5 + $0x20] sm:$0xff]
    %v2018 = vld [vmem:[#allocation5 + $0x28] sm:$0xff]
    %v2019 = vld [vmem:[#allocation5 + $0x30] sm:$0xff]
    %v2020 = vld [vmem:[#allocation5 + $0x38] sm:$0xff]
    %v2021 = vld [vmem:[#allocation5 + $0x40] sm:$0xff]
    %v2022 = vld [vmem:[#allocation5 + $0x48] sm:$0xff]
    %v2023 = vld [vmem:[#allocation5 + $0x50] sm:$0xff]
    %v2024 = vld [vmem:[#allocation5 + $0x58] sm:$0xff]
    %v2025 = vld [vmem:[#allocation5 + $0x60] sm:$0xff]
    %v2026 = vld [vmem:[#allocation5 + $0x68] sm:$0xff]
    %v2027 = vld [vmem:[#allocation5 + $0x70] sm:$0xff]
    %v2028 = vld [vmem:[#allocation5 + $0x78] sm:$0xff]
    %v2029 = vld [vmem:[#allocation5 + $0x80] sm:$0xff]
    %v2030 = vld [vmem:[#allocation5 + $0x88] sm:$0xff]
    %v2031 = vld [vmem:[#allocation5 + $0x90] sm:$0xff]
    %v2032 = vld [vmem:[#allocation5 + $0x98] sm:$0xff]
    %v2033 = vld [vmem:[#allocation5 + $0xa0] sm:$0xff]
    %v2034 = vld [vmem:[#allocation5 + $0xa8] sm:$0xff]
    %v2035 = vld [vmem:[#allocation5 + $0xb0] sm:$0xff]
    %v2036 = vld [vmem:[#allocation5 + $0xb8] sm:$0xff]
    %v2037 = vld [vmem:[#allocation5 + $0xc0] sm:$0xff]
    %v2038 = vld [vmem:[#allocation5 + $0xc8] sm:$0xff]
    %v2039 = vld [vmem:[#allocation5 + $0xd0] sm:$0xff]
    %v2040 = vld [vmem:[#allocation5 + $0xd8] sm:$0xff]
    %v2041 = vld [vmem:[#allocation5 + $0xe0] sm:$0xff]
    %v2042 = vld [vmem:[#allocation5 + $0xe8] sm:$0xff]
    %v2043 = vld [vmem:[#allocation5 + $0xf0] sm:$0xff]
    %v2044 = vld [vmem:[#allocation5 + $0xf8] sm:$0xff]
    %v2045 = vld [vmem:[#allocation5 + $0x100] sm:$0xff]
    %v2046 = vld [vmem:[#allocation5 + $0x108] sm:$0xff]
    %v2047 = vld [vmem:[#allocation5 + $0x110] sm:$0xff]
    %v2048 = vld [vmem:[#allocation5 + $0x118] sm:$0xff]
    %v2049 = vld [vmem:[#allocation5 + $0x120] sm:$0xff]
    %v2050 = vld [vmem:[#allocation5 + $0x128] sm:$0xff]
    %v2051 = vld [vmem:[#allocation5 + $0x130] sm:$0xff]
    %v2052 = vld [vmem:[#allocation5 + $0x138] sm:$0xff]
    %v2053 = vld [vmem:[#allocation5 + $0x140] sm:$0xff]
    %v2054 = vld [vmem:[#allocation5 + $0x148] sm:$0xff]
    %v2055 = vld [vmem:[#allocation5 + $0x150] sm:$0xff]
    %v2056 = vld [vmem:[#allocation5 + $0x158] sm:$0xff]
    %v2057 = vld [vmem:[#allocation5 + $0x160] sm:$0xff]
    %v2058 = vld [vmem:[#allocation5 + $0x168] sm:$0xff]
    %v2059 = vld [vmem:[#allocation5 + $0x170] sm:$0xff]
    %v2060 = vld [vmem:[#allocation5 + $0x178] sm:$0xff]
    %v2061 = vld [vmem:[#allocation5 + $0x180] sm:$0xff]
    %v2062 = vld [vmem:[#allocation5 + $0x188] sm:$0xff]
    %v2063 = vld [vmem:[#allocation5 + $0x190] sm:$0xff]
    %v2064 = vld [vmem:[#allocation5 + $0x198] sm:$0xff]
    %v2065 = vld [vmem:[#allocation5 + $0x1a0] sm:$0xff]
    %v2066 = vld [vmem:[#allocation5 + $0x1a8] sm:$0xff]
    %v2067 = vld [vmem:[#allocation5 + $0x1b0] sm:$0xff]
    %v2068 = vld [vmem:[#allocation5 + $0x1b8] sm:$0xff]
    %v2069 = vld [vmem:[#allocation5 + $0x1c0] sm:$0xff]
    %v2070 = vld [vmem:[#allocation5 + $0x1c8] sm:$0xff]
    %v2071 = vld [vmem:[#allocation5 + $0x1d0] sm:$0xff]
    %v2072 = vld [vmem:[#allocation5 + $0x1d8] sm:$0xff]
    %v2073 = vld [vmem:[#allocation5 + $0x1e0] sm:$0xff]
    %v2074 = vld [vmem:[#allocation5 + $0x1e8] sm:$0xff]
    %v2075 = vld [vmem:[#allocation5 + $0x1f0] sm:$0xff]
    %v2076 = vld [vmem:[#allocation5 + $0x1f8] sm:$0xff]
    %v2077 = vld [vmem:[#allocation5 + $0x200] sm:$0xff]
    %v2078 = vld [vmem:[#allocation5 + $0x208] sm:$0xff]
    %v2079 = vld [vmem:[#allocation5 + $0x210] sm:$0xff]
    %v2080 = vld [vmem:[#allocation5 + $0x218] sm:$0xff]
    %v2081 = vld [vmem:[#allocation5 + $0x220] sm:$0xff]
    %v2082 = vld [vmem:[#allocation5 + $0x228] sm:$0xff]
    %v2083 = vld [vmem:[#allocation5 + $0x230] sm:$0xff]
    %v2084 = vld [vmem:[#allocation5 + $0x238] sm:$0xff]
    %v2085 = vld [vmem:[#allocation5 + $0x240] sm:$0xff]
    %v2086 = vld [vmem:[#allocation5 + $0x248] sm:$0xff]
    %v2087 = vld [vmem:[#allocation5 + $0x250] sm:$0xff]
    %v2088 = vld [vmem:[#allocation5 + $0x258] sm:$0xff]
    %v2089 = vld [vmem:[#allocation5 + $0x260] sm:$0xff]
    %v2090 = vld [vmem:[#allocation5 + $0x268] sm:$0xff]
    %v2091 = vld [vmem:[#allocation5 + $0x270] sm:$0xff]
    %v2092 = vld [vmem:[#allocation5 + $0x278] sm:$0xff]
    %v2093 = vld [vmem:[#allocation5 + $0x280] sm:$0xff]
    %v2094 = vld [vmem:[#allocation5 + $0x288] sm:$0xff]
    %v2095 = vld [vmem:[#allocation5 + $0x290] sm:$0xff]
    %v2096 = vld [vmem:[#allocation5 + $0x298] sm:$0xff]
    %v2097 = vld [vmem:[#allocation5 + $0x2a0] sm:$0xff]
    %v2098 = vld [vmem:[#allocation5 + $0x2a8] sm:$0xff]
    %v2099 = vld [vmem:[#allocation5 + $0x2b0] sm:$0xff]
    %v2100 = vld [vmem:[#allocation5 + $0x2b8] sm:$0xff]
    %v2101 = vld [vmem:[#allocation5 + $0x2c0] sm:$0xff]
    %v2102 = vld [vmem:[#allocation5 + $0x2c8] sm:$0xff]
    %v2103 = vld [vmem:[#allocation5 + $0x2d0] sm:$0xff]
    %v2104 = vld [vmem:[#allocation5 + $0x2d8] sm:$0xff]
    %v2105 = vld [vmem:[#allocation5 + $0x2e0] sm:$0xff]
    %v2106 = vld [vmem:[#allocation5 + $0x2e8] sm:$0xff]
    %v2107 = vld [vmem:[#allocation5 + $0x2f0] sm:$0xff]
    %v2108 = vld [vmem:[#allocation5 + $0x2f8] sm:$0xff]
    %v2109 = vld [vmem:[#allocation5 + $0x300] sm:$0xff]
    %v2110 = vld [vmem:[#allocation5 + $0x308] sm:$0xff]
    %v2111 = vld [vmem:[#allocation5 + $0x310] sm:$0xff]
    %v2112 = vld [vmem:[#allocation5 + $0x318] sm:$0xff]
    %v2113 = vld [vmem:[#allocation5 + $0x320] sm:$0xff]
    %v2114 = vld [vmem:[#allocation5 + $0x328] sm:$0xff]
    %v2115 = vld [vmem:[#allocation5 + $0x330] sm:$0xff]
    %v2116 = vld [vmem:[#allocation5 + $0x338] sm:$0xff]
    %v2117 = vld [vmem:[#allocation5 + $0x340] sm:$0xff]
    %v2118 = vld [vmem:[#allocation5 + $0x348] sm:$0xff]
    %v2119 = vld [vmem:[#allocation5 + $0x350] sm:$0xff]
    %v2120 = vld [vmem:[#allocation5 + $0x358] sm:$0xff]
    %v2121 = vld [vmem:[#allocation5 + $0x360] sm:$0xff]
    %v2122 = vld [vmem:[#allocation5 + $0x368] sm:$0xff]
    %v2123 = vld [vmem:[#allocation5 + $0x370] sm:$0xff]
    %v2124 = vld [vmem:[#allocation5 + $0x378] sm:$0xff]
    %v2125 = vld [vmem:[#allocation5 + $0x380] sm:$0xff]
    %v2126 = vld [vmem:[#allocation5 + $0x388] sm:$0xff]
    %v2127 = vld [vmem:[#allocation5 + $0x390] sm:$0xff]
    %v2128 = vld [vmem:[#allocation5 + $0x398] sm:$0xff]
    %v2129 = vld [vmem:[#allocation5 + $0x3a0] sm:$0xff]
    %v2130 = vld [vmem:[#allocation5 + $0x3a8] sm:$0xff]
    %v2131 = vld [vmem:[#allocation5 + $0x3b0] sm:$0xff]
    %v2132 = vld [vmem:[#allocation5 + $0x3b8] sm:$0xff]
    %v2133 = vld [vmem:[#allocation5 + $0x3c0] sm:$0xff]
    %v2134 = vld [vmem:[#allocation5 + $0x3c8] sm:$0xff]
    %v2135 = vld [vmem:[#allocation5 + $0x3d0] sm:$0xff]
    %v2136 = vld [vmem:[#allocation5 + $0x3d8] sm:$0xff]
    %v2137 = vld [vmem:[#allocation5 + $0x3e0] sm:$0xff]
    %v2138 = vld [vmem:[#allocation5 + $0x3e8] sm:$0xff]
    %v2139 = vld [vmem:[#allocation5 + $0x3f0] sm:$0xff]
    %v2140 = vld [vmem:[#allocation5 + $0x3f8] sm:$0xff]
    %v2141 = vld [vmem:[%s4] sm:$0xf]
    %v2143 = vlaneseq
    %v2144 = vshrl.u32 %v2143, 7
    %v2145 = vsub.s32 0, %v2144
    %v2146 = vrot.slane %v2141, %v2145
    %v2147 = vlaneseq
    %v2148 = vshrl.u32 %v2147, 7
    %v2149 = vsub.s32 1, %v2148
    %v2150 = vrot.slane %v2141, %v2149
    %v2151 = vlaneseq
    %v2152 = vshrl.u32 %v2151, 7
    %v2153 = vsub.s32 2, %v2152
    %v2154 = vrot.slane %v2141, %v2153
    %v2155 = vlaneseq
    %v2156 = vshrl.u32 %v2155, 7
    %v2157 = vsub.s32 3, %v2156
    %v2158 = vrot.slane %v2141, %v2157
    %v2291 = vunpack.c.l.b16 %v2013
    %v2292 = vunpack.c.h.b16 %v2013
    %v2293 = vunpack.c.l.b16 %v2014
    %v2294 = vunpack.c.h.b16 %v2014
    %v2295 = vunpack.c.l.b16 %v2015
    %v2296 = vunpack.c.h.b16 %v2015
    %v2297 = vunpack.c.l.b16 %v2016
    %v2298 = vunpack.c.h.b16 %v2016
    %v2299 = vunpack.c.l.b16 %v2017
    %v2300 = vunpack.c.h.b16 %v2017
    %v2301 = vunpack.c.l.b16 %v2018
    %v2302 = vunpack.c.h.b16 %v2018
    %v2303 = vunpack.c.l.b16 %v2019
    %v2304 = vunpack.c.h.b16 %v2019
    %v2305 = vunpack.c.l.b16 %v2020
    %v2306 = vunpack.c.h.b16 %v2020
    %v2307 = vunpack.c.l.b16 %v2021
    %v2308 = vunpack.c.h.b16 %v2021
    %v2309 = vunpack.c.l.b16 %v2022
    %v2310 = vunpack.c.h.b16 %v2022
    %v2311 = vunpack.c.l.b16 %v2023
    %v2312 = vunpack.c.h.b16 %v2023
    %v2313 = vunpack.c.l.b16 %v2024
    %v2314 = vunpack.c.h.b16 %v2024
    %v2315 = vunpack.c.l.b16 %v2025
    %v2316 = vunpack.c.h.b16 %v2025
    %v2317 = vunpack.c.l.b16 %v2026
    %v2318 = vunpack.c.h.b16 %v2026
    %v2319 = vunpack.c.l.b16 %v2027
    %v2320 = vunpack.c.h.b16 %v2027
    %v2321 = vunpack.c.l.b16 %v2028
    %v2322 = vunpack.c.h.b16 %v2028
    %v2323 = vunpack.c.l.b16 %v2029
    %v2324 = vunpack.c.h.b16 %v2029
    %v2325 = vunpack.c.l.b16 %v2030
    %v2326 = vunpack.c.h.b16 %v2030
    %v2327 = vunpack.c.l.b16 %v2031
    %v2328 = vunpack.c.h.b16 %v2031
    %v2329 = vunpack.c.l.b16 %v2032
    %v2330 = vunpack.c.h.b16 %v2032
    %v2331 = vunpack.c.l.b16 %v2033
    %v2332 = vunpack.c.h.b16 %v2033
    %v2333 = vunpack.c.l.b16 %v2034
    %v2334 = vunpack.c.h.b16 %v2034
    %v2335 = vunpack.c.l.b16 %v2035
    %v2336 = vunpack.c.h.b16 %v2035
    %v2337 = vunpack.c.l.b16 %v2036
    %v2338 = vunpack.c.h.b16 %v2036
    %v2339 = vunpack.c.l.b16 %v2037
    %v2340 = vunpack.c.h.b16 %v2037
    %v2341 = vunpack.c.l.b16 %v2038
    %v2342 = vunpack.c.h.b16 %v2038
    %v2343 = vunpack.c.l.b16 %v2039
    %v2344 = vunpack.c.h.b16 %v2039
    %v2345 = vunpack.c.l.b16 %v2040
    %v2346 = vunpack.c.h.b16 %v2040
    %v2347 = vunpack.c.l.b16 %v2041
    %v2348 = vunpack.c.h.b16 %v2041
    %v2349 = vunpack.c.l.b16 %v2042
    %v2350 = vunpack.c.h.b16 %v2042
    %v2351 = vunpack.c.l.b16 %v2043
    %v2352 = vunpack.c.h.b16 %v2043
    %v2353 = vunpack.c.l.b16 %v2044
    %v2354 = vunpack.c.h.b16 %v2044
    %v2355 = vunpack.c.l.b16 %v2045
    %v2356 = vunpack.c.h.b16 %v2045
    %v2357 = vunpack.c.l.b16 %v2046
    %v2358 = vunpack.c.h.b16 %v2046
    %v2359 = vunpack.c.l.b16 %v2047
    %v2360 = vunpack.c.h.b16 %v2047
    %v2361 = vunpack.c.l.b16 %v2048
    %v2362 = vunpack.c.h.b16 %v2048
    %v2363 = vunpack.c.l.b16 %v2049
    %v2364 = vunpack.c.h.b16 %v2049
    %v2365 = vunpack.c.l.b16 %v2050
    %v2366 = vunpack.c.h.b16 %v2050
    %v2367 = vunpack.c.l.b16 %v2051
    %v2368 = vunpack.c.h.b16 %v2051
    %v2369 = vunpack.c.l.b16 %v2052
    %v2370 = vunpack.c.h.b16 %v2052
    %v2371 = vunpack.c.l.b16 %v2053
    %v2372 = vunpack.c.h.b16 %v2053
    %v2373 = vunpack.c.l.b16 %v2054
    %v2374 = vunpack.c.h.b16 %v2054
    %v2375 = vunpack.c.l.b16 %v2055
    %v2376 = vunpack.c.h.b16 %v2055
    %v2377 = vunpack.c.l.b16 %v2056
    %v2378 = vunpack.c.h.b16 %v2056
    %v2379 = vunpack.c.l.b16 %v2057
    %v2380 = vunpack.c.h.b16 %v2057
    %v2381 = vunpack.c.l.b16 %v2058
    %v2382 = vunpack.c.h.b16 %v2058
    %v2383 = vunpack.c.l.b16 %v2059
    %v2384 = vunpack.c.h.b16 %v2059
    %v2385 = vunpack.c.l.b16 %v2060
    %v2386 = vunpack.c.h.b16 %v2060
    %v2387 = vunpack.c.l.b16 %v2061
    %v2388 = vunpack.c.h.b16 %v2061
    %v2389 = vunpack.c.l.b16 %v2062
    %v2390 = vunpack.c.h.b16 %v2062
    %v2391 = vunpack.c.l.b16 %v2063
    %v2392 = vunpack.c.h.b16 %v2063
    %v2393 = vunpack.c.l.b16 %v2064
    %v2394 = vunpack.c.h.b16 %v2064
    %v2395 = vunpack.c.l.b16 %v2065
    %v2396 = vunpack.c.h.b16 %v2065
    %v2397 = vunpack.c.l.b16 %v2066
    %v2398 = vunpack.c.h.b16 %v2066
    %v2399 = vunpack.c.l.b16 %v2067
    %v2400 = vunpack.c.h.b16 %v2067
    %v2401 = vunpack.c.l.b16 %v2068
    %v2402 = vunpack.c.h.b16 %v2068
    %v2403 = vunpack.c.l.b16 %v2069
    %v2404 = vunpack.c.h.b16 %v2069
    %v2405 = vunpack.c.l.b16 %v2070
    %v2406 = vunpack.c.h.b16 %v2070
    %v2407 = vunpack.c.l.b16 %v2071
    %v2408 = vunpack.c.h.b16 %v2071
    %v2409 = vunpack.c.l.b16 %v2072
    %v2410 = vunpack.c.h.b16 %v2072
    %v2411 = vunpack.c.l.b16 %v2073
    %v2412 = vunpack.c.h.b16 %v2073
    %v2413 = vunpack.c.l.b16 %v2074
    %v2414 = vunpack.c.h.b16 %v2074
    %v2415 = vunpack.c.l.b16 %v2075
    %v2416 = vunpack.c.h.b16 %v2075
    %v2417 = vunpack.c.l.b16 %v2076
    %v2418 = vunpack.c.h.b16 %v2076
    %v2419 = vunpack.c.l.b16 %v2077
    %v2420 = vunpack.c.h.b16 %v2077
    %v2421 = vunpack.c.l.b16 %v2078
    %v2422 = vunpack.c.h.b16 %v2078
    %v2423 = vunpack.c.l.b16 %v2079
    %v2424 = vunpack.c.h.b16 %v2079
    %v2425 = vunpack.c.l.b16 %v2080
    %v2426 = vunpack.c.h.b16 %v2080
    %v2427 = vunpack.c.l.b16 %v2081
    %v2428 = vunpack.c.h.b16 %v2081
    %v2429 = vunpack.c.l.b16 %v2082
    %v2430 = vunpack.c.h.b16 %v2082
    %v2431 = vunpack.c.l.b16 %v2083
    %v2432 = vunpack.c.h.b16 %v2083
    %v2433 = vunpack.c.l.b16 %v2084
    %v2434 = vunpack.c.h.b16 %v2084
    %v2435 = vunpack.c.l.b16 %v2085
    %v2436 = vunpack.c.h.b16 %v2085
    %v2437 = vunpack.c.l.b16 %v2086
    %v2438 = vunpack.c.h.b16 %v2086
    %v2439 = vunpack.c.l.b16 %v2087
    %v2440 = vunpack.c.h.b16 %v2087
    %v2441 = vunpack.c.l.b16 %v2088
    %v2442 = vunpack.c.h.b16 %v2088
    %v2443 = vunpack.c.l.b16 %v2089
    %v2444 = vunpack.c.h.b16 %v2089
    %v2445 = vunpack.c.l.b16 %v2090
    %v2446 = vunpack.c.h.b16 %v2090
    %v2447 = vunpack.c.l.b16 %v2091
    %v2448 = vunpack.c.h.b16 %v2091
    %v2449 = vunpack.c.l.b16 %v2092
    %v2450 = vunpack.c.h.b16 %v2092
    %v2451 = vunpack.c.l.b16 %v2093
    %v2452 = vunpack.c.h.b16 %v2093
    %v2453 = vunpack.c.l.b16 %v2094
    %v2454 = vunpack.c.h.b16 %v2094
    %v2455 = vunpack.c.l.b16 %v2095
    %v2456 = vunpack.c.h.b16 %v2095
    %v2457 = vunpack.c.l.b16 %v2096
    %v2458 = vunpack.c.h.b16 %v2096
    %v2459 = vunpack.c.l.b16 %v2097
    %v2460 = vunpack.c.h.b16 %v2097
    %v2461 = vunpack.c.l.b16 %v2098
    %v2462 = vunpack.c.h.b16 %v2098
    %v2463 = vunpack.c.l.b16 %v2099
    %v2464 = vunpack.c.h.b16 %v2099
    %v2465 = vunpack.c.l.b16 %v2100
    %v2466 = vunpack.c.h.b16 %v2100
    %v2467 = vunpack.c.l.b16 %v2101
    %v2468 = vunpack.c.h.b16 %v2101
    %v2469 = vunpack.c.l.b16 %v2102
    %v2470 = vunpack.c.h.b16 %v2102
    %v2471 = vunpack.c.l.b16 %v2103
    %v2472 = vunpack.c.h.b16 %v2103
    %v2473 = vunpack.c.l.b16 %v2104
    %v2474 = vunpack.c.h.b16 %v2104
    %v2475 = vunpack.c.l.b16 %v2105
    %v2476 = vunpack.c.h.b16 %v2105
    %v2477 = vunpack.c.l.b16 %v2106
    %v2478 = vunpack.c.h.b16 %v2106
    %v2479 = vunpack.c.l.b16 %v2107
    %v2480 = vunpack.c.h.b16 %v2107
    %v2481 = vunpack.c.l.b16 %v2108
    %v2482 = vunpack.c.h.b16 %v2108
    %v2483 = vunpack.c.l.b16 %v2109
    %v2484 = vunpack.c.h.b16 %v2109
    %v2485 = vunpack.c.l.b16 %v2110
    %v2486 = vunpack.c.h.b16 %v2110
    %v2487 = vunpack.c.l.b16 %v2111
    %v2488 = vunpack.c.h.b16 %v2111
    %v2489 = vunpack.c.l.b16 %v2112
    %v2490 = vunpack.c.h.b16 %v2112
    %v2491 = vunpack.c.l.b16 %v2113
    %v2492 = vunpack.c.h.b16 %v2113
    %v2493 = vunpack.c.l.b16 %v2114
    %v2494 = vunpack.c.h.b16 %v2114
    %v2495 = vunpack.c.l.b16 %v2115
    %v2496 = vunpack.c.h.b16 %v2115
    %v2497 = vunpack.c.l.b16 %v2116
    %v2498 = vunpack.c.h.b16 %v2116
    %v2499 = vunpack.c.l.b16 %v2117
    %v2500 = vunpack.c.h.b16 %v2117
    %v2501 = vunpack.c.l.b16 %v2118
    %v2502 = vunpack.c.h.b16 %v2118
    %v2503 = vunpack.c.l.b16 %v2119
    %v2504 = vunpack.c.h.b16 %v2119
    %v2505 = vunpack.c.l.b16 %v2120
    %v2506 = vunpack.c.h.b16 %v2120
    %v2507 = vunpack.c.l.b16 %v2121
    %v2508 = vunpack.c.h.b16 %v2121
    %v2509 = vunpack.c.l.b16 %v2122
    %v2510 = vunpack.c.h.b16 %v2122
    %v2511 = vunpack.c.l.b16 %v2123
    %v2512 = vunpack.c.h.b16 %v2123
    %v2513 = vunpack.c.l.b16 %v2124
    %v2514 = vunpack.c.h.b16 %v2124
    %v2515 = vunpack.c.l.b16 %v2125
    %v2516 = vunpack.c.h.b16 %v2125
    %v2517 = vunpack.c.l.b16 %v2126
    %v2518 = vunpack.c.h.b16 %v2126
    %v2519 = vunpack.c.l.b16 %v2127
    %v2520 = vunpack.c.h.b16 %v2127
    %v2521 = vunpack.c.l.b16 %v2128
    %v2522 = vunpack.c.h.b16 %v2128
    %v2523 = vunpack.c.l.b16 %v2129
    %v2524 = vunpack.c.h.b16 %v2129
    %v2525 = vunpack.c.l.b16 %v2130
    %v2526 = vunpack.c.h.b16 %v2130
    %v2527 = vunpack.c.l.b16 %v2131
    %v2528 = vunpack.c.h.b16 %v2131
    %v2529 = vunpack.c.l.b16 %v2132
    %v2530 = vunpack.c.h.b16 %v2132
    %v2531 = vunpack.c.l.b16 %v2133
    %v2532 = vunpack.c.h.b16 %v2133
    %v2533 = vunpack.c.l.b16 %v2134
    %v2534 = vunpack.c.h.b16 %v2134
    %v2535 = vunpack.c.l.b16 %v2135
    %v2536 = vunpack.c.h.b16 %v2135
    %v2537 = vunpack.c.l.b16 %v2136
    %v2538 = vunpack.c.h.b16 %v2136
    %v2539 = vunpack.c.l.b16 %v2137
    %v2540 = vunpack.c.h.b16 %v2137
    %v2541 = vunpack.c.l.b16 %v2138
    %v2542 = vunpack.c.h.b16 %v2138
    %v2543 = vunpack.c.l.b16 %v2139
    %v2544 = vunpack.c.h.b16 %v2139
    %v2545 = vunpack.c.l.b16 %v2140
    %v2546 = vunpack.c.h.b16 %v2140
    %v2547 = vpack.c.b16 %v2295, %v2291
    %v2548 = vpack.c.b16 %v2296, %v2292
    %v2549 = vpack.c.b16 %v2297, %v2293
    %v2550 = vpack.c.b16 %v2298, %v2294
    %v2551 = vpack.c.b16 %v2303, %v2299
    %v2552 = vpack.c.b16 %v2304, %v2300
    %v2553 = vpack.c.b16 %v2305, %v2301
    %v2554 = vpack.c.b16 %v2306, %v2302
    %v2555 = vpack.c.b16 %v2311, %v2307
    %v2556 = vpack.c.b16 %v2312, %v2308
    %v2557 = vpack.c.b16 %v2313, %v2309
    %v2558 = vpack.c.b16 %v2314, %v2310
    %v2559 = vpack.c.b16 %v2319, %v2315
    %v2560 = vpack.c.b16 %v2320, %v2316
    %v2561 = vpack.c.b16 %v2321, %v2317
    %v2562 = vpack.c.b16 %v2322, %v2318
    %v2563 = vpack.c.b16 %v2327, %v2323
    %v2564 = vpack.c.b16 %v2328, %v2324
    %v2565 = vpack.c.b16 %v2329, %v2325
    %v2566 = vpack.c.b16 %v2330, %v2326
    %v2567 = vpack.c.b16 %v2335, %v2331
    %v2568 = vpack.c.b16 %v2336, %v2332
    %v2569 = vpack.c.b16 %v2337, %v2333
    %v2570 = vpack.c.b16 %v2338, %v2334
    %v2571 = vpack.c.b16 %v2343, %v2339
    %v2572 = vpack.c.b16 %v2344, %v2340
    %v2573 = vpack.c.b16 %v2345, %v2341
    %v2574 = vpack.c.b16 %v2346, %v2342
    %v2575 = vpack.c.b16 %v2351, %v2347
    %v2576 = vpack.c.b16 %v2352, %v2348
    %v2577 = vpack.c.b16 %v2353, %v2349
    %v2578 = vpack.c.b16 %v2354, %v2350
    %v2579 = vpack.c.b16 %v2359, %v2355
    %v2580 = vpack.c.b16 %v2360, %v2356
    %v2581 = vpack.c.b16 %v2361, %v2357
    %v2582 = vpack.c.b16 %v2362, %v2358
    %v2583 = vpack.c.b16 %v2367, %v2363
    %v2584 = vpack.c.b16 %v2368, %v2364
    %v2585 = vpack.c.b16 %v2369, %v2365
    %v2586 = vpack.c.b16 %v2370, %v2366
    %v2587 = vpack.c.b16 %v2375, %v2371
    %v2588 = vpack.c.b16 %v2376, %v2372
    %v2589 = vpack.c.b16 %v2377, %v2373
    %v2590 = vpack.c.b16 %v2378, %v2374
    %v2591 = vpack.c.b16 %v2383, %v2379
    %v2592 = vpack.c.b16 %v2384, %v2380
    %v2593 = vpack.c.b16 %v2385, %v2381
    %v2594 = vpack.c.b16 %v2386, %v2382
    %v2595 = vpack.c.b16 %v2391, %v2387
    %v2596 = vpack.c.b16 %v2392, %v2388
    %v2597 = vpack.c.b16 %v2393, %v2389
    %v2598 = vpack.c.b16 %v2394, %v2390
    %v2599 = vpack.c.b16 %v2399, %v2395
    %v2600 = vpack.c.b16 %v2400, %v2396
    %v2601 = vpack.c.b16 %v2401, %v2397
    %v2602 = vpack.c.b16 %v2402, %v2398
    %v2603 = vpack.c.b16 %v2407, %v2403
    %v2604 = vpack.c.b16 %v2408, %v2404
    %v2605 = vpack.c.b16 %v2409, %v2405
    %v2606 = vpack.c.b16 %v2410, %v2406
    %v2607 = vpack.c.b16 %v2415, %v2411
    %v2608 = vpack.c.b16 %v2416, %v2412
    %v2609 = vpack.c.b16 %v2417, %v2413
    %v2610 = vpack.c.b16 %v2418, %v2414
    %v2611 = vpack.c.b16 %v2423, %v2419
    %v2612 = vpack.c.b16 %v2424, %v2420
    %v2613 = vpack.c.b16 %v2425, %v2421
    %v2614 = vpack.c.b16 %v2426, %v2422
    %v2615 = vpack.c.b16 %v2431, %v2427
    %v2616 = vpack.c.b16 %v2432, %v2428
    %v2617 = vpack.c.b16 %v2433, %v2429
    %v2618 = vpack.c.b16 %v2434, %v2430
    %v2619 = vpack.c.b16 %v2439, %v2435
    %v2620 = vpack.c.b16 %v2440, %v2436
    %v2621 = vpack.c.b16 %v2441, %v2437
    %v2622 = vpack.c.b16 %v2442, %v2438
    %v2623 = vpack.c.b16 %v2447, %v2443
    %v2624 = vpack.c.b16 %v2448, %v2444
    %v2625 = vpack.c.b16 %v2449, %v2445
    %v2626 = vpack.c.b16 %v2450, %v2446
    %v2627 = vpack.c.b16 %v2455, %v2451
    %v2628 = vpack.c.b16 %v2456, %v2452
    %v2629 = vpack.c.b16 %v2457, %v2453
    %v2630 = vpack.c.b16 %v2458, %v2454
    %v2631 = vpack.c.b16 %v2463, %v2459
    %v2632 = vpack.c.b16 %v2464, %v2460
    %v2633 = vpack.c.b16 %v2465, %v2461
    %v2634 = vpack.c.b16 %v2466, %v2462
    %v2635 = vpack.c.b16 %v2471, %v2467
    %v2636 = vpack.c.b16 %v2472, %v2468
    %v2637 = vpack.c.b16 %v2473, %v2469
    %v2638 = vpack.c.b16 %v2474, %v2470
    %v2639 = vpack.c.b16 %v2479, %v2475
    %v2640 = vpack.c.b16 %v2480, %v2476
    %v2641 = vpack.c.b16 %v2481, %v2477
    %v2642 = vpack.c.b16 %v2482, %v2478
    %v2643 = vpack.c.b16 %v2487, %v2483
    %v2644 = vpack.c.b16 %v2488, %v2484
    %v2645 = vpack.c.b16 %v2489, %v2485
    %v2646 = vpack.c.b16 %v2490, %v2486
    %v2647 = vpack.c.b16 %v2495, %v2491
    %v2648 = vpack.c.b16 %v2496, %v2492
    %v2649 = vpack.c.b16 %v2497, %v2493
    %v2650 = vpack.c.b16 %v2498, %v2494
    %v2651 = vpack.c.b16 %v2503, %v2499
    %v2652 = vpack.c.b16 %v2504, %v2500
    %v2653 = vpack.c.b16 %v2505, %v2501
    %v2654 = vpack.c.b16 %v2506, %v2502
    %v2655 = vpack.c.b16 %v2511, %v2507
    %v2656 = vpack.c.b16 %v2512, %v2508
    %v2657 = vpack.c.b16 %v2513, %v2509
    %v2658 = vpack.c.b16 %v2514, %v2510
    %v2659 = vpack.c.b16 %v2519, %v2515
    %v2660 = vpack.c.b16 %v2520, %v2516
    %v2661 = vpack.c.b16 %v2521, %v2517
    %v2662 = vpack.c.b16 %v2522, %v2518
    %v2663 = vpack.c.b16 %v2527, %v2523
    %v2664 = vpack.c.b16 %v2528, %v2524
    %v2665 = vpack.c.b16 %v2529, %v2525
    %v2666 = vpack.c.b16 %v2530, %v2526
    %v2667 = vpack.c.b16 %v2535, %v2531
    %v2668 = vpack.c.b16 %v2536, %v2532
    %v2669 = vpack.c.b16 %v2537, %v2533
    %v2670 = vpack.c.b16 %v2538, %v2534
    %v2671 = vpack.c.b16 %v2543, %v2539
    %v2672 = vpack.c.b16 %v2544, %v2540
    %v2673 = vpack.c.b16 %v2545, %v2541
    %v2674 = vpack.c.b16 %v2546, %v2542
    %2803 = vmatprep.subr.bf16.mxu0 %v2576
    %2804 = vmatpush1.bf16.msra.mxu0 %v2575
    %2805 = vmatprep.subr.bf16.mxu0 %v2572
    %2806 = vmatpush1.bf16.msra.mxu0 %v2571
    %2807 = vmatprep.subr.bf16.mxu0 %v2568
    %2808 = vmatpush1.bf16.msra.mxu0 %v2567
    %2809 = vmatprep.subr.bf16.mxu0 %v2564
    %2810 = vmatpush1.bf16.msra.mxu0 %v2563
    %2811 = vmatprep.subr.bf16.mxu0 %v2560
    %2812 = vmatpush1.bf16.msra.mxu0 %v2559
    %2813 = vmatprep.subr.bf16.mxu0 %v2556
    %2814 = vmatpush1.bf16.msra.mxu0 %v2555
    %2815 = vmatprep.subr.bf16.mxu0 %v2552
    %2816 = vmatpush1.bf16.msra.mxu0 %v2551
    %2817 = vmatprep.subr.bf16.mxu0 %v2548
    %2818 = vmatpush1.bf16.msra.mxu0 %v2547
    %2819 = vmatprep.subr.bf16.mxu0 %v2608
    %2820 = vmatpush2.bf16.msra.mxu0 %v2607
    %2821 = vmatprep.subr.bf16.mxu0 %v2604
    %2822 = vmatpush2.bf16.msra.mxu0 %v2603
    %2823 = vmatprep.subr.bf16.mxu0 %v2600
    %2824 = vmatpush2.bf16.msra.mxu0 %v2599
    %2825 = vmatprep.subr.bf16.mxu0 %v2596
    %2826 = vmatpush2.bf16.msra.mxu0 %v2595
    %2827 = vmatprep.subr.bf16.mxu0 %v2592
    %2828 = vmatpush2.bf16.msra.mxu0 %v2591
    %2829 = vmatprep.subr.bf16.mxu0 %v2588
    %2830 = vmatpush2.bf16.msra.mxu0 %v2587
    %2831 = vmatprep.subr.bf16.mxu0 %v2584
    %2832 = vmatpush2.bf16.msra.mxu0 %v2583
    %2833 = vmatprep.subr.bf16.mxu0 %v2580
    %2834 = vmatpush2.bf16.msra.mxu0 %v2579
    %2835 = vmatprep.mubr.bf16.mxu0 %v2010
    %2836 = vmatmul.mubr.bf16.gmra.mxu0 %v2009
    %v2837 = vpop.f32.mrf.mxu0
    %v2838 = vadd.f32 %v2146, %v2837
    %v2839 = vpop.f32.mrf.mxu0
    %v2840 = vadd.f32 %v2150, %v2839
    %v2841 = vpop.f32.mrf.mxu0
    %v2842 = vadd.f32 %v2146, %v2841
    %v2843 = vpop.f32.mrf.mxu0
    %v2844 = vadd.f32 %v2150, %v2843
    %2845 = vdwg.mxu0
    %2846 = vmatprep.subr.bf16.mxu0 %v2640
    %2847 = vmatpush1.bf16.msra.mxu0 %v2639
    %2848 = vmatprep.subr.bf16.mxu0 %v2636
    %2849 = vmatpush1.bf16.msra.mxu0 %v2635
    %2850 = vmatprep.subr.bf16.mxu0 %v2632
    %2851 = vmatpush1.bf16.msra.mxu0 %v2631
    %2852 = vmatprep.subr.bf16.mxu0 %v2628
    %2853 = vmatpush1.bf16.msra.mxu0 %v2627
    %2854 = vmatprep.subr.bf16.mxu0 %v2624
    %2855 = vmatpush1.bf16.msra.mxu0 %v2623
    %2856 = vmatprep.subr.bf16.mxu0 %v2620
    %2857 = vmatpush1.bf16.msra.mxu0 %v2619
    %2858 = vmatprep.subr.bf16.mxu0 %v2616
    %2859 = vmatpush1.bf16.msra.mxu0 %v2615
    %2860 = vmatprep.subr.bf16.mxu0 %v2612
    %2861 = vmatpush1.bf16.msra.mxu0 %v2611
    %2862 = vmatprep.subr.bf16.mxu0 %v2672
    %2863 = vmatpush2.bf16.msra.mxu0 %v2671
    %2864 = vmatprep.subr.bf16.mxu0 %v2668
    %2865 = vmatpush2.bf16.msra.mxu0 %v2667
    %2866 = vmatprep.subr.bf16.mxu0 %v2664
    %2867 = vmatpush2.bf16.msra.mxu0 %v2663
    %2868 = vmatprep.subr.bf16.mxu0 %v2660
    %2869 = vmatpush2.bf16.msra.mxu0 %v2659
    %2870 = vmatprep.subr.bf16.mxu0 %v2656
    %2871 = vmatpush2.bf16.msra.mxu0 %v2655
    %2872 = vmatprep.subr.bf16.mxu0 %v2652
    %2873 = vmatpush2.bf16.msra.mxu0 %v2651
    %2874 = vmatprep.subr.bf16.mxu0 %v2648
    %2875 = vmatpush2.bf16.msra.mxu0 %v2647
    %2876 = vmatprep.subr.bf16.mxu0 %v2644
    %2877 = vmatpush2.bf16.msra.mxu0 %v2643
    %2878 = vmatprep.mubr.bf16.mxu0 %v2012
    %2879 = vmatmul.mubr.bf16.gmra.mxu0 %v2011
    %v2880 = vpop.f32.mrf.mxu0
    %v2881 = vadd.f32 %v2838, %v2880
    %v2882 = vpop.f32.mrf.mxu0
    %v2883 = vadd.f32 %v2840, %v2882
    %v2884 = vpop.f32.mrf.mxu0
    %v2885 = vadd.f32 %v2842, %v2884
    %v2886 = vpop.f32.mrf.mxu0
    %v2887 = vadd.f32 %v2844, %v2886
    %2888 = vdwg.mxu0
    %2889 = vmatprep.subr.bf16.mxu0 %v2578
    %2890 = vmatpush1.bf16.msra.mxu0 %v2577
    %2891 = vmatprep.subr.bf16.mxu0 %v2574
    %2892 = vmatpush1.bf16.msra.mxu0 %v2573
    %2893 = vmatprep.subr.bf16.mxu0 %v2570
    %2894 = vmatpush1.bf16.msra.mxu0 %v2569
    %2895 = vmatprep.subr.bf16.mxu0 %v2566
    %2896 = vmatpush1.bf16.msra.mxu0 %v2565
    %2897 = vmatprep.subr.bf16.mxu0 %v2562
    %2898 = vmatpush1.bf16.msra.mxu0 %v2561
    %2899 = vmatprep.subr.bf16.mxu0 %v2558
    %2900 = vmatpush1.bf16.msra.mxu0 %v2557
    %2901 = vmatprep.subr.bf16.mxu0 %v2554
    %2902 = vmatpush1.bf16.msra.mxu0 %v2553
    %2903 = vmatprep.subr.bf16.mxu0 %v2550
    %2904 = vmatpush1.bf16.msra.mxu0 %v2549
    %2905 = vmatprep.subr.bf16.mxu0 %v2610
    %2906 = vmatpush2.bf16.msra.mxu0 %v2609
    %2907 = vmatprep.subr.bf16.mxu0 %v2606
    %2908 = vmatpush2.bf16.msra.mxu0 %v2605
    %2909 = vmatprep.subr.bf16.mxu0 %v2602
    %2910 = vmatpush2.bf16.msra.mxu0 %v2601
    %2911 = vmatprep.subr.bf16.mxu0 %v2598
    %2912 = vmatpush2.bf16.msra.mxu0 %v2597
    %2913 = vmatprep.subr.bf16.mxu0 %v2594
    %2914 = vmatpush2.bf16.msra.mxu0 %v2593
    %2915 = vmatprep.subr.bf16.mxu0 %v2590
    %2916 = vmatpush2.bf16.msra.mxu0 %v2589
    %2917 = vmatprep.subr.bf16.mxu0 %v2586
    %2918 = vmatpush2.bf16.msra.mxu0 %v2585
    %2919 = vmatprep.subr.bf16.mxu0 %v2582
    %2920 = vmatpush2.bf16.msra.mxu0 %v2581
    %2921 = vmatprep.mubr.bf16.mxu0 %v2010
    %2922 = vmatmul.mubr.bf16.gmra.mxu0 %v2009
    %v2923 = vpop.f32.mrf.mxu0
    %v2924 = vadd.f32 %v2154, %v2923
    %v2925 = vpop.f32.mrf.mxu0
    %v2926 = vadd.f32 %v2158, %v2925
    %v2927 = vpop.f32.mrf.mxu0
    %v2928 = vadd.f32 %v2154, %v2927
    %v2929 = vpop.f32.mrf.mxu0
    %v2930 = vadd.f32 %v2158, %v2929
    %2931 = vdwg.mxu0
    %2932 = vmatprep.subr.bf16.mxu0 %v2642
    %2933 = vmatpush1.bf16.msra.mxu0 %v2641
    %2934 = vmatprep.subr.bf16.mxu0 %v2638
    %2935 = vmatpush1.bf16.msra.mxu0 %v2637
    %2936 = vmatprep.subr.bf16.mxu0 %v2634
    %2937 = vmatpush1.bf16.msra.mxu0 %v2633
    %2938 = vmatprep.subr.bf16.mxu0 %v2630
    %2939 = vmatpush1.bf16.msra.mxu0 %v2629
    %2940 = vmatprep.subr.bf16.mxu0 %v2626
    %2941 = vmatpush1.bf16.msra.mxu0 %v2625
    %2942 = vmatprep.subr.bf16.mxu0 %v2622
    %2943 = vmatpush1.bf16.msra.mxu0 %v2621
    %2944 = vmatprep.subr.bf16.mxu0 %v2618
    %2945 = vmatpush1.bf16.msra.mxu0 %v2617
    %2946 = vmatprep.subr.bf16.mxu0 %v2614
    %2947 = vmatpush1.bf16.msra.mxu0 %v2613
    %2948 = vmatprep.subr.bf16.mxu0 %v2674
    %2949 = vmatpush2.bf16.msra.mxu0 %v2673
    %2950 = vmatprep.subr.bf16.mxu0 %v2670
    %2951 = vmatpush2.bf16.msra.mxu0 %v2669
    %2952 = vmatprep.subr.bf16.mxu0 %v2666
    %2953 = vmatpush2.bf16.msra.mxu0 %v2665
    %2954 = vmatprep.subr.bf16.mxu0 %v2662
    %2955 = vmatpush2.bf16.msra.mxu0 %v2661
    %2956 = vmatprep.subr.bf16.mxu0 %v2658
    %2957 = vmatpush2.bf16.msra.mxu0 %v2657
    %2958 = vmatprep.subr.bf16.mxu0 %v2654
    %2959 = vmatpush2.bf16.msra.mxu0 %v2653
    %2960 = vmatprep.subr.bf16.mxu0 %v2650
    %2961 = vmatpush2.bf16.msra.mxu0 %v2649
    %2962 = vmatprep.subr.bf16.mxu0 %v2646
    %2963 = vmatpush2.bf16.msra.mxu0 %v2645
    %2964 = vmatprep.mubr.bf16.mxu0 %v2012
    %2965 = vmatmul.mubr.bf16.gmra.mxu0 %v2011
    %v2966 = vpop.f32.mrf.mxu0
    %v2967 = vadd.f32 %v2924, %v2966
    %v2968 = vpop.f32.mrf.mxu0
    %v2969 = vadd.f32 %v2926, %v2968
    %v2970 = vpop.f32.mrf.mxu0
    %v2971 = vadd.f32 %v2928, %v2970
    %v2972 = vpop.f32.mrf.mxu0
    %v2973 = vadd.f32 %v2930, %v2972
    %2974 = vdwg.mxu0
    %v2975 = vmax.f32 %v2881, 0.0
    %v2976 = vmax.f32 %v2883, 0.0
    %v2977 = vmax.f32 %v2967, 0.0
    %v2978 = vmax.f32 %v2969, 0.0
    %v2979 = vmax.f32 %v2885, 0.0
    %v2980 = vmax.f32 %v2887, 0.0
    %v2981 = vmax.f32 %v2971, 0.0
    %v2982 = vmax.f32 %v2973, 0.0
    %v2983 = vpack.c.bf16 %v2979, %v2975
    %v2984 = vpack.c.bf16 %v2980, %v2976
    %v2985 = vpack.c.bf16 %v2981, %v2977
    %v2986 = vpack.c.bf16 %v2982, %v2978
    %v2987 = vld [vmem:[#allocation7] sm:$0xff]
    %v2988 = vld [vmem:[#allocation7 + $0x8] sm:$0xff]
    %v2989 = vld [vmem:[#allocation7 + $0x10] sm:$0xff]
    %v2990 = vld [vmem:[#allocation7 + $0x18] sm:$0xff]
    %v2991 = vld [vmem:[#allocation7 + $0x20] sm:$0xff]
    %v2992 = vld [vmem:[#allocation7 + $0x28] sm:$0xff]
    %v2993 = vld [vmem:[#allocation7 + $0x30] sm:$0xff]
    %v2994 = vld [vmem:[#allocation7 + $0x38] sm:$0xff]
    %v2995 = vld [vmem:[#allocation7 + $0x40] sm:$0xff]
    %v2996 = vld [vmem:[#allocation7 + $0x48] sm:$0xff]
    %v2997 = vld [vmem:[#allocation7 + $0x50] sm:$0xff]
    %v2998 = vld [vmem:[#allocation7 + $0x58] sm:$0xff]
    %v2999 = vld [vmem:[#allocation7 + $0x60] sm:$0xff]
    %v3000 = vld [vmem:[#allocation7 + $0x68] sm:$0xff]
    %v3001 = vld [vmem:[#allocation7 + $0x70] sm:$0xff]
    %v3002 = vld [vmem:[#allocation7 + $0x78] sm:$0xff]
    %v3003 = vld [vmem:[#allocation7 + $0x80] sm:$0xff]
    %v3004 = vld [vmem:[#allocation7 + $0x88] sm:$0xff]
    %v3005 = vld [vmem:[#allocation7 + $0x90] sm:$0xff]
    %v3006 = vld [vmem:[#allocation7 + $0x98] sm:$0xff]
    %v3007 = vld [vmem:[#allocation7 + $0xa0] sm:$0xff]
    %v3008 = vld [vmem:[#allocation7 + $0xa8] sm:$0xff]
    %v3009 = vld [vmem:[#allocation7 + $0xb0] sm:$0xff]
    %v3010 = vld [vmem:[#allocation7 + $0xb8] sm:$0xff]
    %v3011 = vld [vmem:[#allocation7 + $0xc0] sm:$0xff]
    %v3012 = vld [vmem:[#allocation7 + $0xc8] sm:$0xff]
    %v3013 = vld [vmem:[#allocation7 + $0xd0] sm:$0xff]
    %v3014 = vld [vmem:[#allocation7 + $0xd8] sm:$0xff]
    %v3015 = vld [vmem:[#allocation7 + $0xe0] sm:$0xff]
    %v3016 = vld [vmem:[#allocation7 + $0xe8] sm:$0xff]
    %v3017 = vld [vmem:[#allocation7 + $0xf0] sm:$0xff]
    %v3018 = vld [vmem:[#allocation7 + $0xf8] sm:$0xff]
    %v3019 = vld [vmem:[#allocation7 + $0x100] sm:$0xff]
    %v3020 = vld [vmem:[#allocation7 + $0x108] sm:$0xff]
    %v3021 = vld [vmem:[#allocation7 + $0x110] sm:$0xff]
    %v3022 = vld [vmem:[#allocation7 + $0x118] sm:$0xff]
    %v3023 = vld [vmem:[#allocation7 + $0x120] sm:$0xff]
    %v3024 = vld [vmem:[#allocation7 + $0x128] sm:$0xff]
    %v3025 = vld [vmem:[#allocation7 + $0x130] sm:$0xff]
    %v3026 = vld [vmem:[#allocation7 + $0x138] sm:$0xff]
    %v3027 = vld [vmem:[#allocation7 + $0x140] sm:$0xff]
    %v3028 = vld [vmem:[#allocation7 + $0x148] sm:$0xff]
    %v3029 = vld [vmem:[#allocation7 + $0x150] sm:$0xff]
    %v3030 = vld [vmem:[#allocation7 + $0x158] sm:$0xff]
    %v3031 = vld [vmem:[#allocation7 + $0x160] sm:$0xff]
    %v3032 = vld [vmem:[#allocation7 + $0x168] sm:$0xff]
    %v3033 = vld [vmem:[#allocation7 + $0x170] sm:$0xff]
    %v3034 = vld [vmem:[#allocation7 + $0x178] sm:$0xff]
    %v3035 = vld [vmem:[#allocation7 + $0x180] sm:$0xff]
    %v3036 = vld [vmem:[#allocation7 + $0x188] sm:$0xff]
    %v3037 = vld [vmem:[#allocation7 + $0x190] sm:$0xff]
    %v3038 = vld [vmem:[#allocation7 + $0x198] sm:$0xff]
    %v3039 = vld [vmem:[#allocation7 + $0x1a0] sm:$0xff]
    %v3040 = vld [vmem:[#allocation7 + $0x1a8] sm:$0xff]
    %v3041 = vld [vmem:[#allocation7 + $0x1b0] sm:$0xff]
    %v3042 = vld [vmem:[#allocation7 + $0x1b8] sm:$0xff]
    %v3043 = vld [vmem:[#allocation7 + $0x1c0] sm:$0xff]
    %v3044 = vld [vmem:[#allocation7 + $0x1c8] sm:$0xff]
    %v3045 = vld [vmem:[#allocation7 + $0x1d0] sm:$0xff]
    %v3046 = vld [vmem:[#allocation7 + $0x1d8] sm:$0xff]
    %v3047 = vld [vmem:[#allocation7 + $0x1e0] sm:$0xff]
    %v3048 = vld [vmem:[#allocation7 + $0x1e8] sm:$0xff]
    %v3049 = vld [vmem:[#allocation7 + $0x1f0] sm:$0xff]
    %v3050 = vld [vmem:[#allocation7 + $0x1f8] sm:$0xff]
    %v3051 = vld [vmem:[#allocation7 + $0x200] sm:$0xff]
    %v3052 = vld [vmem:[#allocation7 + $0x208] sm:$0xff]
    %v3053 = vld [vmem:[#allocation7 + $0x210] sm:$0xff]
    %v3054 = vld [vmem:[#allocation7 + $0x218] sm:$0xff]
    %v3055 = vld [vmem:[#allocation7 + $0x220] sm:$0xff]
    %v3056 = vld [vmem:[#allocation7 + $0x228] sm:$0xff]
    %v3057 = vld [vmem:[#allocation7 + $0x230] sm:$0xff]
    %v3058 = vld [vmem:[#allocation7 + $0x238] sm:$0xff]
    %v3059 = vld [vmem:[#allocation7 + $0x240] sm:$0xff]
    %v3060 = vld [vmem:[#allocation7 + $0x248] sm:$0xff]
    %v3061 = vld [vmem:[#allocation7 + $0x250] sm:$0xff]
    %v3062 = vld [vmem:[#allocation7 + $0x258] sm:$0xff]
    %v3063 = vld [vmem:[#allocation7 + $0x260] sm:$0xff]
    %v3064 = vld [vmem:[#allocation7 + $0x268] sm:$0xff]
    %v3065 = vld [vmem:[#allocation7 + $0x270] sm:$0xff]
    %v3066 = vld [vmem:[#allocation7 + $0x278] sm:$0xff]
    %v3067 = vld [vmem:[#allocation7 + $0x280] sm:$0xff]
    %v3068 = vld [vmem:[#allocation7 + $0x288] sm:$0xff]
    %v3069 = vld [vmem:[#allocation7 + $0x290] sm:$0xff]
    %v3070 = vld [vmem:[#allocation7 + $0x298] sm:$0xff]
    %v3071 = vld [vmem:[#allocation7 + $0x2a0] sm:$0xff]
    %v3072 = vld [vmem:[#allocation7 + $0x2a8] sm:$0xff]
    %v3073 = vld [vmem:[#allocation7 + $0x2b0] sm:$0xff]
    %v3074 = vld [vmem:[#allocation7 + $0x2b8] sm:$0xff]
    %v3075 = vld [vmem:[#allocation7 + $0x2c0] sm:$0xff]
    %v3076 = vld [vmem:[#allocation7 + $0x2c8] sm:$0xff]
    %v3077 = vld [vmem:[#allocation7 + $0x2d0] sm:$0xff]
    %v3078 = vld [vmem:[#allocation7 + $0x2d8] sm:$0xff]
    %v3079 = vld [vmem:[#allocation7 + $0x2e0] sm:$0xff]
    %v3080 = vld [vmem:[#allocation7 + $0x2e8] sm:$0xff]
    %v3081 = vld [vmem:[#allocation7 + $0x2f0] sm:$0xff]
    %v3082 = vld [vmem:[#allocation7 + $0x2f8] sm:$0xff]
    %v3083 = vld [vmem:[#allocation7 + $0x300] sm:$0xff]
    %v3084 = vld [vmem:[#allocation7 + $0x308] sm:$0xff]
    %v3085 = vld [vmem:[#allocation7 + $0x310] sm:$0xff]
    %v3086 = vld [vmem:[#allocation7 + $0x318] sm:$0xff]
    %v3087 = vld [vmem:[#allocation7 + $0x320] sm:$0xff]
    %v3088 = vld [vmem:[#allocation7 + $0x328] sm:$0xff]
    %v3089 = vld [vmem:[#allocation7 + $0x330] sm:$0xff]
    %v3090 = vld [vmem:[#allocation7 + $0x338] sm:$0xff]
    %v3091 = vld [vmem:[#allocation7 + $0x340] sm:$0xff]
    %v3092 = vld [vmem:[#allocation7 + $0x348] sm:$0xff]
    %v3093 = vld [vmem:[#allocation7 + $0x350] sm:$0xff]
    %v3094 = vld [vmem:[#allocation7 + $0x358] sm:$0xff]
    %v3095 = vld [vmem:[#allocation7 + $0x360] sm:$0xff]
    %v3096 = vld [vmem:[#allocation7 + $0x368] sm:$0xff]
    %v3097 = vld [vmem:[#allocation7 + $0x370] sm:$0xff]
    %v3098 = vld [vmem:[#allocation7 + $0x378] sm:$0xff]
    %v3099 = vld [vmem:[#allocation7 + $0x380] sm:$0xff]
    %v3100 = vld [vmem:[#allocation7 + $0x388] sm:$0xff]
    %v3101 = vld [vmem:[#allocation7 + $0x390] sm:$0xff]
    %v3102 = vld [vmem:[#allocation7 + $0x398] sm:$0xff]
    %v3103 = vld [vmem:[#allocation7 + $0x3a0] sm:$0xff]
    %v3104 = vld [vmem:[#allocation7 + $0x3a8] sm:$0xff]
    %v3105 = vld [vmem:[#allocation7 + $0x3b0] sm:$0xff]
    %v3106 = vld [vmem:[#allocation7 + $0x3b8] sm:$0xff]
    %v3107 = vld [vmem:[#allocation7 + $0x3c0] sm:$0xff]
    %v3108 = vld [vmem:[#allocation7 + $0x3c8] sm:$0xff]
    %v3109 = vld [vmem:[#allocation7 + $0x3d0] sm:$0xff]
    %v3110 = vld [vmem:[#allocation7 + $0x3d8] sm:$0xff]
    %v3111 = vld [vmem:[#allocation7 + $0x3e0] sm:$0xff]
    %v3112 = vld [vmem:[#allocation7 + $0x3e8] sm:$0xff]
    %v3113 = vld [vmem:[#allocation7 + $0x3f0] sm:$0xff]
    %v3114 = vld [vmem:[#allocation7 + $0x3f8] sm:$0xff]
    %v3115 = vld [vmem:[%s6] sm:$0xf]
    %v3117 = vlaneseq
    %v3118 = vshrl.u32 %v3117, 7
    %v3119 = vsub.s32 0, %v3118
    %v3120 = vrot.slane %v3115, %v3119
    %v3121 = vlaneseq
    %v3122 = vshrl.u32 %v3121, 7
    %v3123 = vsub.s32 1, %v3122
    %v3124 = vrot.slane %v3115, %v3123
    %v3125 = vlaneseq
    %v3126 = vshrl.u32 %v3125, 7
    %v3127 = vsub.s32 2, %v3126
    %v3128 = vrot.slane %v3115, %v3127
    %v3129 = vlaneseq
    %v3130 = vshrl.u32 %v3129, 7
    %v3131 = vsub.s32 3, %v3130
    %v3132 = vrot.slane %v3115, %v3131
    %v3265 = vunpack.c.l.b16 %v2987
    %v3266 = vunpack.c.h.b16 %v2987
    %v3267 = vunpack.c.l.b16 %v2988
    %v3268 = vunpack.c.h.b16 %v2988
    %v3269 = vunpack.c.l.b16 %v2989
    %v3270 = vunpack.c.h.b16 %v2989
    %v3271 = vunpack.c.l.b16 %v2990
    %v3272 = vunpack.c.h.b16 %v2990
    %v3273 = vunpack.c.l.b16 %v2991
    %v3274 = vunpack.c.h.b16 %v2991
    %v3275 = vunpack.c.l.b16 %v2992
    %v3276 = vunpack.c.h.b16 %v2992
    %v3277 = vunpack.c.l.b16 %v2993
    %v3278 = vunpack.c.h.b16 %v2993
    %v3279 = vunpack.c.l.b16 %v2994
    %v3280 = vunpack.c.h.b16 %v2994
    %v3281 = vunpack.c.l.b16 %v2995
    %v3282 = vunpack.c.h.b16 %v2995
    %v3283 = vunpack.c.l.b16 %v2996
    %v3284 = vunpack.c.h.b16 %v2996
    %v3285 = vunpack.c.l.b16 %v2997
    %v3286 = vunpack.c.h.b16 %v2997
    %v3287 = vunpack.c.l.b16 %v2998
    %v3288 = vunpack.c.h.b16 %v2998
    %v3289 = vunpack.c.l.b16 %v2999
    %v3290 = vunpack.c.h.b16 %v2999
    %v3291 = vunpack.c.l.b16 %v3000
    %v3292 = vunpack.c.h.b16 %v3000
    %v3293 = vunpack.c.l.b16 %v3001
    %v3294 = vunpack.c.h.b16 %v3001
    %v3295 = vunpack.c.l.b16 %v3002
    %v3296 = vunpack.c.h.b16 %v3002
    %v3297 = vunpack.c.l.b16 %v3003
    %v3298 = vunpack.c.h.b16 %v3003
    %v3299 = vunpack.c.l.b16 %v3004
    %v3300 = vunpack.c.h.b16 %v3004
    %v3301 = vunpack.c.l.b16 %v3005
    %v3302 = vunpack.c.h.b16 %v3005
    %v3303 = vunpack.c.l.b16 %v3006
    %v3304 = vunpack.c.h.b16 %v3006
    %v3305 = vunpack.c.l.b16 %v3007
    %v3306 = vunpack.c.h.b16 %v3007
    %v3307 = vunpack.c.l.b16 %v3008
    %v3308 = vunpack.c.h.b16 %v3008
    %v3309 = vunpack.c.l.b16 %v3009
    %v3310 = vunpack.c.h.b16 %v3009
    %v3311 = vunpack.c.l.b16 %v3010
    %v3312 = vunpack.c.h.b16 %v3010
    %v3313 = vunpack.c.l.b16 %v3011
    %v3314 = vunpack.c.h.b16 %v3011
    %v3315 = vunpack.c.l.b16 %v3012
    %v3316 = vunpack.c.h.b16 %v3012
    %v3317 = vunpack.c.l.b16 %v3013
    %v3318 = vunpack.c.h.b16 %v3013
    %v3319 = vunpack.c.l.b16 %v3014
    %v3320 = vunpack.c.h.b16 %v3014
    %v3321 = vunpack.c.l.b16 %v3015
    %v3322 = vunpack.c.h.b16 %v3015
    %v3323 = vunpack.c.l.b16 %v3016
    %v3324 = vunpack.c.h.b16 %v3016
    %v3325 = vunpack.c.l.b16 %v3017
    %v3326 = vunpack.c.h.b16 %v3017
    %v3327 = vunpack.c.l.b16 %v3018
    %v3328 = vunpack.c.h.b16 %v3018
    %v3329 = vunpack.c.l.b16 %v3019
    %v3330 = vunpack.c.h.b16 %v3019
    %v3331 = vunpack.c.l.b16 %v3020
    %v3332 = vunpack.c.h.b16 %v3020
    %v3333 = vunpack.c.l.b16 %v3021
    %v3334 = vunpack.c.h.b16 %v3021
    %v3335 = vunpack.c.l.b16 %v3022
    %v3336 = vunpack.c.h.b16 %v3022
    %v3337 = vunpack.c.l.b16 %v3023
    %v3338 = vunpack.c.h.b16 %v3023
    %v3339 = vunpack.c.l.b16 %v3024
    %v3340 = vunpack.c.h.b16 %v3024
    %v3341 = vunpack.c.l.b16 %v3025
    %v3342 = vunpack.c.h.b16 %v3025
    %v3343 = vunpack.c.l.b16 %v3026
    %v3344 = vunpack.c.h.b16 %v3026
    %v3345 = vunpack.c.l.b16 %v3027
    %v3346 = vunpack.c.h.b16 %v3027
    %v3347 = vunpack.c.l.b16 %v3028
    %v3348 = vunpack.c.h.b16 %v3028
    %v3349 = vunpack.c.l.b16 %v3029
    %v3350 = vunpack.c.h.b16 %v3029
    %v3351 = vunpack.c.l.b16 %v3030
    %v3352 = vunpack.c.h.b16 %v3030
    %v3353 = vunpack.c.l.b16 %v3031
    %v3354 = vunpack.c.h.b16 %v3031
    %v3355 = vunpack.c.l.b16 %v3032
    %v3356 = vunpack.c.h.b16 %v3032
    %v3357 = vunpack.c.l.b16 %v3033
    %v3358 = vunpack.c.h.b16 %v3033
    %v3359 = vunpack.c.l.b16 %v3034
    %v3360 = vunpack.c.h.b16 %v3034
    %v3361 = vunpack.c.l.b16 %v3035
    %v3362 = vunpack.c.h.b16 %v3035
    %v3363 = vunpack.c.l.b16 %v3036
    %v3364 = vunpack.c.h.b16 %v3036
    %v3365 = vunpack.c.l.b16 %v3037
    %v3366 = vunpack.c.h.b16 %v3037
    %v3367 = vunpack.c.l.b16 %v3038
    %v3368 = vunpack.c.h.b16 %v3038
    %v3369 = vunpack.c.l.b16 %v3039
    %v3370 = vunpack.c.h.b16 %v3039
    %v3371 = vunpack.c.l.b16 %v3040
    %v3372 = vunpack.c.h.b16 %v3040
    %v3373 = vunpack.c.l.b16 %v3041
    %v3374 = vunpack.c.h.b16 %v3041
    %v3375 = vunpack.c.l.b16 %v3042
    %v3376 = vunpack.c.h.b16 %v3042
    %v3377 = vunpack.c.l.b16 %v3043
    %v3378 = vunpack.c.h.b16 %v3043
    %v3379 = vunpack.c.l.b16 %v3044
    %v3380 = vunpack.c.h.b16 %v3044
    %v3381 = vunpack.c.l.b16 %v3045
    %v3382 = vunpack.c.h.b16 %v3045
    %v3383 = vunpack.c.l.b16 %v3046
    %v3384 = vunpack.c.h.b16 %v3046
    %v3385 = vunpack.c.l.b16 %v3047
    %v3386 = vunpack.c.h.b16 %v3047
    %v3387 = vunpack.c.l.b16 %v3048
    %v3388 = vunpack.c.h.b16 %v3048
    %v3389 = vunpack.c.l.b16 %v3049
    %v3390 = vunpack.c.h.b16 %v3049
    %v3391 = vunpack.c.l.b16 %v3050
    %v3392 = vunpack.c.h.b16 %v3050
    %v3393 = vunpack.c.l.b16 %v3051
    %v3394 = vunpack.c.h.b16 %v3051
    %v3395 = vunpack.c.l.b16 %v3052
    %v3396 = vunpack.c.h.b16 %v3052
    %v3397 = vunpack.c.l.b16 %v3053
    %v3398 = vunpack.c.h.b16 %v3053
    %v3399 = vunpack.c.l.b16 %v3054
    %v3400 = vunpack.c.h.b16 %v3054
    %v3401 = vunpack.c.l.b16 %v3055
    %v3402 = vunpack.c.h.b16 %v3055
    %v3403 = vunpack.c.l.b16 %v3056
    %v3404 = vunpack.c.h.b16 %v3056
    %v3405 = vunpack.c.l.b16 %v3057
    %v3406 = vunpack.c.h.b16 %v3057
    %v3407 = vunpack.c.l.b16 %v3058
    %v3408 = vunpack.c.h.b16 %v3058
    %v3409 = vunpack.c.l.b16 %v3059
    %v3410 = vunpack.c.h.b16 %v3059
    %v3411 = vunpack.c.l.b16 %v3060
    %v3412 = vunpack.c.h.b16 %v3060
    %v3413 = vunpack.c.l.b16 %v3061
    %v3414 = vunpack.c.h.b16 %v3061
    %v3415 = vunpack.c.l.b16 %v3062
    %v3416 = vunpack.c.h.b16 %v3062
    %v3417 = vunpack.c.l.b16 %v3063
    %v3418 = vunpack.c.h.b16 %v3063
    %v3419 = vunpack.c.l.b16 %v3064
    %v3420 = vunpack.c.h.b16 %v3064
    %v3421 = vunpack.c.l.b16 %v3065
    %v3422 = vunpack.c.h.b16 %v3065
    %v3423 = vunpack.c.l.b16 %v3066
    %v3424 = vunpack.c.h.b16 %v3066
    %v3425 = vunpack.c.l.b16 %v3067
    %v3426 = vunpack.c.h.b16 %v3067
    %v3427 = vunpack.c.l.b16 %v3068
    %v3428 = vunpack.c.h.b16 %v3068
    %v3429 = vunpack.c.l.b16 %v3069
    %v3430 = vunpack.c.h.b16 %v3069
    %v3431 = vunpack.c.l.b16 %v3070
    %v3432 = vunpack.c.h.b16 %v3070
    %v3433 = vunpack.c.l.b16 %v3071
    %v3434 = vunpack.c.h.b16 %v3071
    %v3435 = vunpack.c.l.b16 %v3072
    %v3436 = vunpack.c.h.b16 %v3072
    %v3437 = vunpack.c.l.b16 %v3073
    %v3438 = vunpack.c.h.b16 %v3073
    %v3439 = vunpack.c.l.b16 %v3074
    %v3440 = vunpack.c.h.b16 %v3074
    %v3441 = vunpack.c.l.b16 %v3075
    %v3442 = vunpack.c.h.b16 %v3075
    %v3443 = vunpack.c.l.b16 %v3076
    %v3444 = vunpack.c.h.b16 %v3076
    %v3445 = vunpack.c.l.b16 %v3077
    %v3446 = vunpack.c.h.b16 %v3077
    %v3447 = vunpack.c.l.b16 %v3078
    %v3448 = vunpack.c.h.b16 %v3078
    %v3449 = vunpack.c.l.b16 %v3079
    %v3450 = vunpack.c.h.b16 %v3079
    %v3451 = vunpack.c.l.b16 %v3080
    %v3452 = vunpack.c.h.b16 %v3080
    %v3453 = vunpack.c.l.b16 %v3081
    %v3454 = vunpack.c.h.b16 %v3081
    %v3455 = vunpack.c.l.b16 %v3082
    %v3456 = vunpack.c.h.b16 %v3082
    %v3457 = vunpack.c.l.b16 %v3083
    %v3458 = vunpack.c.h.b16 %v3083
    %v3459 = vunpack.c.l.b16 %v3084
    %v3460 = vunpack.c.h.b16 %v3084
    %v3461 = vunpack.c.l.b16 %v3085
    %v3462 = vunpack.c.h.b16 %v3085
    %v3463 = vunpack.c.l.b16 %v3086
    %v3464 = vunpack.c.h.b16 %v3086
    %v3465 = vunpack.c.l.b16 %v3087
    %v3466 = vunpack.c.h.b16 %v3087
    %v3467 = vunpack.c.l.b16 %v3088
    %v3468 = vunpack.c.h.b16 %v3088
    %v3469 = vunpack.c.l.b16 %v3089
    %v3470 = vunpack.c.h.b16 %v3089
    %v3471 = vunpack.c.l.b16 %v3090
    %v3472 = vunpack.c.h.b16 %v3090
    %v3473 = vunpack.c.l.b16 %v3091
    %v3474 = vunpack.c.h.b16 %v3091
    %v3475 = vunpack.c.l.b16 %v3092
    %v3476 = vunpack.c.h.b16 %v3092
    %v3477 = vunpack.c.l.b16 %v3093
    %v3478 = vunpack.c.h.b16 %v3093
    %v3479 = vunpack.c.l.b16 %v3094
    %v3480 = vunpack.c.h.b16 %v3094
    %v3481 = vunpack.c.l.b16 %v3095
    %v3482 = vunpack.c.h.b16 %v3095
    %v3483 = vunpack.c.l.b16 %v3096
    %v3484 = vunpack.c.h.b16 %v3096
    %v3485 = vunpack.c.l.b16 %v3097
    %v3486 = vunpack.c.h.b16 %v3097
    %v3487 = vunpack.c.l.b16 %v3098
    %v3488 = vunpack.c.h.b16 %v3098
    %v3489 = vunpack.c.l.b16 %v3099
    %v3490 = vunpack.c.h.b16 %v3099
    %v3491 = vunpack.c.l.b16 %v3100
    %v3492 = vunpack.c.h.b16 %v3100
    %v3493 = vunpack.c.l.b16 %v3101
    %v3494 = vunpack.c.h.b16 %v3101
    %v3495 = vunpack.c.l.b16 %v3102
    %v3496 = vunpack.c.h.b16 %v3102
    %v3497 = vunpack.c.l.b16 %v3103
    %v3498 = vunpack.c.h.b16 %v3103
    %v3499 = vunpack.c.l.b16 %v3104
    %v3500 = vunpack.c.h.b16 %v3104
    %v3501 = vunpack.c.l.b16 %v3105
    %v3502 = vunpack.c.h.b16 %v3105
    %v3503 = vunpack.c.l.b16 %v3106
    %v3504 = vunpack.c.h.b16 %v3106
    %v3505 = vunpack.c.l.b16 %v3107
    %v3506 = vunpack.c.h.b16 %v3107
    %v3507 = vunpack.c.l.b16 %v3108
    %v3508 = vunpack.c.h.b16 %v3108
    %v3509 = vunpack.c.l.b16 %v3109
    %v3510 = vunpack.c.h.b16 %v3109
    %v3511 = vunpack.c.l.b16 %v3110
    %v3512 = vunpack.c.h.b16 %v3110
    %v3513 = vunpack.c.l.b16 %v3111
    %v3514 = vunpack.c.h.b16 %v3111
    %v3515 = vunpack.c.l.b16 %v3112
    %v3516 = vunpack.c.h.b16 %v3112
    %v3517 = vunpack.c.l.b16 %v3113
    %v3518 = vunpack.c.h.b16 %v3113
    %v3519 = vunpack.c.l.b16 %v3114
    %v3520 = vunpack.c.h.b16 %v3114
    %v3521 = vpack.c.b16 %v3269, %v3265
    %v3522 = vpack.c.b16 %v3270, %v3266
    %v3523 = vpack.c.b16 %v3271, %v3267
    %v3524 = vpack.c.b16 %v3272, %v3268
    %v3525 = vpack.c.b16 %v3277, %v3273
    %v3526 = vpack.c.b16 %v3278, %v3274
    %v3527 = vpack.c.b16 %v3279, %v3275
    %v3528 = vpack.c.b16 %v3280, %v3276
    %v3529 = vpack.c.b16 %v3285, %v3281
    %v3530 = vpack.c.b16 %v3286, %v3282
    %v3531 = vpack.c.b16 %v3287, %v3283
    %v3532 = vpack.c.b16 %v3288, %v3284
    %v3533 = vpack.c.b16 %v3293, %v3289
    %v3534 = vpack.c.b16 %v3294, %v3290
    %v3535 = vpack.c.b16 %v3295, %v3291
    %v3536 = vpack.c.b16 %v3296, %v3292
    %v3537 = vpack.c.b16 %v3301, %v3297
    %v3538 = vpack.c.b16 %v3302, %v3298
    %v3539 = vpack.c.b16 %v3303, %v3299
    %v3540 = vpack.c.b16 %v3304, %v3300
    %v3541 = vpack.c.b16 %v3309, %v3305
    %v3542 = vpack.c.b16 %v3310, %v3306
    %v3543 = vpack.c.b16 %v3311, %v3307
    %v3544 = vpack.c.b16 %v3312, %v3308
    %v3545 = vpack.c.b16 %v3317, %v3313
    %v3546 = vpack.c.b16 %v3318, %v3314
    %v3547 = vpack.c.b16 %v3319, %v3315
    %v3548 = vpack.c.b16 %v3320, %v3316
    %v3549 = vpack.c.b16 %v3325, %v3321
    %v3550 = vpack.c.b16 %v3326, %v3322
    %v3551 = vpack.c.b16 %v3327, %v3323
    %v3552 = vpack.c.b16 %v3328, %v3324
    %v3553 = vpack.c.b16 %v3333, %v3329
    %v3554 = vpack.c.b16 %v3334, %v3330
    %v3555 = vpack.c.b16 %v3335, %v3331
    %v3556 = vpack.c.b16 %v3336, %v3332
    %v3557 = vpack.c.b16 %v3341, %v3337
    %v3558 = vpack.c.b16 %v3342, %v3338
    %v3559 = vpack.c.b16 %v3343, %v3339
    %v3560 = vpack.c.b16 %v3344, %v3340
    %v3561 = vpack.c.b16 %v3349, %v3345
    %v3562 = vpack.c.b16 %v3350, %v3346
    %v3563 = vpack.c.b16 %v3351, %v3347
    %v3564 = vpack.c.b16 %v3352, %v3348
    %v3565 = vpack.c.b16 %v3357, %v3353
    %v3566 = vpack.c.b16 %v3358, %v3354
    %v3567 = vpack.c.b16 %v3359, %v3355
    %v3568 = vpack.c.b16 %v3360, %v3356
    %v3569 = vpack.c.b16 %v3365, %v3361
    %v3570 = vpack.c.b16 %v3366, %v3362
    %v3571 = vpack.c.b16 %v3367, %v3363
    %v3572 = vpack.c.b16 %v3368, %v3364
    %v3573 = vpack.c.b16 %v3373, %v3369
    %v3574 = vpack.c.b16 %v3374, %v3370
    %v3575 = vpack.c.b16 %v3375, %v3371
    %v3576 = vpack.c.b16 %v3376, %v3372
    %v3577 = vpack.c.b16 %v3381, %v3377
    %v3578 = vpack.c.b16 %v3382, %v3378
    %v3579 = vpack.c.b16 %v3383, %v3379
    %v3580 = vpack.c.b16 %v3384, %v3380
    %v3581 = vpack.c.b16 %v3389, %v3385
    %v3582 = vpack.c.b16 %v3390, %v3386
    %v3583 = vpack.c.b16 %v3391, %v3387
    %v3584 = vpack.c.b16 %v3392, %v3388
    %v3585 = vpack.c.b16 %v3397, %v3393
    %v3586 = vpack.c.b16 %v3398, %v3394
    %v3587 = vpack.c.b16 %v3399, %v3395
    %v3588 = vpack.c.b16 %v3400, %v3396
    %v3589 = vpack.c.b16 %v3405, %v3401
    %v3590 = vpack.c.b16 %v3406, %v3402
    %v3591 = vpack.c.b16 %v3407, %v3403
    %v3592 = vpack.c.b16 %v3408, %v3404
    %v3593 = vpack.c.b16 %v3413, %v3409
    %v3594 = vpack.c.b16 %v3414, %v3410
    %v3595 = vpack.c.b16 %v3415, %v3411
    %v3596 = vpack.c.b16 %v3416, %v3412
    %v3597 = vpack.c.b16 %v3421, %v3417
    %v3598 = vpack.c.b16 %v3422, %v3418
    %v3599 = vpack.c.b16 %v3423, %v3419
    %v3600 = vpack.c.b16 %v3424, %v3420
    %v3601 = vpack.c.b16 %v3429, %v3425
    %v3602 = vpack.c.b16 %v3430, %v3426
    %v3603 = vpack.c.b16 %v3431, %v3427
    %v3604 = vpack.c.b16 %v3432, %v3428
    %v3605 = vpack.c.b16 %v3437, %v3433
    %v3606 = vpack.c.b16 %v3438, %v3434
    %v3607 = vpack.c.b16 %v3439, %v3435
    %v3608 = vpack.c.b16 %v3440, %v3436
    %v3609 = vpack.c.b16 %v3445, %v3441
    %v3610 = vpack.c.b16 %v3446, %v3442
    %v3611 = vpack.c.b16 %v3447, %v3443
    %v3612 = vpack.c.b16 %v3448, %v3444
    %v3613 = vpack.c.b16 %v3453, %v3449
    %v3614 = vpack.c.b16 %v3454, %v3450
    %v3615 = vpack.c.b16 %v3455, %v3451
    %v3616 = vpack.c.b16 %v3456, %v3452
    %v3617 = vpack.c.b16 %v3461, %v3457
    %v3618 = vpack.c.b16 %v3462, %v3458
    %v3619 = vpack.c.b16 %v3463, %v3459
    %v3620 = vpack.c.b16 %v3464, %v3460
    %v3621 = vpack.c.b16 %v3469, %v3465
    %v3622 = vpack.c.b16 %v3470, %v3466
    %v3623 = vpack.c.b16 %v3471, %v3467
    %v3624 = vpack.c.b16 %v3472, %v3468
    %v3625 = vpack.c.b16 %v3477, %v3473
    %v3626 = vpack.c.b16 %v3478, %v3474
    %v3627 = vpack.c.b16 %v3479, %v3475
    %v3628 = vpack.c.b16 %v3480, %v3476
    %v3629 = vpack.c.b16 %v3485, %v3481
    %v3630 = vpack.c.b16 %v3486, %v3482
    %v3631 = vpack.c.b16 %v3487, %v3483
    %v3632 = vpack.c.b16 %v3488, %v3484
    %v3633 = vpack.c.b16 %v3493, %v3489
    %v3634 = vpack.c.b16 %v3494, %v3490
    %v3635 = vpack.c.b16 %v3495, %v3491
    %v3636 = vpack.c.b16 %v3496, %v3492
    %v3637 = vpack.c.b16 %v3501, %v3497
    %v3638 = vpack.c.b16 %v3502, %v3498
    %v3639 = vpack.c.b16 %v3503, %v3499
    %v3640 = vpack.c.b16 %v3504, %v3500
    %v3641 = vpack.c.b16 %v3509, %v3505
    %v3642 = vpack.c.b16 %v3510, %v3506
    %v3643 = vpack.c.b16 %v3511, %v3507
    %v3644 = vpack.c.b16 %v3512, %v3508
    %v3645 = vpack.c.b16 %v3517, %v3513
    %v3646 = vpack.c.b16 %v3518, %v3514
    %v3647 = vpack.c.b16 %v3519, %v3515
    %v3648 = vpack.c.b16 %v3520, %v3516
    %3777 = vmatprep.subr.bf16.mxu0 %v3550
    %3778 = vmatpush1.bf16.msra.mxu0 %v3549
    %3779 = vmatprep.subr.bf16.mxu0 %v3546
    %3780 = vmatpush1.bf16.msra.mxu0 %v3545
    %3781 = vmatprep.subr.bf16.mxu0 %v3542
    %3782 = vmatpush1.bf16.msra.mxu0 %v3541
    %3783 = vmatprep.subr.bf16.mxu0 %v3538
    %3784 = vmatpush1.bf16.msra.mxu0 %v3537
    %3785 = vmatprep.subr.bf16.mxu0 %v3534
    %3786 = vmatpush1.bf16.msra.mxu0 %v3533
    %3787 = vmatprep.subr.bf16.mxu0 %v3530
    %3788 = vmatpush1.bf16.msra.mxu0 %v3529
    %3789 = vmatprep.subr.bf16.mxu0 %v3526
    %3790 = vmatpush1.bf16.msra.mxu0 %v3525
    %3791 = vmatprep.subr.bf16.mxu0 %v3522
    %3792 = vmatpush1.bf16.msra.mxu0 %v3521
    %3793 = vmatprep.subr.bf16.mxu0 %v3582
    %3794 = vmatpush2.bf16.msra.mxu0 %v3581
    %3795 = vmatprep.subr.bf16.mxu0 %v3578
    %3796 = vmatpush2.bf16.msra.mxu0 %v3577
    %3797 = vmatprep.subr.bf16.mxu0 %v3574
    %3798 = vmatpush2.bf16.msra.mxu0 %v3573
    %3799 = vmatprep.subr.bf16.mxu0 %v3570
    %3800 = vmatpush2.bf16.msra.mxu0 %v3569
    %3801 = vmatprep.subr.bf16.mxu0 %v3566
    %3802 = vmatpush2.bf16.msra.mxu0 %v3565
    %3803 = vmatprep.subr.bf16.mxu0 %v3562
    %3804 = vmatpush2.bf16.msra.mxu0 %v3561
    %3805 = vmatprep.subr.bf16.mxu0 %v3558
    %3806 = vmatpush2.bf16.msra.mxu0 %v3557
    %3807 = vmatprep.subr.bf16.mxu0 %v3554
    %3808 = vmatpush2.bf16.msra.mxu0 %v3553
    %3809 = vmatprep.mubr.bf16.mxu0 %v2984
    %3810 = vmatmul.mubr.bf16.gmra.mxu0 %v2983
    %v3811 = vpop.f32.mrf.mxu0
    %v3812 = vadd.f32 %v3120, %v3811
    %v3813 = vpop.f32.mrf.mxu0
    %v3814 = vadd.f32 %v3124, %v3813
    %v3815 = vpop.f32.mrf.mxu0
    %v3816 = vadd.f32 %v3120, %v3815
    %v3817 = vpop.f32.mrf.mxu0
    %v3818 = vadd.f32 %v3124, %v3817
    %3819 = vdwg.mxu0
    %3820 = vmatprep.subr.bf16.mxu0 %v3614
    %3821 = vmatpush1.bf16.msra.mxu0 %v3613
    %3822 = vmatprep.subr.bf16.mxu0 %v3610
    %3823 = vmatpush1.bf16.msra.mxu0 %v3609
    %3824 = vmatprep.subr.bf16.mxu0 %v3606
    %3825 = vmatpush1.bf16.msra.mxu0 %v3605
    %3826 = vmatprep.subr.bf16.mxu0 %v3602
    %3827 = vmatpush1.bf16.msra.mxu0 %v3601
    %3828 = vmatprep.subr.bf16.mxu0 %v3598
    %3829 = vmatpush1.bf16.msra.mxu0 %v3597
    %3830 = vmatprep.subr.bf16.mxu0 %v3594
    %3831 = vmatpush1.bf16.msra.mxu0 %v3593
    %3832 = vmatprep.subr.bf16.mxu0 %v3590
    %3833 = vmatpush1.bf16.msra.mxu0 %v3589
    %3834 = vmatprep.subr.bf16.mxu0 %v3586
    %3835 = vmatpush1.bf16.msra.mxu0 %v3585
    %3836 = vmatprep.subr.bf16.mxu0 %v3646
    %3837 = vmatpush2.bf16.msra.mxu0 %v3645
    %3838 = vmatprep.subr.bf16.mxu0 %v3642
    %3839 = vmatpush2.bf16.msra.mxu0 %v3641
    %3840 = vmatprep.subr.bf16.mxu0 %v3638
    %3841 = vmatpush2.bf16.msra.mxu0 %v3637
    %3842 = vmatprep.subr.bf16.mxu0 %v3634
    %3843 = vmatpush2.bf16.msra.mxu0 %v3633
    %3844 = vmatprep.subr.bf16.mxu0 %v3630
    %3845 = vmatpush2.bf16.msra.mxu0 %v3629
    %3846 = vmatprep.subr.bf16.mxu0 %v3626
    %3847 = vmatpush2.bf16.msra.mxu0 %v3625
    %3848 = vmatprep.subr.bf16.mxu0 %v3622
    %3849 = vmatpush2.bf16.msra.mxu0 %v3621
    %3850 = vmatprep.subr.bf16.mxu0 %v3618
    %3851 = vmatpush2.bf16.msra.mxu0 %v3617
    %3852 = vmatprep.mubr.bf16.mxu0 %v2986
    %3853 = vmatmul.mubr.bf16.gmra.mxu0 %v2985
    %v3854 = vpop.f32.mrf.mxu0
    %v3855 = vadd.f32 %v3812, %v3854
    %v3856 = vpop.f32.mrf.mxu0
    %v3857 = vadd.f32 %v3814, %v3856
    %v3858 = vpop.f32.mrf.mxu0
    %v3859 = vadd.f32 %v3816, %v3858
    %v3860 = vpop.f32.mrf.mxu0
    %v3861 = vadd.f32 %v3818, %v3860
    %3862 = vdwg.mxu0
    %3863 = vmatprep.subr.bf16.mxu0 %v3552
    %3864 = vmatpush1.bf16.msra.mxu0 %v3551
    %3865 = vmatprep.subr.bf16.mxu0 %v3548
    %3866 = vmatpush1.bf16.msra.mxu0 %v3547
    %3867 = vmatprep.subr.bf16.mxu0 %v3544
    %3868 = vmatpush1.bf16.msra.mxu0 %v3543
    %3869 = vmatprep.subr.bf16.mxu0 %v3540
    %3870 = vmatpush1.bf16.msra.mxu0 %v3539
    %3871 = vmatprep.subr.bf16.mxu0 %v3536
    %3872 = vmatpush1.bf16.msra.mxu0 %v3535
    %3873 = vmatprep.subr.bf16.mxu0 %v3532
    %3874 = vmatpush1.bf16.msra.mxu0 %v3531
    %3875 = vmatprep.subr.bf16.mxu0 %v3528
    %3876 = vmatpush1.bf16.msra.mxu0 %v3527
    %3877 = vmatprep.subr.bf16.mxu0 %v3524
    %3878 = vmatpush1.bf16.msra.mxu0 %v3523
    %3879 = vmatprep.subr.bf16.mxu0 %v3584
    %3880 = vmatpush2.bf16.msra.mxu0 %v3583
    %3881 = vmatprep.subr.bf16.mxu0 %v3580
    %3882 = vmatpush2.bf16.msra.mxu0 %v3579
    %3883 = vmatprep.subr.bf16.mxu0 %v3576
    %3884 = vmatpush2.bf16.msra.mxu0 %v3575
    %3885 = vmatprep.subr.bf16.mxu0 %v3572
    %3886 = vmatpush2.bf16.msra.mxu0 %v3571
    %3887 = vmatprep.subr.bf16.mxu0 %v3568
    %3888 = vmatpush2.bf16.msra.mxu0 %v3567
    %3889 = vmatprep.subr.bf16.mxu0 %v3564
    %3890 = vmatpush2.bf16.msra.mxu0 %v3563
    %3891 = vmatprep.subr.bf16.mxu0 %v3560
    %3892 = vmatpush2.bf16.msra.mxu0 %v3559
    %3893 = vmatprep.subr.bf16.mxu0 %v3556
    %3894 = vmatpush2.bf16.msra.mxu0 %v3555
    %3895 = vmatprep.mubr.bf16.mxu0 %v2984
    %3896 = vmatmul.mubr.bf16.gmra.mxu0 %v2983
    %v3897 = vpop.f32.mrf.mxu0
    %v3898 = vadd.f32 %v3128, %v3897
    %v3899 = vpop.f32.mrf.mxu0
    %v3900 = vadd.f32 %v3132, %v3899
    %v3901 = vpop.f32.mrf.mxu0
    %v3902 = vadd.f32 %v3128, %v3901
    %v3903 = vpop.f32.mrf.mxu0
    %v3904 = vadd.f32 %v3132, %v3903
    %3905 = vdwg.mxu0
    %3906 = vmatprep.subr.bf16.mxu0 %v3616
    %3907 = vmatpush1.bf16.msra.mxu0 %v3615
    %3908 = vmatprep.subr.bf16.mxu0 %v3612
    %3909 = vmatpush1.bf16.msra.mxu0 %v3611
    %3910 = vmatprep.subr.bf16.mxu0 %v3608
    %3911 = vmatpush1.bf16.msra.mxu0 %v3607
    %3912 = vmatprep.subr.bf16.mxu0 %v3604
    %3913 = vmatpush1.bf16.msra.mxu0 %v3603
    %3914 = vmatprep.subr.bf16.mxu0 %v3600
    %3915 = vmatpush1.bf16.msra.mxu0 %v3599
    %3916 = vmatprep.subr.bf16.mxu0 %v3596
    %3917 = vmatpush1.bf16.msra.mxu0 %v3595
    %3918 = vmatprep.subr.bf16.mxu0 %v3592
    %3919 = vmatpush1.bf16.msra.mxu0 %v3591
    %3920 = vmatprep.subr.bf16.mxu0 %v3588
    %3921 = vmatpush1.bf16.msra.mxu0 %v3587
    %3922 = vmatprep.subr.bf16.mxu0 %v3648
    %3923 = vmatpush2.bf16.msra.mxu0 %v3647
    %3924 = vmatprep.subr.bf16.mxu0 %v3644
    %3925 = vmatpush2.bf16.msra.mxu0 %v3643
    %3926 = vmatprep.subr.bf16.mxu0 %v3640
    %3927 = vmatpush2.bf16.msra.mxu0 %v3639
    %3928 = vmatprep.subr.bf16.mxu0 %v3636
    %3929 = vmatpush2.bf16.msra.mxu0 %v3635
    %3930 = vmatprep.subr.bf16.mxu0 %v3632
    %3931 = vmatpush2.bf16.msra.mxu0 %v3631
    %3932 = vmatprep.subr.bf16.mxu0 %v3628
    %3933 = vmatpush2.bf16.msra.mxu0 %v3627
    %3934 = vmatprep.subr.bf16.mxu0 %v3624
    %3935 = vmatpush2.bf16.msra.mxu0 %v3623
    %3936 = vmatprep.subr.bf16.mxu0 %v3620
    %3937 = vmatpush2.bf16.msra.mxu0 %v3619
    %3938 = vmatprep.mubr.bf16.mxu0 %v2986
    %3939 = vmatmul.mubr.bf16.gmra.mxu0 %v2985
    %v3940 = vpop.f32.mrf.mxu0
    %v3941 = vadd.f32 %v3898, %v3940
    %v3942 = vpop.f32.mrf.mxu0
    %v3943 = vadd.f32 %v3900, %v3942
    %v3944 = vpop.f32.mrf.mxu0
    %v3945 = vadd.f32 %v3902, %v3944
    %v3946 = vpop.f32.mrf.mxu0
    %v3947 = vadd.f32 %v3904, %v3946
    %3948 = vdwg.mxu0
    %v3949 = vmax.f32 %v3855, 0.0
    %v3950 = vmax.f32 %v3857, 0.0
    %v3951 = vmax.f32 %v3941, 0.0
    %v3952 = vmax.f32 %v3943, 0.0
    %v3953 = vmax.f32 %v3859, 0.0
    %v3954 = vmax.f32 %v3861, 0.0
    %v3955 = vmax.f32 %v3945, 0.0
    %v3956 = vmax.f32 %v3947, 0.0
    %v3957 = vld [vmem:[%s7] sm:$0xf]
    %v3959 = vlaneseq
    %v3960 = vshrl.u32 %v3959, 7
    %v3961 = vsub.s32 0, %v3960
    %v3962 = vrot.slane %v3957, %v3961
    %v3963 = vlaneseq
    %v3964 = vshrl.u32 %v3963, 7
    %v3965 = vsub.s32 1, %v3964
    %v3966 = vrot.slane %v3957, %v3965
    %v3967 = vlaneseq
    %v3968 = vshrl.u32 %v3967, 7
    %v3969 = vsub.s32 2, %v3968
    %v3970 = vrot.slane %v3957, %v3969
    %v3971 = vlaneseq
    %v3972 = vshrl.u32 %v3971, 7
    %v3973 = vsub.s32 3, %v3972
    %v3974 = vrot.slane %v3957, %v3973
    %v3979 = vmul.f32 %v3949, %v3962
    %v3980 = vmul.f32 %v3950, %v3966
    %v3981 = vmul.f32 %v3951, %v3970
    %v3982 = vmul.f32 %v3952, %v3974
    %v3983 = vmul.f32 %v3953, %v3962
    %v3984 = vmul.f32 %v3954, %v3966
    %v3985 = vmul.f32 %v3955, %v3970
    %v3986 = vmul.f32 %v3956, %v3974
    %v3987 = vadd.f32 %v3979, %v3980
    %v3988 = vadd.f32 %v3987, %v3981
    %v3989 = vadd.f32 %v3988, %v3982
    %3990 = vadd.xlane.f32.xlu0 %v3989
    %v3991 = vpop.xlane.xlu0 %3990
    %v3992 = vadd.f32 %v3983, %v3984
    %v3993 = vadd.f32 %v3992, %v3985
    %v3994 = vadd.f32 %v3993, %v3986
    %3995 = vadd.xlane.f32.xlu0 %v3994
    %v3996 = vpop.xlane.xlu0 %3995
    %v3997 = vld [vmem:[#allocation2] sm:$0x1]
    %v3999 = vlaneseq
    %v4000 = vshrl.u32 %v3999, 7
    %v4001 = vsub.s32 0, %v4000
    %v4002 = vrot.slane %v3997, %v4001
    %v4004 = vadd.f32 %v3991, %v4002
    %v4005 = vadd.f32 %v3996, %v4002
    %vm4006 = vcmask 7168
    %4007 = vst.msk [vmem:[%s9] sm:$0xff] %vm4006, %v4004
    %4008 = vst.msk [vmem:[%s9 + $0x8] sm:$0xff] %vm4006, %v4005
    // Predicated region
    $region50: #{baseline_nn_forward.1} parent=1 // pred_check
      _
    $region51: #{baseline_nn_forward.1} parent=1 // pred_check_branch
      %4010 = sbr.rel (0) target = $region53
    $region52: #{baseline_nn_forward.1} parent=1 // pred_region
      _
    $region53: #{baseline_nn_forward.1} parent=1 // pred_fallthru
      _
    // Predicated region
    $region54: #{baseline_nn_forward.1} parent=1 // pred_check
      _
    $region55: #{baseline_nn_forward.1} parent=1 // pred_check_branch
      %4012 = sbr.rel (0) target = $region57
    $region56: #{baseline_nn_forward.1} parent=1 // pred_region
      _
    $region57: #{baseline_nn_forward.1} parent=1 // pred_fallthru
      _
    %4013 = vsyncpa [#allocation4], 1
    %4014 = vsyncpa [#allocation6], 1

</llo_original>
